<compile_context>
chip_gen: v7x
topology: tpu7x:2x2x1
jax: 0.10.0
libtpu: 0.0.40
codegen_flags: <defaults>
</compile_context>

<pallas_src>
import math
import functools

import jax
import jax.numpy as jnp
from jax.experimental import pallas as pl
from jax.experimental.pallas import tpu as pltpu


MATMUL_DTYPE = jnp.bfloat16   # MXU operand dtype; accumulation is always f32.


# --------------------------------------------------------------------------
# Small helpers
# --------------------------------------------------------------------------

def _row_tile(n, min_tile=8):
    """Largest tile <= 128 (multiple of min_tile) dividing n with >= 2 grid
    steps (so the row axis can be sharded across TensorCores); else full n."""
    for t in (128, 64, 32, 16, 8):
        if t < min_tile:
            break
        if n % t == 0 and n // t >= 2:
            return t
    return n


def _cparams(sem):
    return pltpu.CompilerParams(dimension_semantics=sem,
                                vmem_limit_bytes=32 * 1024 * 1024)


# --------------------------------------------------------------------------
# Pallas kernels
# --------------------------------------------------------------------------

def _matmul_kernel(a_ref, b_ref, o_ref):
    # Tiny one-off matmul (positional-key projection of the constant
    # sinusoidal table); whole-array block is fine at [2T-1, D] x [D, D].
    o_ref[...] = jnp.dot(a_ref[...], b_ref[...],
                         preferred_element_type=jnp.float32).astype(o_ref.dtype)


def _ln_matmul_kernel(x_ref, lnw_ref, lnb_ref, w_ref, o_ref, *, eps):
    """Fused LayerNorm(x) @ W.  K (= d_model) is kept whole because the LN
    reduction needs the full feature dim; rows/columns are tiled by the grid."""
    x = x_ref[...].astype(jnp.float32)
    mean = jnp.mean(x, axis=-1, keepdims=True)
    xc = x - mean
    var = jnp.mean(xc * xc, axis=-1, keepdims=True)
    y = xc * jax.lax.rsqrt(var + eps) * lnw_ref[...] + lnb_ref[...]
    o_ref[...] = jnp.dot(y.astype(w_ref.dtype), w_ref[...],
                         preferred_element_type=jnp.float32).astype(o_ref.dtype)


def _matmul_residual_kernel(a_ref, w_ref, r_ref, o_ref):
    """o = residual + a @ W (attention output projection + residual add)."""
    o_ref[...] = (r_ref[...] +
                  jnp.dot(a_ref[...], w_ref[...],
                          preferred_element_type=jnp.float32)).astype(o_ref.dtype)


def _attn_kernel(qkvp_ref, pk_ref, g_ref, o_ref, *, nhead, scale):
    """Relative multi-head self attention for one batch element (all heads).

    qkvp_ref : [1, T, 4D] bf16   packed (q | q_pos | k | v) projections
    pk_ref   : [2T-1, D]  bf16   positional keys (pe @ wr), shared over batch
    g_ref    : [T, 2T-1, T] f32  one-hot rel-shift tensor
                                 g[i, r, j] = 1 iff r == i - j + T - 1
    o_ref    : [1, T, D]  bf16   lane-dense context output
    """
    D4 = qkvp_ref.shape[2]
    D = D4 // 4
    Dh = D // nhead
    xz = qkvp_ref[0]             # [T, 4D]
    pk = pk_ref[...]             # [2T-1, D]
    g = g_ref[...]               # [T, 2T-1, T]

    outs = []
    for h in range(nhead):       # static unroll over heads
        q_h = xz[:, 0 * D + h * Dh: 0 * D + (h + 1) * Dh]
        qp_h = xz[:, 1 * D + h * Dh: 1 * D + (h + 1) * Dh]
        k_h = xz[:, 2 * D + h * Dh: 2 * D + (h + 1) * Dh]
        v_h = xz[:, 3 * D + h * Dh: 3 * D + (h + 1) * Dh]
        pk_h = pk[:, h * Dh:(h + 1) * Dh]

        # content & positional scores (bf16 operands, f32 accumulation)
        s_c = jnp.dot(q_h, k_h.T, preferred_element_type=jnp.float32)    # [T, T]
        s_p = jnp.dot(qp_h, pk_h.T, preferred_element_type=jnp.float32)  # [T, 2T-1]

        # relative shift fused in-kernel via a one-hot batched matmul:
        # bias[i, j] = s_p[i, i - j + T - 1]
        # TODO(synk): for long T replace this O(T^2 * 2T) one-hot contraction
        # with the reshape-based rel-shift / flash-style KV tiling.
        bias = jax.lax.dot_general(
            s_p[:, None, :], g,
            dimension_numbers=(((2,), (1,)), ((0,), (0,))),
            preferred_element_type=jnp.float32)[:, 0, :]                 # [T, T]

        s = (s_c + bias) * scale
        s = s - jnp.max(s, axis=-1, keepdims=True)
        p = jnp.exp(s)
        p = p * pl.reciprocal(jnp.sum(p, axis=-1, keepdims=True), approx=True)
        outs.append(jnp.dot(p.astype(v_h.dtype), v_h,
                            preferred_element_type=jnp.float32))         # [T, Dh]

    # lane-dense store: one [T, H*Dh = D] slab per grid step
    o_ref[0] = jnp.concatenate(outs, axis=-1).astype(o_ref.dtype)


def _moe_kernel(x_ref, lnw_ref, lnb_ref, selw_ref, key_ref, val_ref, o_ref,
                xln_sc, gates_sc, *, moe_k, eps):
    """Fused LN2 + sigma-MoE (sigmoid gating, top-k) + residual.

    Grid = (row_tiles, experts).  Expert axis is the inner "arbitrary" axis;
    the output block (constant across experts) is the f32 accumulator and is
    initialized with the residual on expert 0.  Per-expert weight blocks keep
    the VMEM footprint to one expert at a time.

    TODO(synk): only top-k experts' FLOPs could be executed with scalar-
    prefetched token routing; here selection is applied as a gate mask
    (dense compute), matching the previous reference implementation.
    TODO(synk): selection_mode='add' / perplexity regularization / expert
    dropout are training-time bookkeeping and are not reproduced.
    """
    e = pl.program_id(1)

    @pl.when(e == 0)
    def _init():
        x = x_ref[...]                                   # f32 [tm, D]
        mean = jnp.mean(x, axis=-1, keepdims=True)
        xc = x - mean
        var = jnp.mean(xc * xc, axis=-1, keepdims=True)
        xln = xc * jax.lax.rsqrt(var + eps) * lnw_ref[...] + lnb_ref[...]
        xln_sc[...] = xln
        gates_sc[...] = jax.nn.sigmoid(
            jnp.dot(xln, selw_ref[...], preferred_element_type=jnp.float32))
        o_ref[...] = x                                   # residual -> accumulator

    xln = xln_sc[...]
    gates = gates_sc[...]                                # [tm, E]

    # gate of this expert + its rank among all experts (lower index wins ties)
    col = jax.lax.broadcasted_iota(jnp.int32, gates.shape, 1)
    g_e = jnp.max(jnp.where(col == e, gates, -jnp.inf), axis=-1, keepdims=True)
    beats = (gates > g_e) | ((gates == g_e) & (col < e))
    rank = jnp.sum(beats.astype(jnp.float32), axis=-1, keepdims=True)
    gate = jnp.where(rank < float(moe_k), g_e, 0.0)      # [tm, 1]

    hid = jnp.maximum(
        jnp.dot(xln.astype(key_ref.dtype), key_ref[...],
                preferred_element_type=jnp.float32), 0.0)            # [tm, F]
    o_ref[...] += gate * jnp.dot(hid.astype(val_ref.dtype), val_ref[...],
                                 preferred_element_type=jnp.float32)  # [tm, D]


# --------------------------------------------------------------------------
# pallas_call wrappers
# --------------------------------------------------------------------------

def pl_matmul(a, b):
    M, K = a.shape
    _, N = b.shape
    return pl.pallas_call(
        _matmul_kernel,
        out_shape=jax.ShapeDtypeStruct((M, N), jnp.float32),
        grid=(1,),
        in_specs=[pl.BlockSpec((M, K), lambda i: (0, 0)),
                  pl.BlockSpec((K, N), lambda i: (0, 0))],
        out_specs=pl.BlockSpec((M, N), lambda i: (0, 0)),
        compiler_params=_cparams(("arbitrary",)),
    )(a, b)


def pl_ln_matmul(x, ln_w, ln_b, w, *, eps=1e-5, out_dtype=MATMUL_DTYPE):
    N, D = x.shape
    D2 = w.shape[1]
    tm = _row_tile(N, min_tile=16)        # bf16 output -> 16-row granularity
    tn = 128 if D2 % 128 == 0 else D2
    ln_w2 = ln_w.reshape(1, D).astype(jnp.float32)
    ln_b2 = ln_b.reshape(1, D).astype(jnp.float32)
    ce = pl.CostEstimate(flops=2 * N * D * D2, transcendentals=N,
                         bytes_accessed=4 * N * D + 2 * D * D2 + 2 * N * D2)
    return pl.pallas_call(
        functools.partial(_ln_matmul_kernel, eps=eps),
        out_shape=jax.ShapeDtypeStruct((N, D2), out_dtype),
        grid=(N // tm, D2 // tn),
        in_specs=[pl.BlockSpec((tm, D), lambda i, j: (i, 0)),
                  pl.BlockSpec((1, D), lambda i, j: (0, 0)),
                  pl.BlockSpec((1, D), lambda i, j: (0, 0)),
                  pl.BlockSpec((D, tn), lambda i, j: (0, j))],
        out_specs=pl.BlockSpec((tm, tn), lambda i, j: (i, j)),
        compiler_params=_cparams(("parallel", "parallel")),
        cost_estimate=ce,
    )(x, ln_w2, ln_b2, w)


def pl_matmul_residual(a, w, res):
    N, K = a.shape
    D = w.shape[1]
    tm = _row_tile(N, min_tile=16)        # bf16 input rows -> 16-row granularity
    ce = pl.CostEstimate(flops=2 * N * K * D, transcendentals=0,
                         bytes_accessed=2 * N * K + 2 * K * D + 8 * N * D)
    return pl.pallas_call(
        _matmul_residual_kernel,
        out_shape=jax.ShapeDtypeStruct((N, D), jnp.float32),
        grid=(N // tm,),
        in_specs=[pl.BlockSpec((tm, K), lambda i: (i, 0)),
                  pl.BlockSpec((K, D), lambda i: (0, 0)),
                  pl.BlockSpec((tm, D), lambda i: (i, 0))],
        out_specs=pl.BlockSpec((tm, D), lambda i: (i, 0)),
        compiler_params=_cparams(("parallel",)),
        cost_estimate=ce,
    )(a, w, res)


def pl_attention(qkvp, pos_k, shift_onehot, *, nhead, scale):
    # TODO(synk): for long sequences convert to an online-softmax (flash)
    # formulation with a KV grid axis instead of full [T, T] scores per head.
    B, T, D4 = qkvp.shape
    D = D4 // 4
    R = pos_k.shape[0]
    Dh = D // nhead
    ce = pl.CostEstimate(
        flops=2 * B * nhead * T * (2 * T * Dh + R * Dh + R * T),
        transcendentals=B * nhead * T * T,
        bytes_accessed=2 * B * T * D4 + 2 * R * D + 4 * T * R * T + 2 * B * T * D)
    return pl.pallas_call(
        functools.partial(_attn_kernel, nhead=nhead, scale=scale),
        out_shape=jax.ShapeDtypeStruct((B, T, D), MATMUL_DTYPE),
        grid=(B,),
        in_specs=[pl.BlockSpec((1, T, D4), lambda b: (b, 0, 0)),
                  pl.BlockSpec((R, D), lambda b: (0, 0)),
                  pl.BlockSpec((T, R, T), lambda b: (0, 0, 0))],
        out_specs=pl.BlockSpec((1, T, D), lambda b: (b, 0, 0)),
        compiler_params=_cparams(("parallel",)),
        cost_estimate=ce,
    )(qkvp, pos_k, shift_onehot)


def pl_moe(x, ln_w, ln_b, sel_w, keys, values, *, moe_k, eps=1e-5):
    N, D = x.shape
    E, _, F = keys.shape
    tm = _row_tile(N, min_tile=8)
    ln_w2 = ln_w.reshape(1, D).astype(jnp.float32)
    ln_b2 = ln_b.reshape(1, D).astype(jnp.float32)
    ce = pl.CostEstimate(flops=2 * N * D * E + 4 * N * D * F * E,
                         transcendentals=2 * N * E,
                         bytes_accessed=8 * N * D + 4 * E * D * F)
    return pl.pallas_call(
        functools.partial(_moe_kernel, moe_k=moe_k, eps=eps),
        out_shape=jax.ShapeDtypeStruct((N, D), jnp.float32),
        grid=(N // tm, E),
        in_specs=[pl.BlockSpec((tm, D), lambda i, e: (i, 0)),
                  pl.BlockSpec((1, D), lambda i, e: (0, 0)),
                  pl.BlockSpec((1, D), lambda i, e: (0, 0)),
                  pl.BlockSpec((D, E), lambda i, e: (0, 0)),
                  pl.BlockSpec((None, D, F), lambda i, e: (e, 0, 0)),
                  pl.BlockSpec((None, F, D), lambda i, e: (e, 0, 0))],
        out_specs=pl.BlockSpec((tm, D), lambda i, e: (i, 0)),
        scratch_shapes=[pltpu.VMEM((tm, D), jnp.float32),
                        pltpu.VMEM((tm, E), jnp.float32)],
        compiler_params=_cparams(("parallel", "arbitrary")),
        cost_estimate=ce,
    )(x, ln_w2, ln_b2, sel_w, keys, values)


# --------------------------------------------------------------------------
# Glue (parameter setup, positional embeddings, forward pass)
# --------------------------------------------------------------------------

def sinusoidal_pos_embedding(d_model, positions):
    inv_freq = 1.0 / (10000.0 ** (jnp.arange(0, d_model, 2, dtype=jnp.float32)
                                  / d_model))
    sinusoid = positions[:, None] * inv_freq[None, :]
    return jnp.concatenate([jnp.sin(sinusoid), jnp.cos(sinusoid)], axis=-1)


def init_params(key, d_model, n_experts, expert_size, n_layers):
    std_scale = math.sqrt(2.0 / n_layers)          # preln init scale
    attn_std = std_scale / math.sqrt(d_model)
    ks = jax.random.split(key, 9)
    p = {
        "wq":     jax.random.normal(ks[0], (d_model, d_model), jnp.float32) * attn_std,
        "wq_pos": jax.random.normal(ks[1], (d_model, d_model), jnp.float32) * attn_std,
        "wk":     jax.random.normal(ks[2], (d_model, d_model), jnp.float32) * attn_std,
        "wv":     jax.random.normal(ks[3], (d_model, d_model), jnp.float32) * attn_std,
        "wr":     jax.random.normal(ks[4], (d_model, d_model), jnp.float32) * attn_std,
        "wo":     jax.random.normal(ks[5], (d_model, d_model), jnp.float32) * attn_std,
        "sel_w":  jax.random.normal(ks[6], (d_model, n_experts), jnp.float32)
                  / math.sqrt(d_model),
        "keys":   jax.random.normal(ks[7], (n_experts, d_model, expert_size),
                                    jnp.float32) * (std_scale / math.sqrt(d_model)),
        "values": jax.random.normal(ks[8], (n_experts, expert_size, d_model),
                                    jnp.float32) * (std_scale / math.sqrt(expert_size)),
        "ln1_w": jnp.ones((d_model,), jnp.float32),
        "ln1_b": jnp.zeros((d_model,), jnp.float32),
        "ln2_w": jnp.ones((d_model,), jnp.float32),
        "ln2_b": jnp.zeros((d_model,), jnp.float32),
    }
    return p


def relative_moe_layer_forward(src, params, *, nhead, moe_k):
    """Forward pass (preln=True, eval mode, no mask / attend_to / pos_offset)."""
    B, T, D = src.shape
    H = nhead
    Dh = D // H
    N = B * T
    x = src.reshape(N, D).astype(jnp.float32)

    # Fused [wq | wq_pos | wk | wv] weight -> one wide bf16 MXU matmul.
    w_qkvp = jnp.concatenate(
        [params["wq"], params["wq_pos"], params["wk"], params["wv"]],
        axis=1).astype(MATMUL_DTYPE)                                   # [D, 4D]

    # LN1 fused into the projection; src2 never touches HBM.
    qkvp = pl_ln_matmul(x, params["ln1_w"], params["ln1_b"], w_qkvp)   # [N, 4D] bf16

    # Constant positional keys: pe(rel) @ wr  (rel = i - j in [-(T-1), T-1]).
    rel = jnp.arange(-(T - 1), T, dtype=jnp.float32)                   # [2T-1]
    pe = sinusoidal_pos_embedding(D, rel)                              # [2T-1, D]
    pos_k = pl_matmul(pe, params["wr"]).astype(MATMUL_DTYPE)           # [2T-1, D]

    # One-hot rel-shift tensor: bias[i, j] = pos_scores[i, (i - j) + T - 1].
    idx_i = jnp.arange(T)[:, None, None]
    idx_r = jnp.arange(2 * T - 1)[None, :, None]
    idx_j = jnp.arange(T)[None, None, :]
    shift_onehot = (idx_r == (idx_i - idx_j + (T - 1))).astype(jnp.float32)

    # TODO(synk): attention mask / pos_offset / attend_to of the original
    # forward are None in this synthetic run and are not wired in.
    scale = 1.0 / math.sqrt(Dh)
    ctx = pl_attention(qkvp.reshape(B, T, 4 * D), pos_k, shift_onehot,
                       nhead=H, scale=scale)                           # [B, T, D] bf16

    # ---- src = src + attn_out (output projection fused with residual) ----
    x = pl_matmul_residual(ctx.reshape(N, D),
                           params["wo"].astype(MATMUL_DTYPE), x)       # [N, D] f32

    # ---- src = src + pkm(norm2(src))  (LN2 + MoE + residual fused) ----
    x = pl_moe(x, params["ln2_w"], params["ln2_b"], params["sel_w"],
               params["keys"].astype(MATMUL_DTYPE),
               params["values"].astype(MATMUL_DTYPE), moe_k=moe_k)     # [N, D] f32
    return x.reshape(B, T, D)


# --------------------------------------------------------------------------
# Main
# --------------------------------------------------------------------------

if __name__ == "__main__":
    B, T = 2, 8
    d_model = 32
    nhead = 4
    n_experts = 4
    expert_size = 64
    n_layers = 2
    moe_k = 2          # `n_heads` of the MoE (top-k experts per token)

    key = jax.random.PRNGKey(0)
    k_src, k_par = jax.random.split(key)
    src = jax.random.normal(k_src, (B, T, d_model), jnp.float32)
    params = init_params(k_par, d_model, n_experts, expert_size, n_layers)

    fwd = jax.jit(functools.partial(relative_moe_layer_forward,
                                    nhead=nhead, moe_k=moe_k))
    out = fwd(src, params)
    out = jax.block_until_ready(out)
    assert out.shape == (B, T, d_model)
    assert bool(jnp.all(jnp.isfinite(out)))
    print("KERNEL_OK")
</pallas_src>

<mosaic_0001>
module attributes {stable_mosaic.version = 11 : i64} {
  func.func @_matmul_kernel(%arg0: i32, %arg1: memref<15x32xf32, #tpu.memory_space<vmem>>, %arg2: memref<32x32xf32, #tpu.memory_space<vmem>>, %arg3: memref<15x32xf32, #tpu.memory_space<vmem>>) attributes {dimension_semantics = [#tpu.dimension_semantics<arbitrary>], iteration_bounds = array<i64: 1>, scalar_prefetch = 0 : i64, scratch_operands = 0 : i64, tpu.core_type = #tpu.core_type<tc>, window_params = [{pipeline_mode = #tpu.pipeline_mode<synchronous>, transform_indices = @transform_0, window_bounds = array<i64: 15, 32>}, {pipeline_mode = #tpu.pipeline_mode<synchronous>, transform_indices = @transform_1, window_bounds = array<i64: 32, 32>}, {pipeline_mode = #tpu.pipeline_mode<synchronous>, transform_indices = @transform_2, window_bounds = array<i64: 15, 32>}]} {
    %c0 = arith.constant 0 : index
    %c0_0 = arith.constant 0 : index
    %0 = vector.load %arg1[%c0, %c0_0] : memref<15x32xf32, #tpu.memory_space<vmem>>, vector<15x32xf32>
    %c0_1 = arith.constant 0 : index
    %c0_2 = arith.constant 0 : index
    %1 = vector.load %arg2[%c0_1, %c0_2] : memref<32x32xf32, #tpu.memory_space<vmem>>, vector<32x32xf32>
    %cst = arith.constant dense<0.000000e+00> : vector<15x32xf32>
    %2 = tpu.matmul %0, %1, %cst {dimension_numbers = #tpu.dot_dimension_numbers<[1], [0], [0], [1], [0, 0, 1, 1], [], []>} : vector<15x32xf32>, vector<32x32xf32>, vector<15x32xf32> -> vector<15x32xf32>
    %c0_3 = arith.constant 0 : index
    %c0_4 = arith.constant 0 : index
    %3 = vector.load %arg3[%c0_3, %c0_4] : memref<15x32xf32, #tpu.memory_space<vmem>>, vector<15x32xf32>
    tpu.vector_store %arg3[%c0_3, %c0_4], %2 {strides = array<i32>} : memref<15x32xf32, #tpu.memory_space<vmem>>, vector<15x32xf32>,
    return
  }
  func.func @transform_0(%arg0: i32) -> (i32, i32) {
    %c0_i32 = arith.constant 0 : i32
    %c0_i32_0 = arith.constant 0 : i32
    %c0_i32_1 = arith.constant 0 : i32
    return %c0_i32, %c0_i32_0 : i32, i32
  }
  func.func @transform_1(%arg0: i32) -> (i32, i32) {
    %c0_i32 = arith.constant 0 : i32
    %c0_i32_0 = arith.constant 0 : i32
    %c0_i32_1 = arith.constant 0 : i32
    return %c0_i32, %c0_i32_0 : i32, i32
  }
  func.func @transform_2(%arg0: i32) -> (i32, i32) {
    %c0_i32 = arith.constant 0 : i32
    %c0_i32_0 = arith.constant 0 : i32
    %c0_i32_1 = arith.constant 0 : i32
    return %c0_i32, %c0_i32_0 : i32, i32
  }
}

module attributes {stable_mosaic.version = 11 : i64} {
  func.func @_ln_matmul_kernel(%arg0: i32, %arg1: i32, %arg2: memref<16x32xf32, #tpu.memory_space<vmem>>, %arg3: memref<1x32xf32, #tpu.memory_space<vmem>>, %arg4: memref<1x32xf32, #tpu.memory_space<vmem>>, %arg5: memref<32x128xbf16, #tpu.memory_space<vmem>>, %arg6: memref<16x128xbf16, #tpu.memory_space<vmem>>) attributes {dimension_semantics = [#tpu.dimension_semantics<parallel>, #tpu.dimension_semantics<parallel>], iteration_bounds = array<i64: 1, 1>, scalar_prefetch = 0 : i64, scratch_operands = 0 : i64, tpu.core_type = #tpu.core_type<tc>, window_params = [{transform_indices = @transform_0, window_bounds = array<i64: 16, 32>}, {pipeline_mode = #tpu.pipeline_mode<synchronous>, transform_indices = @transform_1, window_bounds = array<i64: 1, 32>}, {pipeline_mode = #tpu.pipeline_mode<synchronous>, transform_indices = @transform_2, window_bounds = array<i64: 1, 32>}, {transform_indices = @transform_3, window_bounds = array<i64: 32, 128>}, {transform_indices = @transform_4, window_bounds = array<i64: 16, 128>}]} {
    %c0 = arith.constant 0 : index
    %c0_0 = arith.constant 0 : index
    %0 = vector.load %arg2[%c0, %c0_0] : memref<16x32xf32, #tpu.memory_space<vmem>>, vector<16x32xf32>
    %cst = arith.constant dense<0.000000e+00> : vector<16xf32>
    %1 = vector.multi_reduction <add>, %0, %cst [1] : vector<16x32xf32> to vector<16xf32>
    %2 = vector.shape_cast %1 : vector<16xf32> to vector<16x1xf32>
    %cst_1 = arith.constant 3.200000e+01 : f32
    %3 = vector.broadcast %cst_1 : f32 to vector<16x1xf32>
    %4 = arith.divf %2, %3 : vector<16x1xf32>
    %5 = vector.broadcast %4 : vector<16x1xf32> to vector<16x32xf32>
    %6 = arith.subf %0, %5 : vector<16x32xf32>
    %7 = arith.mulf %6, %6 : vector<16x32xf32>
    %cst_2 = arith.constant dense<0.000000e+00> : vector<16xf32>
    %8 = vector.multi_reduction <add>, %7, %cst_2 [1] : vector<16x32xf32> to vector<16xf32>
    %9 = vector.shape_cast %8 : vector<16xf32> to vector<16x1xf32>
    %cst_3 = arith.constant 3.200000e+01 : f32
    %10 = vector.broadcast %cst_3 : f32 to vector<16x1xf32>
    %11 = arith.divf %9, %10 : vector<16x1xf32>
    %cst_4 = arith.constant 9.99999974E-6 : f32
    %12 = vector.broadcast %cst_4 : f32 to vector<16x1xf32>
    %13 = arith.addf %11, %12 : vector<16x1xf32>
    %14 = math.rsqrt %13 : vector<16x1xf32>
    %15 = vector.broadcast %14 : vector<16x1xf32> to vector<16x32xf32>
    %16 = arith.mulf %6, %15 : vector<16x32xf32>
    %c0_5 = arith.constant 0 : index
    %c0_6 = arith.constant 0 : index
    %17 = vector.load %arg3[%c0_5, %c0_6] : memref<1x32xf32, #tpu.memory_space<vmem>>, vector<1x32xf32>
    %18 = vector.broadcast %17 : vector<1x32xf32> to vector<16x32xf32>
    %19 = arith.mulf %16, %18 : vector<16x32xf32>
    %c0_7 = arith.constant 0 : index
    %c0_8 = arith.constant 0 : index
    %20 = vector.load %arg4[%c0_7, %c0_8] : memref<1x32xf32, #tpu.memory_space<vmem>>, vector<1x32xf32>
    %21 = vector.broadcast %20 : vector<1x32xf32> to vector<16x32xf32>
    %22 = arith.addf %19, %21 : vector<16x32xf32>
    %23 = arith.truncf %22 : vector<16x32xf32> to vector<16x32xbf16>
    %c0_9 = arith.constant 0 : index
    %c0_10 = arith.constant 0 : index
    %24 = vector.load %arg5[%c0_9, %c0_10] : memref<32x128xbf16, #tpu.memory_space<vmem>>, vector<32x128xbf16>
    %cst_11 = arith.constant dense<0.000000e+00> : vector<16x128xf32>
    %25 = tpu.matmul %23, %24, %cst_11 {dimension_numbers = #tpu.dot_dimension_numbers<[1], [0], [0], [1], [0, 0, 1, 1], [], []>} : vector<16x32xbf16>, vector<32x128xbf16>, vector<16x128xf32> -> vector<16x128xf32>
    %26 = arith.truncf %25 : vector<16x128xf32> to vector<16x128xbf16>
    %c0_12 = arith.constant 0 : index
    %c0_13 = arith.constant 0 : index
    %27 = vector.load %arg6[%c0_12, %c0_13] : memref<16x128xbf16, #tpu.memory_space<vmem>>, vector<16x128xbf16>
    tpu.vector_store %arg6[%c0_12, %c0_13], %26 {strides = array<i32>} : memref<16x128xbf16, #tpu.memory_space<vmem>>, vector<16x128xbf16>,
    return
  }
  func.func @transform_0(%arg0: i32, %arg1: i32) -> (i32, i32) {
    %c0_i32 = arith.constant 0 : i32
    %c0_i32_0 = arith.constant 0 : i32
    return %arg0, %c0_i32 : i32, i32
  }
  func.func @transform_1(%arg0: i32, %arg1: i32) -> (i32, i32) {
    %c0_i32 = arith.constant 0 : i32
    %c0_i32_0 = arith.constant 0 : i32
    %c0_i32_1 = arith.constant 0 : i32
    return %c0_i32, %c0_i32_0 : i32, i32
  }
  func.func @transform_2(%arg0: i32, %arg1: i32) -> (i32, i32) {
    %c0_i32 = arith.constant 0 : i32
    %c0_i32_0 = arith.constant 0 : i32
    %c0_i32_1 = arith.constant 0 : i32
    return %c0_i32, %c0_i32_0 : i32, i32
  }
  func.func @transform_3(%arg0: i32, %arg1: i32) -> (i32, i32) {
    %c0_i32 = arith.constant 0 : i32
    %c0_i32_0 = arith.constant 0 : i32
    return %c0_i32, %arg1 : i32, i32
  }
  func.func @transform_4(%arg0: i32, %arg1: i32) -> (i32, i32) {
    %c0_i32 = arith.constant 0 : i32
    return %arg0, %arg1 : i32, i32
  }
}

module attributes {stable_mosaic.version = 11 : i64} {
  func.func @_matmul_residual_kernel(%arg0: i32, %arg1: memref<16x32xbf16, #tpu.memory_space<vmem>>, %arg2: memref<32x32xbf16, #tpu.memory_space<vmem>>, %arg3: memref<16x32xf32, #tpu.memory_space<vmem>>, %arg4: memref<16x32xf32, #tpu.memory_space<vmem>>) attributes {dimension_semantics = [#tpu.dimension_semantics<parallel>], iteration_bounds = array<i64: 1>, scalar_prefetch = 0 : i64, scratch_operands = 0 : i64, tpu.core_type = #tpu.core_type<tc>, window_params = [{transform_indices = @transform_0, window_bounds = array<i64: 16, 32>}, {pipeline_mode = #tpu.pipeline_mode<synchronous>, transform_indices = @transform_1, window_bounds = array<i64: 32, 32>}, {transform_indices = @transform_2, window_bounds = array<i64: 16, 32>}, {transform_indices = @transform_3, window_bounds = array<i64: 16, 32>}]} {
    %c0 = arith.constant 0 : index
    %c0_0 = arith.constant 0 : index
    %0 = vector.load %arg3[%c0, %c0_0] : memref<16x32xf32, #tpu.memory_space<vmem>>, vector<16x32xf32>
    %c0_1 = arith.constant 0 : index
    %c0_2 = arith.constant 0 : index
    %1 = vector.load %arg1[%c0_1, %c0_2] : memref<16x32xbf16, #tpu.memory_space<vmem>>, vector<16x32xbf16>
    %c0_3 = arith.constant 0 : index
    %c0_4 = arith.constant 0 : index
    %2 = vector.load %arg2[%c0_3, %c0_4] : memref<32x32xbf16, #tpu.memory_space<vmem>>, vector<32x32xbf16>
    %cst = arith.constant dense<0.000000e+00> : vector<16x32xf32>
    %3 = tpu.matmul %1, %2, %cst {dimension_numbers = #tpu.dot_dimension_numbers<[1], [0], [0], [1], [0, 0, 1, 1], [], []>} : vector<16x32xbf16>, vector<32x32xbf16>, vector<16x32xf32> -> vector<16x32xf32>
    %4 = arith.addf %0, %3 : vector<16x32xf32>
    %c0_5 = arith.constant 0 : index
    %c0_6 = arith.constant 0 : index
    %5 = vector.load %arg4[%c0_5, %c0_6] : memref<16x32xf32, #tpu.memory_space<vmem>>, vector<16x32xf32>
    tpu.vector_store %arg4[%c0_5, %c0_6], %4 {strides = array<i32>} : memref<16x32xf32, #tpu.memory_space<vmem>>, vector<16x32xf32>,
    return
  }
  func.func @transform_0(%arg0: i32) -> (i32, i32) {
    %c0_i32 = arith.constant 0 : i32
    %c0_i32_0 = arith.constant 0 : i32
    return %arg0, %c0_i32 : i32, i32
  }
  func.func @transform_1(%arg0: i32) -> (i32, i32) {
    %c0_i32 = arith.constant 0 : i32
    %c0_i32_0 = arith.constant 0 : i32
    %c0_i32_1 = arith.constant 0 : i32
    return %c0_i32, %c0_i32_0 : i32, i32
  }
  func.func @transform_2(%arg0: i32) -> (i32, i32) {
    %c0_i32 = arith.constant 0 : i32
    %c0_i32_0 = arith.constant 0 : i32
    return %arg0, %c0_i32 : i32, i32
  }
  func.func @transform_3(%arg0: i32) -> (i32, i32) {
    %c0_i32 = arith.constant 0 : i32
    %c0_i32_0 = arith.constant 0 : i32
    return %arg0, %c0_i32 : i32, i32
  }
}

module attributes {stable_mosaic.version = 11 : i64} {
  func.func @_attn_kernel(%arg0: i32, %arg1: memref<1x8x128xbf16, #tpu.memory_space<vmem>>, %arg2: memref<15x32xbf16, #tpu.memory_space<vmem>>, %arg3: memref<8x15x8xf32, #tpu.memory_space<vmem>>, %arg4: memref<1x8x32xbf16, #tpu.memory_space<vmem>>) attributes {dimension_semantics = [#tpu.dimension_semantics<parallel>], iteration_bounds = array<i64: 2>, scalar_prefetch = 0 : i64, scratch_operands = 0 : i64, tpu.core_type = #tpu.core_type<tc>, window_params = [{transform_indices = @transform_0, window_bounds = array<i64: 1, 8, 128>}, {pipeline_mode = #tpu.pipeline_mode<synchronous>, transform_indices = @transform_1, window_bounds = array<i64: 15, 32>}, {pipeline_mode = #tpu.pipeline_mode<synchronous>, transform_indices = @transform_2, window_bounds = array<i64: 8, 15, 8>}, {transform_indices = @transform_3, window_bounds = array<i64: 1, 8, 32>}]} {
    %c0 = arith.constant 0 : index
    %c0_0 = arith.constant 0 : index
    %c0_1 = arith.constant 0 : index
    %0 = vector.load %arg1[%c0, %c0_0, %c0_1] : memref<1x8x128xbf16, #tpu.memory_space<vmem>>, vector<1x8x128xbf16>
    %1 = vector.shape_cast %0 : vector<1x8x128xbf16> to vector<8x128xbf16>
    %c0_2 = arith.constant 0 : index
    %c0_3 = arith.constant 0 : index
    %2 = vector.load %arg2[%c0_2, %c0_3] : memref<15x32xbf16, #tpu.memory_space<vmem>>, vector<15x32xbf16>
    %c0_4 = arith.constant 0 : index
    %c0_5 = arith.constant 0 : index
    %c0_6 = arith.constant 0 : index
    %3 = vector.load %arg3[%c0_4, %c0_5, %c0_6] : memref<8x15x8xf32, #tpu.memory_space<vmem>>, vector<8x15x8xf32>
    %4 = vector.extract_strided_slice %1 {offsets = [0, 0], sizes = [8, 8], strides = [1, 1]} : vector<8x128xbf16> to vector<8x8xbf16>
    %5 = vector.extract_strided_slice %1 {offsets = [0, 32], sizes = [8, 8], strides = [1, 1]} : vector<8x128xbf16> to vector<8x8xbf16>
    %6 = vector.extract_strided_slice %1 {offsets = [0, 64], sizes = [8, 8], strides = [1, 1]} : vector<8x128xbf16> to vector<8x8xbf16>
    %7 = vector.extract_strided_slice %1 {offsets = [0, 96], sizes = [8, 8], strides = [1, 1]} : vector<8x128xbf16> to vector<8x8xbf16>
    %8 = vector.extract_strided_slice %2 {offsets = [0, 0], sizes = [15, 8], strides = [1, 1]} : vector<15x32xbf16> to vector<15x8xbf16>
    %9 = tpu.transpose %6, [1, 0] : vector<8x8xbf16> -> vector<8x8xbf16>
    %cst = arith.constant dense<0.000000e+00> : vector<8x8xf32>
    %10 = tpu.matmul %4, %9, %cst {dimension_numbers = #tpu.dot_dimension_numbers<[1], [0], [0], [1], [0, 0, 1, 1], [], []>} : vector<8x8xbf16>, vector<8x8xbf16>, vector<8x8xf32> -> vector<8x8xf32>
    %11 = tpu.transpose %8, [1, 0] : vector<15x8xbf16> -> vector<8x15xbf16>
    %cst_7 = arith.constant dense<0.000000e+00> : vector<8x15xf32>
    %12 = tpu.matmul %5, %11, %cst_7 {dimension_numbers = #tpu.dot_dimension_numbers<[1], [0], [0], [1], [0, 0, 1, 1], [], []>} : vector<8x8xbf16>, vector<8x15xbf16>, vector<8x15xf32> -> vector<8x15xf32>
    %13 = vector.shape_cast %12 : vector<8x15xf32> to vector<8x1x15xf32>
    %cst_8 = arith.constant dense<0.000000e+00> : vector<8x1x8xf32>
    %14 = tpu.matmul %13, %3, %cst_8 {dimension_numbers = #tpu.dot_dimension_numbers<[2], [1], [1], [2], [0, 0, 0, 1, 1, 2], [0], [0]>} : vector<8x1x15xf32>, vector<8x15x8xf32>, vector<8x1x8xf32> -> vector<8x1x8xf32>
    %15 = vector.shape_cast %14 : vector<8x1x8xf32> to vector<8x8xf32>
    %16 = arith.addf %10, %15 : vector<8x8xf32>
    %cst_9 = arith.constant 0.353553385 : f32
    %17 = vector.broadcast %cst_9 : f32 to vector<8x8xf32>
    %18 = arith.mulf %16, %17 : vector<8x8xf32>
    %cst_10 = arith.constant dense<0xFF800000> : vector<8xf32>
    %19 = vector.multi_reduction <maximumf>, %18, %cst_10 [1] : vector<8x8xf32> to vector<8xf32>
    %20 = vector.shape_cast %19 : vector<8xf32> to vector<8x1xf32>
    %21 = vector.broadcast %20 : vector<8x1xf32> to vector<8x8xf32>
    %22 = arith.subf %18, %21 : vector<8x8xf32>
    %23 = math.exp %22 : vector<8x8xf32>
    %cst_11 = arith.constant dense<0.000000e+00> : vector<8xf32>
    %24 = vector.multi_reduction <add>, %23, %cst_11 [1] : vector<8x8xf32> to vector<8xf32>
    %25 = vector.shape_cast %24 : vector<8xf32> to vector<8x1xf32>
    %26 = tpu.reciprocal %25 {approx = true} : vector<8x1xf32> -> vector<8x1xf32>
    %27 = vector.broadcast %26 : vector<8x1xf32> to vector<8x8xf32>
    %28 = arith.mulf %23, %27 : vector<8x8xf32>
    %29 = arith.truncf %28 : vector<8x8xf32> to vector<8x8xbf16>
    %cst_12 = arith.constant dense<0.000000e+00> : vector<8x8xf32>
    %30 = tpu.matmul %29, %7, %cst_12 {dimension_numbers = #tpu.dot_dimension_numbers<[1], [0], [0], [1], [0, 0, 1, 1], [], []>} : vector<8x8xbf16>, vector<8x8xbf16>, vector<8x8xf32> -> vector<8x8xf32>
    %31 = vector.extract_strided_slice %1 {offsets = [0, 8], sizes = [8, 8], strides = [1, 1]} : vector<8x128xbf16> to vector<8x8xbf16>
    %32 = vector.extract_strided_slice %1 {offsets = [0, 40], sizes = [8, 8], strides = [1, 1]} : vector<8x128xbf16> to vector<8x8xbf16>
    %33 = vector.extract_strided_slice %1 {offsets = [0, 72], sizes = [8, 8], strides = [1, 1]} : vector<8x128xbf16> to vector<8x8xbf16>
    %34 = vector.extract_strided_slice %1 {offsets = [0, 104], sizes = [8, 8], strides = [1, 1]} : vector<8x128xbf16> to vector<8x8xbf16>
    %35 = vector.extract_strided_slice %2 {offsets = [0, 8], sizes = [15, 8], strides = [1, 1]} : vector<15x32xbf16> to vector<15x8xbf16>
    %36 = tpu.transpose %33, [1, 0] : vector<8x8xbf16> -> vector<8x8xbf16>
    %cst_13 = arith.constant dense<0.000000e+00> : vector<8x8xf32>
    %37 = tpu.matmul %31, %36, %cst_13 {dimension_numbers = #tpu.dot_dimension_numbers<[1], [0], [0], [1], [0, 0, 1, 1], [], []>} : vector<8x8xbf16>, vector<8x8xbf16>, vector<8x8xf32> -> vector<8x8xf32>
    %38 = tpu.transpose %35, [1, 0] : vector<15x8xbf16> -> vector<8x15xbf16>
    %cst_14 = arith.constant dense<0.000000e+00> : vector<8x15xf32>
    %39 = tpu.matmul %32, %38, %cst_14 {dimension_numbers = #tpu.dot_dimension_numbers<[1], [0], [0], [1], [0, 0, 1, 1], [], []>} : vector<8x8xbf16>, vector<8x15xbf16>, vector<8x15xf32> -> vector<8x15xf32>
    %40 = vector.shape_cast %39 : vector<8x15xf32> to vector<8x1x15xf32>
    %cst_15 = arith.constant dense<0.000000e+00> : vector<8x1x8xf32>
    %41 = tpu.matmul %40, %3, %cst_15 {dimension_numbers = #tpu.dot_dimension_numbers<[2], [1], [1], [2], [0, 0, 0, 1, 1, 2], [0], [0]>} : vector<8x1x15xf32>, vector<8x15x8xf32>, vector<8x1x8xf32> -> vector<8x1x8xf32>
    %42 = vector.shape_cast %41 : vector<8x1x8xf32> to vector<8x8xf32>
    %43 = arith.addf %37, %42 : vector<8x8xf32>
    %cst_16 = arith.constant 0.353553385 : f32
    %44 = vector.broadcast %cst_16 : f32 to vector<8x8xf32>
    %45 = arith.mulf %43, %44 : vector<8x8xf32>
    %cst_17 = arith.constant dense<0xFF800000> : vector<8xf32>
    %46 = vector.multi_reduction <maximumf>, %45, %cst_17 [1] : vector<8x8xf32> to vector<8xf32>
    %47 = vector.shape_cast %46 : vector<8xf32> to vector<8x1xf32>
    %48 = vector.broadcast %47 : vector<8x1xf32> to vector<8x8xf32>
    %49 = arith.subf %45, %48 : vector<8x8xf32>
    %50 = math.exp %49 : vector<8x8xf32>
    %cst_18 = arith.constant dense<0.000000e+00> : vector<8xf32>
    %51 = vector.multi_reduction <add>, %50, %cst_18 [1] : vector<8x8xf32> to vector<8xf32>
    %52 = vector.shape_cast %51 : vector<8xf32> to vector<8x1xf32>
    %53 = tpu.reciprocal %52 {approx = true} : vector<8x1xf32> -> vector<8x1xf32>
    %54 = vector.broadcast %53 : vector<8x1xf32> to vector<8x8xf32>
    %55 = arith.mulf %50, %54 : vector<8x8xf32>
    %56 = arith.truncf %55 : vector<8x8xf32> to vector<8x8xbf16>
    %cst_19 = arith.constant dense<0.000000e+00> : vector<8x8xf32>
    %57 = tpu.matmul %56, %34, %cst_19 {dimension_numbers = #tpu.dot_dimension_numbers<[1], [0], [0], [1], [0, 0, 1, 1], [], []>} : vector<8x8xbf16>, vector<8x8xbf16>, vector<8x8xf32> -> vector<8x8xf32>
    %58 = vector.extract_strided_slice %1 {offsets = [0, 16], sizes = [8, 8], strides = [1, 1]} : vector<8x128xbf16> to vector<8x8xbf16>
    %59 = vector.extract_strided_slice %1 {offsets = [0, 48], sizes = [8, 8], strides = [1, 1]} : vector<8x128xbf16> to vector<8x8xbf16>
    %60 = vector.extract_strided_slice %1 {offsets = [0, 80], sizes = [8, 8], strides = [1, 1]} : vector<8x128xbf16> to vector<8x8xbf16>
    %61 = vector.extract_strided_slice %1 {offsets = [0, 112], sizes = [8, 8], strides = [1, 1]} : vector<8x128xbf16> to vector<8x8xbf16>
    %62 = vector.extract_strided_slice %2 {offsets = [0, 16], sizes = [15, 8], strides = [1, 1]} : vector<15x32xbf16> to vector<15x8xbf16>
    %63 = tpu.transpose %60, [1, 0] : vector<8x8xbf16> -> vector<8x8xbf16>
    %cst_20 = arith.constant dense<0.000000e+00> : vector<8x8xf32>
    %64 = tpu.matmul %58, %63, %cst_20 {dimension_numbers = #tpu.dot_dimension_numbers<[1], [0], [0], [1], [0, 0, 1, 1], [], []>} : vector<8x8xbf16>, vector<8x8xbf16>, vector<8x8xf32> -> vector<8x8xf32>
    %65 = tpu.transpose %62, [1, 0] : vector<15x8xbf16> -> vector<8x15xbf16>
    %cst_21 = arith.constant dense<0.000000e+00> : vector<8x15xf32>
    %66 = tpu.matmul %59, %65, %cst_21 {dimension_numbers = #tpu.dot_dimension_numbers<[1], [0], [0], [1], [0, 0, 1, 1], [], []>} : vector<8x8xbf16>, vector<8x15xbf16>, vector<8x15xf32> -> vector<8x15xf32>
    %67 = vector.shape_cast %66 : vector<8x15xf32> to vector<8x1x15xf32>
    %cst_22 = arith.constant dense<0.000000e+00> : vector<8x1x8xf32>
    %68 = tpu.matmul %67, %3, %cst_22 {dimension_numbers = #tpu.dot_dimension_numbers<[2], [1], [1], [2], [0, 0, 0, 1, 1, 2], [0], [0]>} : vector<8x1x15xf32>, vector<8x15x8xf32>, vector<8x1x8xf32> -> vector<8x1x8xf32>
    %69 = vector.shape_cast %68 : vector<8x1x8xf32> to vector<8x8xf32>
    %70 = arith.addf %64, %69 : vector<8x8xf32>
    %cst_23 = arith.constant 0.353553385 : f32
    %71 = vector.broadcast %cst_23 : f32 to vector<8x8xf32>
    %72 = arith.mulf %70, %71 : vector<8x8xf32>
    %cst_24 = arith.constant dense<0xFF800000> : vector<8xf32>
    %73 = vector.multi_reduction <maximumf>, %72, %cst_24 [1] : vector<8x8xf32> to vector<8xf32>
    %74 = vector.shape_cast %73 : vector<8xf32> to vector<8x1xf32>
    %75 = vector.broadcast %74 : vector<8x1xf32> to vector<8x8xf32>
    %76 = arith.subf %72, %75 : vector<8x8xf32>
    %77 = math.exp %76 : vector<8x8xf32>
    %cst_25 = arith.constant dense<0.000000e+00> : vector<8xf32>
    %78 = vector.multi_reduction <add>, %77, %cst_25 [1] : vector<8x8xf32> to vector<8xf32>
    %79 = vector.shape_cast %78 : vector<8xf32> to vector<8x1xf32>
    %80 = tpu.reciprocal %79 {approx = true} : vector<8x1xf32> -> vector<8x1xf32>
    %81 = vector.broadcast %80 : vector<8x1xf32> to vector<8x8xf32>
    %82 = arith.mulf %77, %81 : vector<8x8xf32>
    %83 = arith.truncf %82 : vector<8x8xf32> to vector<8x8xbf16>
    %cst_26 = arith.constant dense<0.000000e+00> : vector<8x8xf32>
    %84 = tpu.matmul %83, %61, %cst_26 {dimension_numbers = #tpu.dot_dimension_numbers<[1], [0], [0], [1], [0, 0, 1, 1], [], []>} : vector<8x8xbf16>, vector<8x8xbf16>, vector<8x8xf32> -> vector<8x8xf32>
    %85 = vector.extract_strided_slice %1 {offsets = [0, 24], sizes = [8, 8], strides = [1, 1]} : vector<8x128xbf16> to vector<8x8xbf16>
    %86 = vector.extract_strided_slice %1 {offsets = [0, 56], sizes = [8, 8], strides = [1, 1]} : vector<8x128xbf16> to vector<8x8xbf16>
    %87 = vector.extract_strided_slice %1 {offsets = [0, 88], sizes = [8, 8], strides = [1, 1]} : vector<8x128xbf16> to vector<8x8xbf16>
    %88 = vector.extract_strided_slice %1 {offsets = [0, 120], sizes = [8, 8], strides = [1, 1]} : vector<8x128xbf16> to vector<8x8xbf16>
    %89 = vector.extract_strided_slice %2 {offsets = [0, 24], sizes = [15, 8], strides = [1, 1]} : vector<15x32xbf16> to vector<15x8xbf16>
    %90 = tpu.transpose %87, [1, 0] : vector<8x8xbf16> -> vector<8x8xbf16>
    %cst_27 = arith.constant dense<0.000000e+00> : vector<8x8xf32>
    %91 = tpu.matmul %85, %90, %cst_27 {dimension_numbers = #tpu.dot_dimension_numbers<[1], [0], [0], [1], [0, 0, 1, 1], [], []>} : vector<8x8xbf16>, vector<8x8xbf16>, vector<8x8xf32> -> vector<8x8xf32>
    %92 = tpu.transpose %89, [1, 0] : vector<15x8xbf16> -> vector<8x15xbf16>
    %cst_28 = arith.constant dense<0.000000e+00> : vector<8x15xf32>
    %93 = tpu.matmul %86, %92, %cst_28 {dimension_numbers = #tpu.dot_dimension_numbers<[1], [0], [0], [1], [0, 0, 1, 1], [], []>} : vector<8x8xbf16>, vector<8x15xbf16>, vector<8x15xf32> -> vector<8x15xf32>
    %94 = vector.shape_cast %93 : vector<8x15xf32> to vector<8x1x15xf32>
    %cst_29 = arith.constant dense<0.000000e+00> : vector<8x1x8xf32>
    %95 = tpu.matmul %94, %3, %cst_29 {dimension_numbers = #tpu.dot_dimension_numbers<[2], [1], [1], [2], [0, 0, 0, 1, 1, 2], [0], [0]>} : vector<8x1x15xf32>, vector<8x15x8xf32>, vector<8x1x8xf32> -> vector<8x1x8xf32>
    %96 = vector.shape_cast %95 : vector<8x1x8xf32> to vector<8x8xf32>
    %97 = arith.addf %91, %96 : vector<8x8xf32>
    %cst_30 = arith.constant 0.353553385 : f32
    %98 = vector.broadcast %cst_30 : f32 to vector<8x8xf32>
    %99 = arith.mulf %97, %98 : vector<8x8xf32>
    %cst_31 = arith.constant dense<0xFF800000> : vector<8xf32>
    %100 = vector.multi_reduction <maximumf>, %99, %cst_31 [1] : vector<8x8xf32> to vector<8xf32>
    %101 = vector.shape_cast %100 : vector<8xf32> to vector<8x1xf32>
    %102 = vector.broadcast %101 : vector<8x1xf32> to vector<8x8xf32>
    %103 = arith.subf %99, %102 : vector<8x8xf32>
    %104 = math.exp %103 : vector<8x8xf32>
    %cst_32 = arith.constant dense<0.000000e+00> : vector<8xf32>
    %105 = vector.multi_reduction <add>, %104, %cst_32 [1] : vector<8x8xf32> to vector<8xf32>
    %106 = vector.shape_cast %105 : vector<8xf32> to vector<8x1xf32>
    %107 = tpu.reciprocal %106 {approx = true} : vector<8x1xf32> -> vector<8x1xf32>
    %108 = vector.broadcast %107 : vector<8x1xf32> to vector<8x8xf32>
    %109 = arith.mulf %104, %108 : vector<8x8xf32>
    %110 = arith.truncf %109 : vector<8x8xf32> to vector<8x8xbf16>
    %cst_33 = arith.constant dense<0.000000e+00> : vector<8x8xf32>
    %111 = tpu.matmul %110, %88, %cst_33 {dimension_numbers = #tpu.dot_dimension_numbers<[1], [0], [0], [1], [0, 0, 1, 1], [], []>} : vector<8x8xbf16>, vector<8x8xbf16>, vector<8x8xf32> -> vector<8x8xf32>
    %112 = tpu.concatenate %30, %57, %84, %111 in 1 : vector<8x8xf32>, vector<8x8xf32>, vector<8x8xf32>, vector<8x8xf32> -> vector<8x32xf32>
    %113 = arith.truncf %112 : vector<8x32xf32> to vector<8x32xbf16>
    %c0_34 = arith.constant 0 : index
    %c0_35 = arith.constant 0 : index
    %c0_36 = arith.constant 0 : index
    %114 = vector.load %arg4[%c0_34, %c0_35, %c0_36] : memref<1x8x32xbf16, #tpu.memory_space<vmem>>, vector<1x8x32xbf16>
    %115 = vector.shape_cast %114 : vector<1x8x32xbf16> to vector<8x32xbf16>
    %116 = vector.shape_cast %113 : vector<8x32xbf16> to vector<1x8x32xbf16>
    tpu.vector_store %arg4[%c0_34, %c0_35, %c0_36], %116 {strides = array<i32>} : memref<1x8x32xbf16, #tpu.memory_space<vmem>>, vector<1x8x32xbf16>,
    return
  }
  func.func @transform_0(%arg0: i32) -> (i32, i32, i32) {
    %c0_i32 = arith.constant 0 : i32
    %c0_i32_0 = arith.constant 0 : i32
    %c0_i32_1 = arith.constant 0 : i32
    return %arg0, %c0_i32, %c0_i32_0 : i32, i32, i32
  }
  func.func @transform_1(%arg0: i32) -> (i32, i32) {
    %c0_i32 = arith.constant 0 : i32
    %c0_i32_0 = arith.constant 0 : i32
    %c0_i32_1 = arith.constant 0 : i32
    return %c0_i32, %c0_i32_0 : i32, i32
  }
  func.func @transform_2(%arg0: i32) -> (i32, i32, i32) {
    %c0_i32 = arith.constant 0 : i32
    %c0_i32_0 = arith.constant 0 : i32
    %c0_i32_1 = arith.constant 0 : i32
    %c0_i32_2 = arith.constant 0 : i32
    return %c0_i32, %c0_i32_0, %c0_i32_1 : i32, i32, i32
  }
  func.func @transform_3(%arg0: i32) -> (i32, i32, i32) {
    %c0_i32 = arith.constant 0 : i32
    %c0_i32_0 = arith.constant 0 : i32
    %c0_i32_1 = arith.constant 0 : i32
    return %arg0, %c0_i32, %c0_i32_0 : i32, i32, i32
  }
}

module attributes {stable_mosaic.version = 11 : i64} {
  func.func @_moe_kernel(%arg0: i32, %arg1: i32, %arg2: memref<8x32xf32, #tpu.memory_space<vmem>>, %arg3: memref<1x32xf32, #tpu.memory_space<vmem>>, %arg4: memref<1x32xf32, #tpu.memory_space<vmem>>, %arg5: memref<32x4xf32, #tpu.memory_space<vmem>>, %arg6: memref<1x32x64xbf16, #tpu.memory_space<vmem>>, %arg7: memref<1x64x32xbf16, #tpu.memory_space<vmem>>, %arg8: memref<8x32xf32, #tpu.memory_space<vmem>>, %arg9: memref<8x32xf32, #tpu.memory_space<vmem>>, %arg10: memref<8x4xf32, #tpu.memory_space<vmem>>) attributes {dimension_semantics = [#tpu.dimension_semantics<parallel>, #tpu.dimension_semantics<arbitrary>], iteration_bounds = array<i64: 2, 4>, scalar_prefetch = 0 : i64, scratch_operands = 2 : i64, tpu.core_type = #tpu.core_type<tc>, window_params = [{transform_indices = @transform_0, window_bounds = array<i64: 8, 32>}, {pipeline_mode = #tpu.pipeline_mode<synchronous>, transform_indices = @transform_1, window_bounds = array<i64: 1, 32>}, {pipeline_mode = #tpu.pipeline_mode<synchronous>, transform_indices = @transform_2, window_bounds = array<i64: 1, 32>}, {pipeline_mode = #tpu.pipeline_mode<synchronous>, transform_indices = @transform_3, window_bounds = array<i64: 32, 4>}, {transform_indices = @transform_4, window_bounds = array<i64: 1, 32, 64>}, {transform_indices = @transform_5, window_bounds = array<i64: 1, 64, 32>}, {transform_indices = @transform_6, window_bounds = array<i64: 8, 32>}]} {
    %c0_i32 = arith.constant 0 : i32
    %0 = arith.cmpi eq, %arg1, %c0_i32 : i32
    %1 = arith.extui %0 : i1 to i32
    %c0_i32_0 = arith.constant 0 : i32
    %2 = arith.cmpi ne, %1, %c0_i32_0 : i32
    scf.if %2 {
      %c0_21 = arith.constant 0 : index
      %c0_22 = arith.constant 0 : index
      %43 = vector.load %arg2[%c0_21, %c0_22] : memref<8x32xf32, #tpu.memory_space<vmem>>, vector<8x32xf32>
      %cst_23 = arith.constant dense<0.000000e+00> : vector<8xf32>
      %44 = vector.multi_reduction <add>, %43, %cst_23 [1] : vector<8x32xf32> to vector<8xf32>
      %45 = vector.shape_cast %44 : vector<8xf32> to vector<8x1xf32>
      %cst_24 = arith.constant 3.200000e+01 : f32
      %46 = vector.broadcast %cst_24 : f32 to vector<8x1xf32>
      %47 = arith.divf %45, %46 : vector<8x1xf32>
      %48 = vector.broadcast %47 : vector<8x1xf32> to vector<8x32xf32>
      %49 = arith.subf %43, %48 : vector<8x32xf32>
      %50 = arith.mulf %49, %49 : vector<8x32xf32>
      %cst_25 = arith.constant dense<0.000000e+00> : vector<8xf32>
      %51 = vector.multi_reduction <add>, %50, %cst_25 [1] : vector<8x32xf32> to vector<8xf32>
      %52 = vector.shape_cast %51 : vector<8xf32> to vector<8x1xf32>
      %cst_26 = arith.constant 3.200000e+01 : f32
      %53 = vector.broadcast %cst_26 : f32 to vector<8x1xf32>
      %54 = arith.divf %52, %53 : vector<8x1xf32>
      %cst_27 = arith.constant 9.99999974E-6 : f32
      %55 = vector.broadcast %cst_27 : f32 to vector<8x1xf32>
      %56 = arith.addf %54, %55 : vector<8x1xf32>
      %57 = math.rsqrt %56 : vector<8x1xf32>
      %58 = vector.broadcast %57 : vector<8x1xf32> to vector<8x32xf32>
      %59 = arith.mulf %49, %58 : vector<8x32xf32>
      %c0_28 = arith.constant 0 : index
      %c0_29 = arith.constant 0 : index
      %60 = vector.load %arg3[%c0_28, %c0_29] : memref<1x32xf32, #tpu.memory_space<vmem>>, vector<1x32xf32>
      %61 = vector.broadcast %60 : vector<1x32xf32> to vector<8x32xf32>
      %62 = arith.mulf %59, %61 : vector<8x32xf32>
      %c0_30 = arith.constant 0 : index
      %c0_31 = arith.constant 0 : index
      %63 = vector.load %arg4[%c0_30, %c0_31] : memref<1x32xf32, #tpu.memory_space<vmem>>, vector<1x32xf32>
      %64 = vector.broadcast %63 : vector<1x32xf32> to vector<8x32xf32>
      %65 = arith.addf %62, %64 : vector<8x32xf32>
      %c0_32 = arith.constant 0 : index
      %c0_33 = arith.constant 0 : index
      %66 = vector.load %arg9[%c0_32, %c0_33] : memref<8x32xf32, #tpu.memory_space<vmem>>, vector<8x32xf32>
      tpu.vector_store %arg9[%c0_32, %c0_33], %65 {strides = array<i32>} : memref<8x32xf32, #tpu.memory_space<vmem>>, vector<8x32xf32>,
      %c0_34 = arith.constant 0 : index
      %c0_35 = arith.constant 0 : index
      %67 = vector.load %arg5[%c0_34, %c0_35] : memref<32x4xf32, #tpu.memory_space<vmem>>, vector<32x4xf32>
      %cst_36 = arith.constant dense<0.000000e+00> : vector<8x4xf32>
      %68 = tpu.matmul %65, %67, %cst_36 {dimension_numbers = #tpu.dot_dimension_numbers<[1], [0], [0], [1], [0, 0, 1, 1], [], []>} : vector<8x32xf32>, vector<32x4xf32>, vector<8x4xf32> -> vector<8x4xf32>
      %69 = arith.negf %68 : vector<8x4xf32>
      %70 = math.exp %69 : vector<8x4xf32>
      %cst_37 = arith.constant 1.000000e+00 : f32
      %71 = vector.broadcast %cst_37 : f32 to vector<8x4xf32>
      %72 = arith.addf %71, %70 : vector<8x4xf32>
      %73 = arith.divf %71, %72 : vector<8x4xf32>
      %c0_38 = arith.constant 0 : index
      %c0_39 = arith.constant 0 : index
      %74 = vector.load %arg10[%c0_38, %c0_39] : memref<8x4xf32, #tpu.memory_space<vmem>>, vector<8x4xf32>
      tpu.vector_store %arg10[%c0_38, %c0_39], %73 {strides = array<i32>} : memref<8x4xf32, #tpu.memory_space<vmem>>, vector<8x4xf32>,
      %c0_40 = arith.constant 0 : index
      %c0_41 = arith.constant 0 : index
      %75 = vector.load %arg8[%c0_40, %c0_41] : memref<8x32xf32, #tpu.memory_space<vmem>>, vector<8x32xf32>
      tpu.vector_store %arg8[%c0_40, %c0_41], %43 {strides = array<i32>} : memref<8x32xf32, #tpu.memory_space<vmem>>, vector<8x32xf32>,
    } else {
    }
    %c0 = arith.constant 0 : index
    %c0_1 = arith.constant 0 : index
    %3 = vector.load %arg9[%c0, %c0_1] : memref<8x32xf32, #tpu.memory_space<vmem>>, vector<8x32xf32>
    %c0_2 = arith.constant 0 : index
    %c0_3 = arith.constant 0 : index
    %4 = vector.load %arg10[%c0_2, %c0_3] : memref<8x4xf32, #tpu.memory_space<vmem>>, vector<8x4xf32>
    %5 = tpu.iota {dimensions = array<i32: 1>} : vector<8x4xi32>
    %6 = vector.broadcast %arg1 : i32 to vector<8x4xi32>
    %7 = arith.cmpi eq, %5, %6 : vector<8x4xi32>
    %cst = arith.constant 0xFF800000 : f32
    %8 = vector.broadcast %cst : f32 to vector<8x4xf32>
    %9 = arith.select %7, %4, %8 : vector<8x4xi1>, vector<8x4xf32>
    %cst_4 = arith.constant dense<0xFF800000> : vector<8xf32>
    %10 = vector.multi_reduction <maximumf>, %9, %cst_4 [1] : vector<8x4xf32> to vector<8xf32>
    %11 = vector.shape_cast %10 : vector<8xf32> to vector<8x1xf32>
    %12 = vector.broadcast %11 : vector<8x1xf32> to vector<8x4xf32>
    %13 = arith.cmpf ogt, %4, %12 : vector<8x4xf32>
    %14 = vector.broadcast %11 : vector<8x1xf32> to vector<8x4xf32>
    %15 = arith.cmpf oeq, %4, %14 : vector<8x4xf32>
    %16 = vector.broadcast %arg1 : i32 to vector<8x4xi32>
    %17 = arith.cmpi slt, %5, %16 : vector<8x4xi32>
    %18 = arith.andi %15, %17 : vector<8x4xi1>
    %19 = arith.ori %13, %18 : vector<8x4xi1>
    %20 = arith.extui %19 : vector<8x4xi1> to vector<8x4xi32>
    %21 = arith.sitofp %20 : vector<8x4xi32> to vector<8x4xf32>
    %cst_5 = arith.constant dense<0.000000e+00> : vector<8xf32>
    %22 = vector.multi_reduction <add>, %21, %cst_5 [1] : vector<8x4xf32> to vector<8xf32>
    %23 = vector.shape_cast %22 : vector<8xf32> to vector<8x1xf32>
    %cst_6 = arith.constant 2.000000e+00 : f32
    %24 = vector.broadcast %cst_6 : f32 to vector<8x1xf32>
    %25 = arith.cmpf olt, %23, %24 : vector<8x1xf32>
    %cst_7 = arith.constant 0.000000e+00 : f32
    %26 = vector.broadcast %cst_7 : f32 to vector<8x1xf32>
    %27 = arith.select %25, %11, %26 : vector<8x1xi1>, vector<8x1xf32>
    %28 = arith.truncf %3 : vector<8x32xf32> to vector<8x32xbf16>
    %c0_8 = arith.constant 0 : index
    %c0_9 = arith.constant 0 : index
    %c0_10 = arith.constant 0 : index
    %29 = vector.load %arg6[%c0_8, %c0_9, %c0_10] : memref<1x32x64xbf16, #tpu.memory_space<vmem>>, vector<1x32x64xbf16>
    %30 = vector.shape_cast %29 : vector<1x32x64xbf16> to vector<32x64xbf16>
    %cst_11 = arith.constant dense<0.000000e+00> : vector<8x64xf32>
    %31 = tpu.matmul %28, %30, %cst_11 {dimension_numbers = #tpu.dot_dimension_numbers<[1], [0], [0], [1], [0, 0, 1, 1], [], []>} : vector<8x32xbf16>, vector<32x64xbf16>, vector<8x64xf32> -> vector<8x64xf32>
    %cst_12 = arith.constant 0.000000e+00 : f32
    %32 = vector.broadcast %cst_12 : f32 to vector<8x64xf32>
    %33 = arith.maximumf %31, %32 : vector<8x64xf32>
    %c0_13 = arith.constant 0 : index
    %c0_14 = arith.constant 0 : index
    %34 = vector.load %arg8[%c0_13, %c0_14] : memref<8x32xf32, #tpu.memory_space<vmem>>, vector<8x32xf32>
    %35 = arith.truncf %33 : vector<8x64xf32> to vector<8x64xbf16>
    %c0_15 = arith.constant 0 : index
    %c0_16 = arith.constant 0 : index
    %c0_17 = arith.constant 0 : index
    %36 = vector.load %arg7[%c0_15, %c0_16, %c0_17] : memref<1x64x32xbf16, #tpu.memory_space<vmem>>, vector<1x64x32xbf16>
    %37 = vector.shape_cast %36 : vector<1x64x32xbf16> to vector<64x32xbf16>
    %cst_18 = arith.constant dense<0.000000e+00> : vector<8x32xf32>
    %38 = tpu.matmul %35, %37, %cst_18 {dimension_numbers = #tpu.dot_dimension_numbers<[1], [0], [0], [1], [0, 0, 1, 1], [], []>} : vector<8x64xbf16>, vector<64x32xbf16>, vector<8x32xf32> -> vector<8x32xf32>
    %39 = vector.broadcast %27 : vector<8x1xf32> to vector<8x32xf32>
    %40 = arith.mulf %39, %38 : vector<8x32xf32>
    %41 = arith.addf %34, %40 : vector<8x32xf32>
    %c0_19 = arith.constant 0 : index
    %c0_20 = arith.constant 0 : index
    %42 = vector.load %arg8[%c0_19, %c0_20] : memref<8x32xf32, #tpu.memory_space<vmem>>, vector<8x32xf32>
    tpu.vector_store %arg8[%c0_19, %c0_20], %41 {strides = array<i32>} : memref<8x32xf32, #tpu.memory_space<vmem>>, vector<8x32xf32>,
    return
  }
  func.func @transform_0(%arg0: i32, %arg1: i32) -> (i32, i32) {
    %c0_i32 = arith.constant 0 : i32
    %c0_i32_0 = arith.constant 0 : i32
    return %arg0, %c0_i32 : i32, i32
  }
  func.func @transform_1(%arg0: i32, %arg1: i32) -> (i32, i32) {
    %c0_i32 = arith.constant 0 : i32
    %c0_i32_0 = arith.constant 0 : i32
    %c0_i32_1 = arith.constant 0 : i32
    return %c0_i32, %c0_i32_0 : i32, i32
  }
  func.func @transform_2(%arg0: i32, %arg1: i32) -> (i32, i32) {
    %c0_i32 = arith.constant 0 : i32
    %c0_i32_0 = arith.constant 0 : i32
    %c0_i32_1 = arith.constant 0 : i32
    return %c0_i32, %c0_i32_0 : i32, i32
  }
  func.func @transform_3(%arg0: i32, %arg1: i32) -> (i32, i32) {
    %c0_i32 = arith.constant 0 : i32
    %c0_i32_0 = arith.constant 0 : i32
    %c0_i32_1 = arith.constant 0 : i32
    return %c0_i32, %c0_i32_0 : i32, i32
  }
  func.func @transform_4(%arg0: i32, %arg1: i32) -> (i32, i32, i32) {
    %c0_i32 = arith.constant 0 : i32
    %c0_i32_0 = arith.constant 0 : i32
    %c0_i32_1 = arith.constant 0 : i32
    return %arg1, %c0_i32, %c0_i32_0 : i32, i32, i32
  }
  func.func @transform_5(%arg0: i32, %arg1: i32) -> (i32, i32, i32) {
    %c0_i32 = arith.constant 0 : i32
    %c0_i32_0 = arith.constant 0 : i32
    %c0_i32_1 = arith.constant 0 : i32
    return %arg1, %c0_i32, %c0_i32_0 : i32, i32, i32
  }
  func.func @transform_6(%arg0: i32, %arg1: i32) -> (i32, i32) {
    %c0_i32 = arith.constant 0 : i32
    %c0_i32_0 = arith.constant 0 : i32
    return %arg0, %c0_i32 : i32, i32
  }
}

</mosaic_0001>

<llo_original>
// kernel: relative_moe_layer_forward.6
$region0: #{relative_moe_layer_forward.6}
  #allocation0 [shape = 'u32[]', space=smem, size = 0x4, offset = 0x4, fixed_abs, tag = 'smem constant byte address 0x4 - core index']
  #allocation1 [shape = 'u32[144,128]{1,0:T(1,128)}', space=vmem, size = 0x12000, scoped, tag = 'internal scratch']
  %s0 = inlined_call_operand.vmem [shape: f32[15,32], index: 0, kind: input, shape index: {}]
  %s1 = inlined_call_operand.vmem [shape: f32[32,32], index: 1, kind: input, shape index: {}]
  %s2 = inlined_call_operand.vmem [shape: f32[15,32], index: 2, kind: output, shape index: {}]
  %s3 = sld [smem:[#allocation0]]
  $region18: #{relative_moe_layer_forward.6} parent=0
    _
  %s5 = ssub.s32 1, %s3
  %s6 = scalar_select 0, %s5, %s3
  // Predicated region
  $region2: #{relative_moe_layer_forward.6} parent=0 // pred_check
    _
  $region3: #{relative_moe_layer_forward.6} parent=0 // pred_check_branch
    %8 = sbr.rel (0) target = $region5
  $region4: #{relative_moe_layer_forward.6} parent=0 // pred_region
    _
  $region5: #{relative_moe_layer_forward.6} parent=0 // pred_fallthru
    _
  // Predicated region
  $region6: #{relative_moe_layer_forward.6} parent=0 // pred_check
    _
  $region7: #{relative_moe_layer_forward.6} parent=0 // pred_check_branch
    %10 = sbr.rel (0) target = $region9
  $region8: #{relative_moe_layer_forward.6} parent=0 // pred_region
    _
  $region9: #{relative_moe_layer_forward.6} parent=0 // pred_fallthru
    _
  %v11 = vld [vmem:[%s0] sm:$0xff]
  %v12 = vld [vmem:[%s0 + $0x8] sm:$0x7f]
  %v13 = vld [vmem:[%s1] sm:$0xff]
  %v14 = vld [vmem:[%s1 + $0x8] sm:$0xff]
  %v15 = vld [vmem:[%s1 + $0x10] sm:$0xff]
  %v16 = vld [vmem:[%s1 + $0x18] sm:$0xff]
  %vm17 = vcmask 261120
  %v19 = vsel %vm17, %v11, 0
  %v22 = vsel %vm17, %v12, 0
  %24 = vmatprep.subr.mxu0 0.0
  %25 = vmatpush1.msra.mxu0 %v13
  %26 = vmatprep.subr.mxu0 0.0
  %27 = vmatpush1.msra.mxu0 %v14
  %28 = vmatprep.subr.mxu0 0.0
  %29 = vmatpush1.msra.mxu0 %v15
  %30 = vmatprep.subr.mxu0 0.0
  %31 = vmatpush1.msra.mxu0 %v16
  %32 = vmatprep.subr.mxu0 0.0
  %33 = vmatpush1.msra.mxu0 0.0
  %34 = vmatprep.subr.mxu0 0.0
  %35 = vmatpush1.msra.mxu0 0.0
  %36 = vmatprep.subr.mxu0 0.0
  %37 = vmatpush1.msra.mxu0 0.0
  %38 = vmatprep.subr.mxu0 0.0
  %39 = vmatpush1.msra.mxu0 0.0
  %40 = vmatprep.subr.mxu0 0.0
  %41 = vmatpush1.msra.mxu0 0.0
  %42 = vmatprep.subr.mxu0 0.0
  %43 = vmatpush1.msra.mxu0 0.0
  %44 = vmatprep.subr.mxu0 0.0
  %45 = vmatpush1.msra.mxu0 0.0
  %46 = vmatprep.subr.mxu0 0.0
  %47 = vmatpush1.msra.mxu0 0.0
  %48 = vmatprep.subr.mxu0 0.0
  %49 = vmatpush1.msra.mxu0 0.0
  %50 = vmatprep.subr.mxu0 0.0
  %51 = vmatpush1.msra.mxu0 0.0
  %52 = vmatprep.subr.mxu0 0.0
  %53 = vmatpush1.msra.mxu0 0.0
  %54 = vmatprep.subr.mxu0 0.0
  %55 = vmatpush1.msra.mxu0 0.0
  %56 = vmatprep.subr.mxu0 0.0
  %57 = vmatpush1.msra.mxu0 0.0
  %58 = vmatprep.subr.mxu0 0.0
  %59 = vmatpush1.msra.mxu0 0.0
  %60 = vmatprep.subr.mxu0 0.0
  %61 = vmatpush1.msra.mxu0 0.0
  %62 = vmatprep.subr.mxu0 0.0
  %63 = vmatpush1.msra.mxu0 0.0
  %64 = vmatprep.subr.mxu0 0.0
  %65 = vmatpush1.msra.mxu0 0.0
  %66 = vmatprep.subr.mxu0 0.0
  %67 = vmatpush1.msra.mxu0 0.0
  %68 = vmatprep.subr.mxu0 0.0
  %69 = vmatpush1.msra.mxu0 0.0
  %70 = vmatprep.subr.mxu0 0.0
  %71 = vmatpush1.msra.mxu0 0.0
  %72 = vmatprep.subr.mxu0 0.0
  %73 = vmatpush1.msra.mxu0 0.0
  %74 = vmatprep.subr.mxu0 0.0
  %75 = vmatpush1.msra.mxu0 0.0
  %76 = vmatprep.subr.mxu0 0.0
  %77 = vmatpush1.msra.mxu0 0.0
  %78 = vmatprep.subr.mxu0 0.0
  %79 = vmatpush1.msra.mxu0 0.0
  %80 = vmatprep.subr.mxu0 0.0
  %81 = vmatpush1.msra.mxu0 0.0
  %82 = vmatprep.subr.mxu0 0.0
  %83 = vmatpush1.msra.mxu0 0.0
  %84 = vmatprep.subr.mxu0 0.0
  %85 = vmatpush1.msra.mxu0 0.0
  %86 = vmatprep.subr.mxu0 0.0
  %87 = vmatpush1.msra.mxu0 0.0
  %88 = vmatprep.mubr.f32.mxu0 0.0
  %89 = vmatmul.mubr.f32.gmra.mrb[0].mxu0 %v19
  %v90 = vpop.f32.mrb[0].mxu0
  %v91 = vadd.f32 0.0, %v90
  %v92 = vpop.f32.mrb[0].mxu0
  %93 = vmatprep.mubr.f32.mxu0 0.0
  %94 = vmatmul.mubr.f32.gmra.mrb[0].mxu0 %v22
  %v95 = vpop.f32.mrb[0].mxu0
  %v96 = vadd.f32 0.0, %v95
  %v97 = vpop.f32.mrb[0].mxu0
  %98 = vdwg.mxu0
  %99 = vst.msk [vmem:[%s2] sm:$0xff] %vm17, %v91
  %vm100 = vcmask 260096
  %101 = vst.msk [vmem:[%s2 + $0x8] sm:$0x7f] %vm100, %v96
  // Predicated region
  $region10: #{relative_moe_layer_forward.6} parent=0 // pred_check
    _
  $region11: #{relative_moe_layer_forward.6} parent=0 // pred_check_branch
    %103 = sbr.rel (0) target = $region13
  $region12: #{relative_moe_layer_forward.6} parent=0 // pred_region
    _
  $region13: #{relative_moe_layer_forward.6} parent=0 // pred_fallthru
    _
  // Predicated region
  $region14: #{relative_moe_layer_forward.6} parent=0 // pred_check
    _
  $region15: #{relative_moe_layer_forward.6} parent=0 // pred_check_branch
    %105 = sbr.rel (0) target = $region17
  $region16: #{relative_moe_layer_forward.6} parent=0 // pred_region
    _
  $region17: #{relative_moe_layer_forward.6} parent=0 // pred_fallthru
    _

// kernel: relative_moe_layer_forward.8
$region0: #{relative_moe_layer_forward.8}
  #allocation0 [shape = 'u32[]', space=smem, size = 0x4, offset = 0x4, fixed_abs, tag = 'smem constant byte address 0x4 - core index']
  #allocation1 [shape = 'u32[144,128]{1,0:T(1,128)}', space=vmem, size = 0x12000, scoped, tag = 'internal scratch']
  %s0 = inlined_call_operand.vmem [shape: bf16[16,32], index: 0, kind: input, shape index: {}]
  %s1 = inlined_call_operand.vmem [shape: bf16[32,32], index: 1, kind: input, shape index: {}]
  %s2 = inlined_call_operand.vmem [shape: f32[16,32], index: 2, kind: input, shape index: {}]
  %s3 = inlined_call_operand.vmem [shape: f32[16,32], index: 3, kind: output, shape index: {}]
  %s4 = sld [smem:[#allocation0]]
  $region22: #{relative_moe_layer_forward.8} parent=0
    _
  %s6 = ssub.s32 1, %s4
  %s7 = scalar_select 0, %s6, %s4
  // Predicated region
  $region2: #{relative_moe_layer_forward.8} parent=0 // pred_check
    _
  $region3: #{relative_moe_layer_forward.8} parent=0 // pred_check_branch
    %9 = sbr.rel (0) target = $region5
  $region4: #{relative_moe_layer_forward.8} parent=0 // pred_region
    _
  $region5: #{relative_moe_layer_forward.8} parent=0 // pred_fallthru
    _
  // Predicated region
  $region6: #{relative_moe_layer_forward.8} parent=0 // pred_check
    _
  $region7: #{relative_moe_layer_forward.8} parent=0 // pred_check_branch
    %11 = sbr.rel (0) target = $region9
  $region8: #{relative_moe_layer_forward.8} parent=0 // pred_region
    _
  $region9: #{relative_moe_layer_forward.8} parent=0 // pred_fallthru
    _
  // Predicated region
  $region10: #{relative_moe_layer_forward.8} parent=0 // pred_check
    _
  $region11: #{relative_moe_layer_forward.8} parent=0 // pred_check_branch
    %13 = sbr.rel (0) target = $region13
  $region12: #{relative_moe_layer_forward.8} parent=0 // pred_region
    _
  $region13: #{relative_moe_layer_forward.8} parent=0 // pred_fallthru
    _
  %v15 = vld [vmem:[%s2] sm:$0xff]
  %v16 = vld [vmem:[%s2 + $0x8] sm:$0xff]
  %v17 = vld [vmem:[%s0] sm:$0xf]
  %v18 = vld [vmem:[%s0 + $0x4] sm:$0xf]
  %v19 = vld [vmem:[%s1] sm:$0xf]
  %v20 = vld [vmem:[%s1 + $0x4] sm:$0xf]
  %v21 = vld [vmem:[%s1 + $0x8] sm:$0xf]
  %v22 = vld [vmem:[%s1 + $0xc] sm:$0xf]
  %v25 = vunpack.c.l.b16 %v17
  %v26 = vunpack.c.l.b16 %v18
  %v27 = vpack.c.b16 %v26, %v25
  %v32 = vunpack.c.l.b16 %v19
  %v33 = vunpack.c.l.b16 %v20
  %v34 = vunpack.c.l.b16 %v21
  %v35 = vunpack.c.l.b16 %v22
  %v36 = vpack.c.b16 %v33, %v32
  %v37 = vpack.c.b16 %v35, %v34
  %vm40 = vcmask 261120
  %v42 = vsel %vm40, %v27, 0
  %44 = vmatprep.subr.bf16.mxu0 0
  %45 = vmatpush1.bf16.msra.mxu0 %v36
  %46 = vmatprep.subr.bf16.mxu0 0
  %47 = vmatpush1.bf16.msra.mxu0 %v37
  %48 = vmatprep.subr.bf16.mxu0 0
  %49 = vmatpush1.bf16.msra.mxu0 0
  %50 = vmatprep.subr.bf16.mxu0 0
  %51 = vmatpush1.bf16.msra.mxu0 0
  %52 = vmatprep.subr.bf16.mxu0 0
  %53 = vmatpush1.bf16.msra.mxu0 0
  %54 = vmatprep.subr.bf16.mxu0 0
  %55 = vmatpush1.bf16.msra.mxu0 0
  %56 = vmatprep.subr.bf16.mxu0 0
  %57 = vmatpush1.bf16.msra.mxu0 0
  %58 = vmatprep.subr.bf16.mxu0 0
  %59 = vmatpush1.bf16.msra.mxu0 0
  %60 = vmatprep.subr.bf16.mxu0 0
  %61 = vmatpush1.bf16.msra.mxu0 0
  %62 = vmatprep.subr.bf16.mxu0 0
  %63 = vmatpush1.bf16.msra.mxu0 0
  %64 = vmatprep.subr.bf16.mxu0 0
  %65 = vmatpush1.bf16.msra.mxu0 0
  %66 = vmatprep.subr.bf16.mxu0 0
  %67 = vmatpush1.bf16.msra.mxu0 0
  %68 = vmatprep.subr.bf16.mxu0 0
  %69 = vmatpush1.bf16.msra.mxu0 0
  %70 = vmatprep.subr.bf16.mxu0 0
  %71 = vmatpush1.bf16.msra.mxu0 0
  %72 = vmatprep.subr.bf16.mxu0 0
  %73 = vmatpush1.bf16.msra.mxu0 0
  %74 = vmatprep.subr.bf16.mxu0 0
  %75 = vmatpush1.bf16.msra.mxu0 0
  %76 = vmatprep.mubr.bf16.mxu0 0
  %77 = vmatmul.mubr.bf16.gmra.mrb[0].mxu0 %v42
  %v78 = vpop.f32.mrb[0].mxu0
  %v79 = vadd.f32 0.0, %v78
  %v80 = vpop.f32.mrb[0].mxu0
  %v81 = vpop.f32.mrb[0].mxu0
  %v82 = vadd.f32 0.0, %v81
  %v83 = vpop.f32.mrb[0].mxu0
  %84 = vdwg.mxu0
  %v85 = vadd.f32 %v15, %v79
  %v86 = vadd.f32 %v16, %v82
  %87 = vst.msk [vmem:[%s3] sm:$0xff] %vm40, %v85
  %88 = vst.msk [vmem:[%s3 + $0x8] sm:$0xff] %vm40, %v86
  // Predicated region
  $region14: #{relative_moe_layer_forward.8} parent=0 // pred_check
    _
  $region15: #{relative_moe_layer_forward.8} parent=0 // pred_check_branch
    %90 = sbr.rel (0) target = $region17
  $region16: #{relative_moe_layer_forward.8} parent=0 // pred_region
    _
  $region17: #{relative_moe_layer_forward.8} parent=0 // pred_fallthru
    _
  // Predicated region
  $region18: #{relative_moe_layer_forward.8} parent=0 // pred_check
    _
  $region19: #{relative_moe_layer_forward.8} parent=0 // pred_check_branch
    %92 = sbr.rel (0) target = $region21
  $region20: #{relative_moe_layer_forward.8} parent=0 // pred_region
    _
  $region21: #{relative_moe_layer_forward.8} parent=0 // pred_fallthru
    _

// kernel: relative_moe_layer_forward.5
$region0: #{relative_moe_layer_forward.5}
  #allocation0 [shape = 'u32[]', space=smem, size = 0x4, offset = 0x4, fixed_abs, tag = 'smem constant byte address 0x4 - core index']
  #allocation1 [shape = 'u32[144,128]{1,0:T(1,128)}', space=vmem, size = 0x12000, scoped, tag = 'internal scratch']
  %s0 = inlined_call_operand.vmem [shape: f32[16,32], index: 0, kind: input, shape index: {}]
  %s1 = inlined_call_operand.vmem [shape: f32[1,32], index: 1, kind: input, shape index: {}]
  %s2 = inlined_call_operand.vmem [shape: f32[1,32], index: 2, kind: input, shape index: {}]
  %s3 = inlined_call_operand.vmem [shape: bf16[32,128], index: 3, kind: input, shape index: {}]
  %s4 = inlined_call_operand.vmem [shape: bf16[16,128], index: 4, kind: output, shape index: {}]
  %s5 = sld [smem:[#allocation0]]
  $region26: #{relative_moe_layer_forward.5} parent=0
    _
  %s7 = ssub.s32 1, %s5
  %s8 = scalar_select 0, %s7, %s5
  // Predicated region
  $region2: #{relative_moe_layer_forward.5} parent=0 // pred_check
    _
  $region3: #{relative_moe_layer_forward.5} parent=0 // pred_check_branch
    %10 = sbr.rel (0) target = $region5
  $region4: #{relative_moe_layer_forward.5} parent=0 // pred_region
    _
  $region5: #{relative_moe_layer_forward.5} parent=0 // pred_fallthru
    _
  // Predicated region
  $region6: #{relative_moe_layer_forward.5} parent=0 // pred_check
    _
  $region7: #{relative_moe_layer_forward.5} parent=0 // pred_check_branch
    %12 = sbr.rel (0) target = $region9
  $region8: #{relative_moe_layer_forward.5} parent=0 // pred_region
    _
  $region9: #{relative_moe_layer_forward.5} parent=0 // pred_fallthru
    _
  // Predicated region
  $region10: #{relative_moe_layer_forward.5} parent=0 // pred_check
    _
  $region11: #{relative_moe_layer_forward.5} parent=0 // pred_check_branch
    %14 = sbr.rel (0) target = $region13
  $region12: #{relative_moe_layer_forward.5} parent=0 // pred_region
    _
  $region13: #{relative_moe_layer_forward.5} parent=0 // pred_fallthru
    _
  // Predicated region
  $region14: #{relative_moe_layer_forward.5} parent=0 // pred_check
    _
  $region15: #{relative_moe_layer_forward.5} parent=0 // pred_check_branch
    %16 = sbr.rel (0) target = $region17
  $region16: #{relative_moe_layer_forward.5} parent=0 // pred_region
    _
  $region17: #{relative_moe_layer_forward.5} parent=0 // pred_fallthru
    _
  %v18 = vld [vmem:[%s0] sm:$0xff]
  %v19 = vld [vmem:[%s0 + $0x8] sm:$0xff]
  %vm20 = vcmask 261120
  %v21 = vsel %vm20, %v18, 0.0
  %22 = vadd.xlane.f32.xlu0 %v21
  %v23 = vpop.xlane.xlu0 %22
  %v24 = vsel %vm20, %v19, 0.0
  %25 = vadd.xlane.f32.xlu0 %v24
  %v26 = vpop.xlane.xlu0 %25
  %v27 = vrcp.pop 32.0
  %v28 = vmul.f32 %v23, %v27
  %v29 = vmul.f32 %v26, %v27
  %v30 = vsub.f32 %v18, %v28
  %v31 = vsub.f32 %v19, %v29
  %v32 = vmul.f32 %v30, %v30
  %v33 = vmul.f32 %v31, %v31
  %v34 = vsel %vm20, %v32, 0.0
  %35 = vadd.xlane.f32.xlu0 %v34
  %v36 = vpop.xlane.xlu0 %35
  %v37 = vsel %vm20, %v33, 0.0
  %38 = vadd.xlane.f32.xlu0 %v37
  %v39 = vpop.xlane.xlu0 %38
  %v40 = vmul.f32 %v36, %v27
  %v41 = vmul.f32 %v39, %v27
  %v42 = vadd.f32 %v40, 1e-05
  %v43 = vadd.f32 %v41, 1e-05
  %v44 = vrsqrt.pop %v42
  %v45 = vrsqrt.pop %v43
  %v46 = vmul.f32 %v30, %v44
  %v47 = vmul.f32 %v31, %v45
  %v48 = vld [vmem:[%s1] sm:$0x1]
  %v50 = vlaneseq
  %v51 = vshrl.u32 %v50, 7
  %v52 = vsub.s32 0, %v51
  %v53 = vrot.slane %v48, %v52
  %v55 = vmul.f32 %v46, %v53
  %v56 = vmul.f32 %v47, %v53
  %v57 = vld [vmem:[%s2] sm:$0x1]
  %v59 = vlaneseq
  %v60 = vshrl.u32 %v59, 7
  %v61 = vsub.s32 0, %v60
  %v62 = vrot.slane %v57, %v61
  %v64 = vadd.f32 %v55, %v62
  %v65 = vadd.f32 %v56, %v62
  %v66 = vpack.c.bf16 %v65, %v64
  %v67 = vld [vmem:[%s3] sm:$0xf]
  %v68 = vld [vmem:[%s3 + $0x4] sm:$0xf]
  %v69 = vld [vmem:[%s3 + $0x8] sm:$0xf]
  %v70 = vld [vmem:[%s3 + $0xc] sm:$0xf]
  %v75 = vunpack.c.l.b16 %v67
  %v76 = vunpack.c.l.b16 %v68
  %v77 = vunpack.c.l.b16 %v69
  %v78 = vunpack.c.l.b16 %v70
  %v79 = vpack.c.b16 %v76, %v75
  %v80 = vpack.c.b16 %v78, %v77
  %v84 = vsel %vm20, %v66, 0
  %86 = vmatprep.subr.bf16.mxu0 0
  %87 = vmatpush1.bf16.msra.mxu0 %v79
  %88 = vmatprep.subr.bf16.mxu0 0
  %89 = vmatpush1.bf16.msra.mxu0 %v80
  %90 = vmatprep.subr.bf16.mxu0 0
  %91 = vmatpush1.bf16.msra.mxu0 0
  %92 = vmatprep.subr.bf16.mxu0 0
  %93 = vmatpush1.bf16.msra.mxu0 0
  %94 = vmatprep.subr.bf16.mxu0 0
  %95 = vmatpush1.bf16.msra.mxu0 0
  %96 = vmatprep.subr.bf16.mxu0 0
  %97 = vmatpush1.bf16.msra.mxu0 0
  %98 = vmatprep.subr.bf16.mxu0 0
  %99 = vmatpush1.bf16.msra.mxu0 0
  %100 = vmatprep.subr.bf16.mxu0 0
  %101 = vmatpush1.bf16.msra.mxu0 0
  %102 = vmatprep.subr.bf16.mxu0 0
  %103 = vmatpush1.bf16.msra.mxu0 0
  %104 = vmatprep.subr.bf16.mxu0 0
  %105 = vmatpush1.bf16.msra.mxu0 0
  %106 = vmatprep.subr.bf16.mxu0 0
  %107 = vmatpush1.bf16.msra.mxu0 0
  %108 = vmatprep.subr.bf16.mxu0 0
  %109 = vmatpush1.bf16.msra.mxu0 0
  %110 = vmatprep.subr.bf16.mxu0 0
  %111 = vmatpush1.bf16.msra.mxu0 0
  %112 = vmatprep.subr.bf16.mxu0 0
  %113 = vmatpush1.bf16.msra.mxu0 0
  %114 = vmatprep.subr.bf16.mxu0 0
  %115 = vmatpush1.bf16.msra.mxu0 0
  %116 = vmatprep.subr.bf16.mxu0 0
  %117 = vmatpush1.bf16.msra.mxu0 0
  %118 = vmatprep.mubr.bf16.mxu0 0
  %119 = vmatmul.mubr.bf16.gmra.mrb[0].mxu0 %v84
  %v120 = vpop.f32.mrb[0].mxu0
  %v121 = vadd.f32 0.0, %v120
  %v122 = vpop.f32.mrb[0].mxu0
  %v123 = vpop.f32.mrb[0].mxu0
  %v124 = vadd.f32 0.0, %v123
  %v125 = vpop.f32.mrb[0].mxu0
  %126 = vdwg.mxu0
  %v127 = vpack.c.bf16 %v124, %v121
  %v129 = vunpack.c.l.b16 %v127
  %v130 = vunpack.c.h.b16 %v127
  %v131 = vpack.c.b16 %v129, %v129
  %v132 = vpack.c.b16 %v130, %v130
  %135 = vst [vmem:[%s4] sm:$0xf] %v131
  %136 = vst [vmem:[%s4 + $0x4] sm:$0xf] %v132
  // Predicated region
  $region18: #{relative_moe_layer_forward.5} parent=0 // pred_check
    _
  $region19: #{relative_moe_layer_forward.5} parent=0 // pred_check_branch
    %138 = sbr.rel (0) target = $region21
  $region20: #{relative_moe_layer_forward.5} parent=0 // pred_region
    _
  $region21: #{relative_moe_layer_forward.5} parent=0 // pred_fallthru
    _
  // Predicated region
  $region22: #{relative_moe_layer_forward.5} parent=0 // pred_check
    _
  $region23: #{relative_moe_layer_forward.5} parent=0 // pred_check_branch
    %140 = sbr.rel (0) target = $region25
  $region24: #{relative_moe_layer_forward.5} parent=0 // pred_region
    _
  $region25: #{relative_moe_layer_forward.5} parent=0 // pred_fallthru
    _

// kernel: relative_moe_layer_forward.9
$region0: #{relative_moe_layer_forward.9}
  #allocation0 [shape = 'u32[]', space=smem, size = 0x4, offset = 0x4, fixed_abs, tag = 'smem constant byte address 0x4 - core index']
  #allocation1 [shape = 'u32[144,128]{1,0:T(1,128)}', space=vmem, size = 0x12000, scoped, tag = 'internal scratch']
  #allocation2 [shape = 'f32[8,32]{1,0:T(8,128)}', space=vmem, size = 0x1000, scoped, tag = 'scratch operand']
  #allocation3 [shape = 'f32[8,4]{1,0:T(8,128)}', space=vmem, size = 0x1000, scoped, tag = 'scratch operand']
  %s0 = inlined_call_operand.vmem [shape: f32[16,32], index: 0, kind: input, shape index: {}]
  %s1 = inlined_call_operand.vmem [shape: f32[1,32], index: 1, kind: input, shape index: {}]
  %s2 = inlined_call_operand.vmem [shape: f32[1,32], index: 2, kind: input, shape index: {}]
  %s3 = inlined_call_operand.vmem [shape: f32[32,4], index: 3, kind: input, shape index: {}]
  %s4 = inlined_call_operand.vmem [shape: bf16[4,32,64], index: 4, kind: input, shape index: {}]
  %s5 = inlined_call_operand.vmem [shape: bf16[4,64,32], index: 5, kind: input, shape index: {}]
  %s6 = inlined_call_operand.hbm [shape: f32[16,32], index: 6, kind: output, shape index: {}]
  %s7 = sld [smem:[#allocation0]]
  $region61: #{relative_moe_layer_forward.9} parent=0
    _
  %s9 = ssub.s32 1, %s7
  %s10 = scalar_select 0, %s9, %s7
  $region1: #{relative_moe_layer_forward.9} parent=0
    #allocation4 [shape = 'u8[8192]{0}', space=vmem, size = 0x2000, scoped, tag = 'output window, operand 0']
    #allocation5 [shape = 's32[2]{0}', space=sflag, size = 0x8, scoped, tag = 'scoped memory for relative_moe_layer_forward.9']
    %11 = vsyncpa [#allocation5], 0
    %s12 = scalar_lea.sflag [#allocation5], 1
    %13 = vsyncpa %s12, 0
    loop: start=0, step=1, limit=10
    $region2: #{relative_moe_layer_forward.9} parent=1 // loop_pre_header
      _
    $region3: #{relative_moe_layer_forward.9} parent=1 // loop_header
      %s15 = sphi 0, %s19
      %p16 = scmp.ge.s32.totalorder %s15, 10
      %s22 = sphi 0, %s34
      %s23 = sphi 0, %s30
      %s24 = sphi 0, %s22
      %s25 = sphi 0, %s23
      %s26 = sphi 0, %s24
      %s27 = sphi 0, %s25
      %s37 = sphi 0, %s39
      %s40 = sphi 0, %s37
      %s41 = sphi 0, %s40
      %s57 = sphi 0, %s41
      %s61 = sphi 0, %s61
      %s63 = sphi 0, %s61
      %s64 = sphi 0, %s63
      %s78 = sphi 0, %s64
      %s82 = sphi 0, %s82
      %s84 = sphi 0, %s82
      %s85 = sphi 0, %s84
      %s99 = sphi 0, %s85
      %s103 = sphi 0, %s103
      %s105 = sphi 0, %s103
      %s106 = sphi 0, %s105
      %s120 = sphi 0, %s106
      %s126 = sphi 0, %s128
      %s129 = sphi 0, %s126
      %s130 = sphi 0, %s129
      %s146 = sphi 0, %s130
      %s152 = sphi 0, %s154
      %s155 = sphi 0, %s152
      %s156 = sphi 0, %s155
      %s172 = sphi 0, %s156
      %s178 = sphi 0, %s180
      %s181 = sphi 0, %s178
      %s182 = sphi 0, %s181
      %s198 = sphi 0, %s182
    $region4: #{relative_moe_layer_forward.9} parent=1 // loop_header_branch
      %18 = sbr.rel (%p16) target = $region8
    $region5: #{relative_moe_layer_forward.9} parent=1 // loop_body
      %s20 = ssub.s32 %s15, 1
      %s21 = ssub.s32 %s15, 2
      %s28 = sadd.s32 1, %s23
      %p29 = scmp.ge.s32.totalorder %s28, 4
      %s30 = scalar_select %p29, 0, %s28
      %s31 = sadd.s32 1, %s22
      %s32 = scalar_select %p29, %s31, %s22
      %p33 = scmp.ge.s32.totalorder %s32, 2
      %s34 = scalar_select %p33, 0, %s32
      %s35 = ssub.s32 %s22, %s34
      %p36 = scmp.eq.s32.totalorder %s35, 0
      %s38 = sadd.s32 %s37, 1
      %s39 = scalar_select %p36, %s37, %s38
      %p42 = pneg %p36
      %p43 = scmp.eq.s32.totalorder %s15, 7
      %p44 = por %p42, %p43
      %p45 = scmp.ne.s32.totalorder %s37, %s40
      %p46 = scmp.eq.s32.totalorder %s15, 0
      %p47 = por %p45, %p46
      %p48 = scmp.ne.s32.totalorder %s37, %s40
      %p49 = scmp.eq.s32.totalorder %s20, 7
      %p50 = por %p48, %p49
      %p51 = scmp.ne.s32.totalorder %s40, %s41
      %p52 = scmp.eq.s32.totalorder %s20, 0
      %p53 = por %p51, %p52
      %p54 = scmp.ne.s32.totalorder %s40, %s41
      %p55 = scmp.eq.s32.totalorder %s21, 7
      %p56 = por %p54, %p55
      %p58 = scmp.ne.s32.totalorder %s41, %s57
      %p59 = scmp.eq.s32.totalorder %s21, 0
      %p60 = por %p58, %p59
      %s62 = sadd.s32 %s61, 1
      %p65 = scmp.eq.s32.totalorder %s15, 7
      %p66 = scmp.ne.s32.totalorder %s61, %s63
      %p67 = scmp.eq.s32.totalorder %s15, 0
      %p68 = por %p66, %p67
      %p69 = scmp.ne.s32.totalorder %s61, %s63
      %p70 = scmp.eq.s32.totalorder %s20, 7
      %p71 = por %p69, %p70
      %p72 = scmp.ne.s32.totalorder %s63, %s64
      %p73 = scmp.eq.s32.totalorder %s20, 0
      %p74 = por %p72, %p73
      %p75 = scmp.ne.s32.totalorder %s63, %s64
      %p76 = scmp.eq.s32.totalorder %s21, 7
      %p77 = por %p75, %p76
      %p79 = scmp.ne.s32.totalorder %s64, %s78
      %p80 = scmp.eq.s32.totalorder %s21, 0
      %p81 = por %p79, %p80
      %s83 = sadd.s32 %s82, 1
      %p86 = scmp.eq.s32.totalorder %s15, 7
      %p87 = scmp.ne.s32.totalorder %s82, %s84
      %p88 = scmp.eq.s32.totalorder %s15, 0
      %p89 = por %p87, %p88
      %p90 = scmp.ne.s32.totalorder %s82, %s84
      %p91 = scmp.eq.s32.totalorder %s20, 7
      %p92 = por %p90, %p91
      %p93 = scmp.ne.s32.totalorder %s84, %s85
      %p94 = scmp.eq.s32.totalorder %s20, 0
      %p95 = por %p93, %p94
      %p96 = scmp.ne.s32.totalorder %s84, %s85
      %p97 = scmp.eq.s32.totalorder %s21, 7
      %p98 = por %p96, %p97
      %p100 = scmp.ne.s32.totalorder %s85, %s99
      %p101 = scmp.eq.s32.totalorder %s21, 0
      %p102 = por %p100, %p101
      %s104 = sadd.s32 %s103, 1
      %p107 = scmp.eq.s32.totalorder %s15, 7
      %p108 = scmp.ne.s32.totalorder %s103, %s105
      %p109 = scmp.eq.s32.totalorder %s15, 0
      %p110 = por %p108, %p109
      %p111 = scmp.ne.s32.totalorder %s103, %s105
      %p112 = scmp.eq.s32.totalorder %s20, 7
      %p113 = por %p111, %p112
      %p114 = scmp.ne.s32.totalorder %s105, %s106
      %p115 = scmp.eq.s32.totalorder %s20, 0
      %p116 = por %p114, %p115
      %p117 = scmp.ne.s32.totalorder %s105, %s106
      %p118 = scmp.eq.s32.totalorder %s21, 7
      %p119 = por %p117, %p118
      %p121 = scmp.ne.s32.totalorder %s106, %s120
      %p122 = scmp.eq.s32.totalorder %s21, 0
      %p123 = por %p121, %p122
      %s124 = ssub.s32 %s23, %s30
      %p125 = scmp.eq.s32.totalorder %s124, 0
      %s127 = sadd.s32 %s126, 1
      %s128 = scalar_select %p125, %s126, %s127
      %p131 = pneg %p125
      %p132 = scmp.eq.s32.totalorder %s15, 7
      %p133 = por %p131, %p132
      %p134 = scmp.ne.s32.totalorder %s126, %s129
      %p135 = scmp.eq.s32.totalorder %s15, 0
      %p136 = por %p134, %p135
      %p137 = scmp.ne.s32.totalorder %s126, %s129
      %p138 = scmp.eq.s32.totalorder %s20, 7
      %p139 = por %p137, %p138
      %p140 = scmp.ne.s32.totalorder %s129, %s130
      %p141 = scmp.eq.s32.totalorder %s20, 0
      %p142 = por %p140, %p141
      %p143 = scmp.ne.s32.totalorder %s129, %s130
      %p144 = scmp.eq.s32.totalorder %s21, 7
      %p145 = por %p143, %p144
      %p147 = scmp.ne.s32.totalorder %s130, %s146
      %p148 = scmp.eq.s32.totalorder %s21, 0
      %p149 = por %p147, %p148
      %s150 = ssub.s32 %s23, %s30
      %p151 = scmp.eq.s32.totalorder %s150, 0
      %s153 = sadd.s32 %s152, 1
      %s154 = scalar_select %p151, %s152, %s153
      %p157 = pneg %p151
      %p158 = scmp.eq.s32.totalorder %s15, 7
      %p159 = por %p157, %p158
      %p160 = scmp.ne.s32.totalorder %s152, %s155
      %p161 = scmp.eq.s32.totalorder %s15, 0
      %p162 = por %p160, %p161
      %p163 = scmp.ne.s32.totalorder %s152, %s155
      %p164 = scmp.eq.s32.totalorder %s20, 7
      %p165 = por %p163, %p164
      %p166 = scmp.ne.s32.totalorder %s155, %s156
      %p167 = scmp.eq.s32.totalorder %s20, 0
      %p168 = por %p166, %p167
      %p169 = scmp.ne.s32.totalorder %s155, %s156
      %p170 = scmp.eq.s32.totalorder %s21, 7
      %p171 = por %p169, %p170
      %p173 = scmp.ne.s32.totalorder %s156, %s172
      %p174 = scmp.eq.s32.totalorder %s21, 0
      %p175 = por %p173, %p174
      %s176 = ssub.s32 %s22, %s34
      %p177 = scmp.eq.s32.totalorder %s176, 0
      %s179 = sadd.s32 %s178, 1
      %s180 = scalar_select %p177, %s178, %s179
      %p183 = pneg %p177
      %p184 = scmp.eq.s32.totalorder %s15, 7
      %p185 = por %p183, %p184
      %p186 = scmp.ne.s32.totalorder %s178, %s181
      %p187 = scmp.eq.s32.totalorder %s15, 0
      %p188 = por %p186, %p187
      %p189 = scmp.ne.s32.totalorder %s178, %s181
      %p190 = scmp.eq.s32.totalorder %s20, 7
      %p191 = por %p189, %p190
      %p192 = scmp.ne.s32.totalorder %s181, %s182
      %p193 = scmp.eq.s32.totalorder %s20, 0
      %p194 = por %p192, %p193
      %p195 = scmp.ne.s32.totalorder %s181, %s182
      %p196 = scmp.eq.s32.totalorder %s21, 7
      %p197 = por %p195, %p196
      %p199 = scmp.ne.s32.totalorder %s182, %s198
      %p200 = scmp.eq.s32.totalorder %s21, 0
      %p201 = por %p199, %p200
      %p202 = scmp.le.s32.totalorder 1, %s15
      %p203 = scmp.lt.s32.totalorder %s15, 9
      %p204 = pnand %p202, %p203
      %p205 = pneg %p204
      // Predicated region
      $region9: #{relative_moe_layer_forward.9} parent=5 // pred_check
        _
      $region10: #{relative_moe_layer_forward.9} parent=5 // pred_check_branch
        %207 = sbr.rel (%p204) target = $region12
      $region11: #{relative_moe_layer_forward.9} parent=5 // pred_region
        %s208 = ssub.s32 %s15, 1
        // Predicated region
        $region13: #{relative_moe_layer_forward.9} parent=11 // pred_check
          %p209 = pneg %p74
        $region14: #{relative_moe_layer_forward.9} parent=11 // pred_check_branch
          %211 = sbr.rel (%p209) target = $region16
        $region15: #{relative_moe_layer_forward.9} parent=11 // pred_region
          _
        $region16: #{relative_moe_layer_forward.9} parent=11 // pred_fallthru
          _
        // Predicated region
        $region17: #{relative_moe_layer_forward.9} parent=11 // pred_check
          %p212 = pneg %p95
        $region18: #{relative_moe_layer_forward.9} parent=11 // pred_check_branch
          %214 = sbr.rel (%p212) target = $region20
        $region19: #{relative_moe_layer_forward.9} parent=11 // pred_region
          _
        $region20: #{relative_moe_layer_forward.9} parent=11 // pred_fallthru
          _
        // Predicated region
        $region21: #{relative_moe_layer_forward.9} parent=11 // pred_check
          %p215 = pneg %p116
        $region22: #{relative_moe_layer_forward.9} parent=11 // pred_check_branch
          %217 = sbr.rel (%p215) target = $region24
        $region23: #{relative_moe_layer_forward.9} parent=11 // pred_region
          _
        $region24: #{relative_moe_layer_forward.9} parent=11 // pred_fallthru
          _
      $region12: #{relative_moe_layer_forward.9} parent=5 // pred_fallthru
        _
      %p218 = scmp.lt.s32.totalorder %s15, 8
      // Predicated region
      $region25: #{relative_moe_layer_forward.9} parent=5 // pred_check
        %p219 = pneg %p218
      $region26: #{relative_moe_layer_forward.9} parent=5 // pred_check_branch
        %221 = sbr.rel (%p219) target = $region28
      $region27: #{relative_moe_layer_forward.9} parent=5 // pred_region
        // Predicated region
        $region29: #{relative_moe_layer_forward.9} parent=27 // pred_check
          %p222 = pneg %p47
        $region30: #{relative_moe_layer_forward.9} parent=27 // pred_check_branch
          %224 = sbr.rel (%p222) target = $region32
        $region31: #{relative_moe_layer_forward.9} parent=27 // pred_region
          %p225 = scmp.lt.s32.totalorder %s22, 1
          %s226 = scalar_select %p225, %s22, 1
          %s227 = smul.addr %s226, 8
          %s228 = scalar_lea.vmem %s0, %s227
        $region32: #{relative_moe_layer_forward.9} parent=27 // pred_fallthru
          _
        // Predicated region
        $region33: #{relative_moe_layer_forward.9} parent=27 // pred_check
          %p229 = pneg %p136
        $region34: #{relative_moe_layer_forward.9} parent=27 // pred_check_branch
          %231 = sbr.rel (%p229) target = $region36
        $region35: #{relative_moe_layer_forward.9} parent=27 // pred_region
          %p232 = scmp.lt.s32.totalorder %s23, 3
          %s233 = scalar_select %p232, %s23, 3
          %s234 = smul.addr %s233, 4
          %s235 = smul.addr %s234, 4
          %s236 = scalar_lea.vmem %s4, %s235
        $region36: #{relative_moe_layer_forward.9} parent=27 // pred_fallthru
          _
        // Predicated region
        $region37: #{relative_moe_layer_forward.9} parent=27 // pred_check
          %p237 = pneg %p162
        $region38: #{relative_moe_layer_forward.9} parent=27 // pred_check_branch
          %239 = sbr.rel (%p237) target = $region40
        $region39: #{relative_moe_layer_forward.9} parent=27 // pred_region
          %p240 = scmp.lt.s32.totalorder %s23, 3
          %s241 = scalar_select %p240, %s23, 3
          %s242 = smul.addr %s241, 8
          %s243 = smul.addr %s242, 4
          %s244 = scalar_lea.vmem %s5, %s243
        $region40: #{relative_moe_layer_forward.9} parent=27 // pred_fallthru
          _
      $region28: #{relative_moe_layer_forward.9} parent=5 // pred_fallthru
        _
      %p245 = scmp.le.s32.totalorder 1, %s15
      %p246 = scmp.lt.s32.totalorder %s15, 9
      %p247 = pnand %p245, %p246
      %p248 = pneg %p247
      // Predicated region
      $region41: #{relative_moe_layer_forward.9} parent=5 // pred_check
        _
      $region42: #{relative_moe_layer_forward.9} parent=5 // pred_check_branch
        %250 = sbr.rel (%p247) target = $region44
      $region43: #{relative_moe_layer_forward.9} parent=5 // pred_region
        %s251 = ssub.s32 %s15, 1
        %p252 = scmp.lt.s32.totalorder %s24, 1
        %s253 = scalar_select %p252, %s24, 1
        %s254 = smul.addr %s253, 8
        %s255 = scalar_lea.vmem %s0, %s254
        %p256 = pneg %p53
        %p257 = pneg %p50
        %p258 = pneg %p74
        %p259 = pneg %p71
        %p260 = pneg %p95
        %p261 = pneg %p92
        %p262 = pneg %p116
        %p263 = pneg %p113
        %p264 = scmp.lt.s32.totalorder %s25, 3
        %s265 = scalar_select %p264, %s25, 3
        %s266 = smul.addr %s265, 4
        %s267 = smul.addr %s266, 4
        %s268 = scalar_lea.vmem %s4, %s267
        %p269 = pneg %p142
        %p270 = pneg %p139
        %p271 = scmp.lt.s32.totalorder %s25, 3
        %s272 = scalar_select %p271, %s25, 3
        %s273 = smul.addr %s272, 8
        %s274 = smul.addr %s273, 4
        %s275 = scalar_lea.vmem %s5, %s274
        %p276 = pneg %p168
        %p277 = pneg %p165
        %p278 = pneg %p194
        %p279 = pneg %p191
        %s280 = sand.u32 %s181, 1
        %s281 = scalar_lea.sflag [#allocation5], %s280
        %s282 = sand.u32 %s181, 1
        %s283 = smul.addr %s282, 8
        %s284 = scalar_lea.vmem [#allocation4], %s283
        %p285 = scmp.lt.s32.totalorder %s24, 1
        %s286 = scalar_select %p285, %s24, 1
        %s287 = smul.addr %s286, 8
        %s288 = scalar_lea.vmem %s0, %s287
        %p289 = scmp.lt.s32.totalorder %s25, 3
        %s290 = scalar_select %p289, %s25, 3
        %s291 = smul.addr %s290, 4
        %s292 = smul.addr %s291, 4
        %s293 = scalar_lea.vmem %s4, %s292
        %p294 = scmp.lt.s32.totalorder %s25, 3
        %s295 = scalar_select %p294, %s25, 3
        %s296 = smul.addr %s295, 8
        %s297 = smul.addr %s296, 4
        %s298 = scalar_lea.vmem %s5, %s297
        %p300 = scmp.eq.s32.totalorder %s25, 0
        // Predicated region
        $region45: #{relative_moe_layer_forward.9} parent=43 // pred_check
          %p301 = pneg %p300
        $region46: #{relative_moe_layer_forward.9} parent=43 // pred_check_branch
          %303 = sbr.rel (%p301) target = $region48
        $region47: #{relative_moe_layer_forward.9} parent=43 // pred_region
          %v304 = vld [vmem:[%s288] sm:$0xff]
          %vm305 = vcmask 261120
          %v306 = vsel %vm305, %v304, 0.0
          %307 = vadd.xlane.f32.xlu0 %v306
          %v308 = vpop.xlane.xlu0 %307
          %v309 = vrcp.pop 32.0
          %v310 = vmul.f32 %v308, %v309
          %v311 = vsub.f32 %v304, %v310
          %v312 = vmul.f32 %v311, %v311
          %v313 = vsel %vm305, %v312, 0.0
          %314 = vadd.xlane.f32.xlu0 %v313
          %v315 = vpop.xlane.xlu0 %314
          %v316 = vmul.f32 %v315, %v309
          %v317 = vadd.f32 %v316, 1e-05
          %v318 = vrsqrt.pop %v317
          %v319 = vmul.f32 %v311, %v318
          %v320 = vld [vmem:[%s1] sm:$0x1]
          %v322 = vlaneseq
          %v323 = vshrl.u32 %v322, 7
          %v324 = vsub.s32 0, %v323
          %v325 = vrot.slane %v320, %v324
          %v327 = vmul.f32 %v319, %v325
          %v328 = vld [vmem:[%s2] sm:$0x1]
          %v330 = vlaneseq
          %v331 = vshrl.u32 %v330, 7
          %v332 = vsub.s32 0, %v331
          %v333 = vrot.slane %v328, %v332
          %v335 = vadd.f32 %v327, %v333
          %336 = vst.msk [vmem:[#allocation2] sm:$0xff] %vm305, %v335
          %v337 = vld [vmem:[%s3] sm:$0xff]
          %v338 = vld [vmem:[%s3 + $0x8] sm:$0xff]
          %v339 = vld [vmem:[%s3 + $0x10] sm:$0xff]
          %v340 = vld [vmem:[%s3 + $0x18] sm:$0xff]
          %v342 = vsel %vm305, %v335, 0
          %344 = vmatprep.subr.mxu0 0.0
          %345 = vmatpush1.msra.mxu0 %v337
          %346 = vmatprep.subr.mxu0 0.0
          %347 = vmatpush1.msra.mxu0 %v338
          %348 = vmatprep.subr.mxu0 0.0
          %349 = vmatpush1.msra.mxu0 %v339
          %350 = vmatprep.subr.mxu0 0.0
          %351 = vmatpush1.msra.mxu0 %v340
          %352 = vmatprep.subr.mxu0 0.0
          %353 = vmatpush1.msra.mxu0 0.0
          %354 = vmatprep.subr.mxu0 0.0
          %355 = vmatpush1.msra.mxu0 0.0
          %356 = vmatprep.subr.mxu0 0.0
          %357 = vmatpush1.msra.mxu0 0.0
          %358 = vmatprep.subr.mxu0 0.0
          %359 = vmatpush1.msra.mxu0 0.0
          %360 = vmatprep.subr.mxu0 0.0
          %361 = vmatpush1.msra.mxu0 0.0
          %362 = vmatprep.subr.mxu0 0.0
          %363 = vmatpush1.msra.mxu0 0.0
          %364 = vmatprep.subr.mxu0 0.0
          %365 = vmatpush1.msra.mxu0 0.0
          %366 = vmatprep.subr.mxu0 0.0
          %367 = vmatpush1.msra.mxu0 0.0
          %368 = vmatprep.subr.mxu0 0.0
          %369 = vmatpush1.msra.mxu0 0.0
          %370 = vmatprep.subr.mxu0 0.0
          %371 = vmatpush1.msra.mxu0 0.0
          %372 = vmatprep.subr.mxu0 0.0
          %373 = vmatpush1.msra.mxu0 0.0
          %374 = vmatprep.subr.mxu0 0.0
          %375 = vmatpush1.msra.mxu0 0.0
          %376 = vmatprep.subr.mxu0 0.0
          %377 = vmatpush1.msra.mxu0 0.0
          %378 = vmatprep.subr.mxu0 0.0
          %379 = vmatpush1.msra.mxu0 0.0
          %380 = vmatprep.subr.mxu0 0.0
          %381 = vmatpush1.msra.mxu0 0.0
          %382 = vmatprep.subr.mxu0 0.0
          %383 = vmatpush1.msra.mxu0 0.0
          %384 = vmatprep.subr.mxu0 0.0
          %385 = vmatpush1.msra.mxu0 0.0
          %386 = vmatprep.subr.mxu0 0.0
          %387 = vmatpush1.msra.mxu0 0.0
          %388 = vmatprep.subr.mxu0 0.0
          %389 = vmatpush1.msra.mxu0 0.0
          %390 = vmatprep.subr.mxu0 0.0
          %391 = vmatpush1.msra.mxu0 0.0
          %392 = vmatprep.subr.mxu0 0.0
          %393 = vmatpush1.msra.mxu0 0.0
          %394 = vmatprep.subr.mxu0 0.0
          %395 = vmatpush1.msra.mxu0 0.0
          %396 = vmatprep.subr.mxu0 0.0
          %397 = vmatpush1.msra.mxu0 0.0
          %398 = vmatprep.subr.mxu0 0.0
          %399 = vmatpush1.msra.mxu0 0.0
          %400 = vmatprep.subr.mxu0 0.0
          %401 = vmatpush1.msra.mxu0 0.0
          %402 = vmatprep.subr.mxu0 0.0
          %403 = vmatpush1.msra.mxu0 0.0
          %404 = vmatprep.subr.mxu0 0.0
          %405 = vmatpush1.msra.mxu0 0.0
          %406 = vmatprep.subr.mxu0 0.0
          %407 = vmatpush1.msra.mxu0 0.0
          %408 = vmatprep.mubr.f32.mxu0 0.0
          %409 = vmatmul.mubr.f32.gmra.mrb[0].mxu0 %v342
          %v410 = vpop.f32.mrb[0].mxu0
          %v411 = vadd.f32 0.0, %v410
          %v412 = vpop.f32.mrb[0].mxu0
          %413 = vdwg.mxu0
          %v414 = vxor.u32 %v411, 2147483648
          %v415 = vmul.f32 %v414, 1.442695
          %v416 = vpow.pop %v415
          %v417 = vadd.f32 %v416, 1.0
          %v418 = vrcp.pop %v417
          %v419 = vmul.f32 1.0, %v418
          %vm420 = vcmask 31744
          %421 = vst.msk [vmem:[#allocation3] sm:$0xff] %vm420, %v419
          %422 = vst.msk [vmem:[%s284] sm:$0xff] %vm305, %v304
        $region48: #{relative_moe_layer_forward.9} parent=43 // pred_fallthru
          _
        %v423 = vld [vmem:[#allocation2] sm:$0xff]
        %v424 = vld [vmem:[#allocation3] sm:$0xff]
        %v425 = vlaneseq
        %v426 = vand.u32 %v425, 127
        %v427 = vstv %s25
        %vm428 = vcmp.eq.s32.totalorder %v426, %v427
        %v429 = vsel %vm428, %v424, -inf
        %vm430 = vcmask 31744
        %v431 = vsel %vm430, %v429, -inf
        %432 = vmax.xlane.f32.xlu0 %v431
        %v433 = vpop.xlane.xlu0 %432
        %vm434 = vcmp.gt.f32.partialorder %v424, %v433
        %vm435 = vcmp.eq.f32.partialorder %v424, %v433
        %vm436 = vcmp.lt.s32.totalorder %v426, %v427
        %vm437 = vmand %vm435, %vm436
        %vm438 = vmor %vm434, %vm437
        %v439 = vsel %vm438, 1, 0
        %v440 = vcvt.s32.f32 %v439
        %v441 = vsel %vm430, %v440, 0.0
        %442 = vadd.xlane.f32.xlu0 %v441
        %v443 = vpop.xlane.xlu0 %442
        %vm444 = vcmp.lt.f32.partialorder %v443, 2.0
        %v445 = vsel %vm444, %v433, 0.0
        %v446 = vpack.c.bf16 %v423, %v423
        %v447 = vld [vmem:[%s293] sm:$0xf]
        %v448 = vld [vmem:[%s293 + $0x4] sm:$0xf]
        %v449 = vld [vmem:[%s293 + $0x8] sm:$0xf]
        %v450 = vld [vmem:[%s293 + $0xc] sm:$0xf]
        %v455 = vunpack.c.l.b16 %v447
        %v456 = vunpack.c.l.b16 %v448
        %v457 = vunpack.c.l.b16 %v449
        %v458 = vunpack.c.l.b16 %v450
        %v459 = vpack.c.b16 %v456, %v455
        %v460 = vpack.c.b16 %v458, %v457
        %vm463 = vcmask 261120
        %v465 = vsel %vm463, %v446, 0
        %467 = vmatprep.subr.bf16.mxu0 0
        %468 = vmatpush1.bf16.msra.mxu0 %v459
        %469 = vmatprep.subr.bf16.mxu0 0
        %470 = vmatpush1.bf16.msra.mxu0 %v460
        %471 = vmatprep.subr.bf16.mxu0 0
        %472 = vmatpush1.bf16.msra.mxu0 0
        %473 = vmatprep.subr.bf16.mxu0 0
        %474 = vmatpush1.bf16.msra.mxu0 0
        %475 = vmatprep.subr.bf16.mxu0 0
        %476 = vmatpush1.bf16.msra.mxu0 0
        %477 = vmatprep.subr.bf16.mxu0 0
        %478 = vmatpush1.bf16.msra.mxu0 0
        %479 = vmatprep.subr.bf16.mxu0 0
        %480 = vmatpush1.bf16.msra.mxu0 0
        %481 = vmatprep.subr.bf16.mxu0 0
        %482 = vmatpush1.bf16.msra.mxu0 0
        %483 = vmatprep.subr.bf16.mxu0 0
        %484 = vmatpush1.bf16.msra.mxu0 0
        %485 = vmatprep.subr.bf16.mxu0 0
        %486 = vmatpush1.bf16.msra.mxu0 0
        %487 = vmatprep.subr.bf16.mxu0 0
        %488 = vmatpush1.bf16.msra.mxu0 0
        %489 = vmatprep.subr.bf16.mxu0 0
        %490 = vmatpush1.bf16.msra.mxu0 0
        %491 = vmatprep.subr.bf16.mxu0 0
        %492 = vmatpush1.bf16.msra.mxu0 0
        %493 = vmatprep.subr.bf16.mxu0 0
        %494 = vmatpush1.bf16.msra.mxu0 0
        %495 = vmatprep.subr.bf16.mxu0 0
        %496 = vmatpush1.bf16.msra.mxu0 0
        %497 = vmatprep.subr.bf16.mxu0 0
        %498 = vmatpush1.bf16.msra.mxu0 0
        %499 = vmatprep.mubr.bf16.mxu0 0
        %500 = vmatmul.mubr.bf16.gmra.mrb[0].mxu0 %v465
        %v501 = vpop.f32.mrb[0].mxu0
        %v502 = vadd.f32 0.0, %v501
        %v503 = vpop.f32.mrb[0].mxu0
        %v504 = vpop.f32.mrb[0].mxu0
        %v505 = vpop.f32.mrb[0].mxu0
        %506 = vdwg.mxu0
        %v507 = vmax.f32 %v502, 0.0
        %v508 = vld [vmem:[%s284] sm:$0xff]
        %v509 = vpack.c.bf16 %v507, %v507
        %v510 = vld [vmem:[%s298] sm:$0xf]
        %v511 = vld [vmem:[%s298 + $0x4] sm:$0xf]
        %v512 = vld [vmem:[%s298 + $0x8] sm:$0xf]
        %v513 = vld [vmem:[%s298 + $0xc] sm:$0xf]
        %v514 = vld [vmem:[%s298 + $0x10] sm:$0xf]
        %v515 = vld [vmem:[%s298 + $0x14] sm:$0xf]
        %v516 = vld [vmem:[%s298 + $0x18] sm:$0xf]
        %v517 = vld [vmem:[%s298 + $0x1c] sm:$0xf]
        %v526 = vunpack.c.l.b16 %v510
        %v527 = vunpack.c.l.b16 %v511
        %v528 = vunpack.c.l.b16 %v512
        %v529 = vunpack.c.l.b16 %v513
        %v530 = vunpack.c.l.b16 %v514
        %v531 = vunpack.c.l.b16 %v515
        %v532 = vunpack.c.l.b16 %v516
        %v533 = vunpack.c.l.b16 %v517
        %v534 = vpack.c.b16 %v527, %v526
        %v535 = vpack.c.b16 %v529, %v528
        %v536 = vpack.c.b16 %v531, %v530
        %v537 = vpack.c.b16 %v533, %v532
        %vm542 = vcmask 523264
        %v544 = vsel %vm542, %v509, 0
        %546 = vmatprep.subr.bf16.mxu0 0
        %547 = vmatpush1.bf16.msra.mxu0 %v534
        %548 = vmatprep.subr.bf16.mxu0 0
        %549 = vmatpush1.bf16.msra.mxu0 %v535
        %550 = vmatprep.subr.bf16.mxu0 0
        %551 = vmatpush1.bf16.msra.mxu0 %v536
        %552 = vmatprep.subr.bf16.mxu0 0
        %553 = vmatpush1.bf16.msra.mxu0 %v537
        %554 = vmatprep.subr.bf16.mxu0 0
        %555 = vmatpush1.bf16.msra.mxu0 0
        %556 = vmatprep.subr.bf16.mxu0 0
        %557 = vmatpush1.bf16.msra.mxu0 0
        %558 = vmatprep.subr.bf16.mxu0 0
        %559 = vmatpush1.bf16.msra.mxu0 0
        %560 = vmatprep.subr.bf16.mxu0 0
        %561 = vmatpush1.bf16.msra.mxu0 0
        %562 = vmatprep.subr.bf16.mxu0 0
        %563 = vmatpush1.bf16.msra.mxu0 0
        %564 = vmatprep.subr.bf16.mxu0 0
        %565 = vmatpush1.bf16.msra.mxu0 0
        %566 = vmatprep.subr.bf16.mxu0 0
        %567 = vmatpush1.bf16.msra.mxu0 0
        %568 = vmatprep.subr.bf16.mxu0 0
        %569 = vmatpush1.bf16.msra.mxu0 0
        %570 = vmatprep.subr.bf16.mxu0 0
        %571 = vmatpush1.bf16.msra.mxu0 0
        %572 = vmatprep.subr.bf16.mxu0 0
        %573 = vmatpush1.bf16.msra.mxu0 0
        %574 = vmatprep.subr.bf16.mxu0 0
        %575 = vmatpush1.bf16.msra.mxu0 0
        %576 = vmatprep.subr.bf16.mxu0 0
        %577 = vmatpush1.bf16.msra.mxu0 0
        %578 = vmatprep.mubr.bf16.mxu0 0
        %579 = vmatmul.mubr.bf16.gmra.mrb[0].mxu0 %v544
        %v580 = vpop.f32.mrb[0].mxu0
        %v581 = vadd.f32 0.0, %v580
        %v582 = vpop.f32.mrb[0].mxu0
        %v583 = vpop.f32.mrb[0].mxu0
        %v584 = vpop.f32.mrb[0].mxu0
        %585 = vdwg.mxu0
        %v586 = vmul.f32 %v445, %v581
        %v587 = vadd.f32 %v508, %v586
        %588 = vst.msk [vmem:[%s284] sm:$0xff] %vm463, %v587
        %s589 = sand.u32 %s181, 1
        %s590 = scalar_lea.sflag [#allocation5], %s589
        %s591 = sand.u32 %s181, 1
        %s592 = smul.addr %s591, 8
        %s593 = scalar_lea.vmem [#allocation4], %s592
        // Predicated region
        $region49: #{relative_moe_layer_forward.9} parent=43 // pred_check
          %p594 = pneg %p191
        $region50: #{relative_moe_layer_forward.9} parent=43 // pred_check_branch
          %596 = sbr.rel (%p594) target = $region52
        $region51: #{relative_moe_layer_forward.9} parent=43 // pred_region
          %s598 = ssub.s32 128, 128
          %599 = vsyncadd %s590, %s598
          %s600 = smul.addr %s24, 128
          %s601 = scalar_lea.hbm %s6, %s600
          %s603 = sshll.u32 %s593, 4
          %s604 = int_to_ptr.vmem [resolvable:$true] %s603
          %606 = dma.vmem_to_hbm [thread:$0]  %s604, 128, %s601, %s590
        $region52: #{relative_moe_layer_forward.9} parent=43 // pred_fallthru
          _
      $region44: #{relative_moe_layer_forward.9} parent=5 // pred_fallthru
        _
      %p607 = scmp.le.s32.totalorder 2, %s15
      // Predicated region
      $region53: #{relative_moe_layer_forward.9} parent=5 // pred_check
        %p608 = pneg %p607
      $region54: #{relative_moe_layer_forward.9} parent=5 // pred_check_branch
        %610 = sbr.rel (%p608) target = $region56
      $region55: #{relative_moe_layer_forward.9} parent=5 // pred_region
        %s611 = ssub.s32 %s15, 2
        // Predicated region
        $region57: #{relative_moe_layer_forward.9} parent=55 // pred_check
          %p612 = pneg %p197
        $region58: #{relative_moe_layer_forward.9} parent=55 // pred_check_branch
          %614 = sbr.rel (%p612) target = $region60
        $region59: #{relative_moe_layer_forward.9} parent=55 // pred_region
          %s615 = sand.u32 %s182, 1
          %s616 = scalar_lea.sflag [#allocation5], %s615
          %s617 = sand.u32 %s182, 1
          %s618 = smul.addr %s617, 8
          %s619 = scalar_lea.vmem [#allocation4], %s618
          %620 = dma.done %s616, 128
        $region60: #{relative_moe_layer_forward.9} parent=55 // pred_fallthru
          _
      $region56: #{relative_moe_layer_forward.9} parent=5 // pred_fallthru
        _
    $region6: #{relative_moe_layer_forward.9} parent=1 // loop_footer
      %s19 = sadd.s32 1, %s15
    $region7: #{relative_moe_layer_forward.9} parent=1 // loop_footer_branch
      %14 = sbr.rel target = $region3
    $region8: #{relative_moe_layer_forward.9} parent=1 // loop_exit
      _
    %621 = vsyncpa [#allocation5], 1
    %s622 = scalar_lea.sflag [#allocation5], 1
    %623 = vsyncpa %s622, 1

// kernel: relative_moe_layer_forward.7
$region0: #{relative_moe_layer_forward.7}
  #allocation0 [shape = 'u32[]', space=smem, size = 0x4, offset = 0x4, fixed_abs, tag = 'smem constant byte address 0x4 - core index']
  #allocation1 [shape = 'u32[144,128]{1,0:T(1,128)}', space=vmem, size = 0x12000, scoped, tag = 'internal scratch']
  %s0 = inlined_call_operand.vmem [shape: bf16[2,8,128], index: 0, kind: input, shape index: {}]
  %s1 = inlined_call_operand.vmem [shape: bf16[15,32], index: 1, kind: input, shape index: {}]
  %s2 = inlined_call_operand.vmem [shape: f32[8,15,8], index: 2, kind: input, shape index: {}]
  %s3 = inlined_call_operand.vmem [shape: bf16[2,8,32], index: 3, kind: output, shape index: {}]
  %s4 = sld [smem:[#allocation0]]
  $region45: #{relative_moe_layer_forward.7} parent=0
    _
  %s6 = ssub.s32 1, %s4
  %s7 = scalar_select 0, %s6, %s4
  loop: start=0, step=1, limit=4
  $region2: #{relative_moe_layer_forward.7} parent=0 // loop_pre_header
    _
  $region3: #{relative_moe_layer_forward.7} parent=0 // loop_header
    %s9 = sphi 0, %s13
    %p10 = scmp.ge.s32.totalorder %s9, 4
    %s19 = sphi 0, %s21
    %s22 = sphi 0, %s19
    %s23 = sphi 0, %s22
    %s39 = sphi 0, %s23
    %s43 = sphi 0, %s43
    %s45 = sphi 0, %s43
    %s46 = sphi 0, %s45
    %s60 = sphi 0, %s46
    %s64 = sphi 0, %s64
    %s66 = sphi 0, %s64
    %s67 = sphi 0, %s66
    %s81 = sphi 0, %s67
    %s87 = sphi 0, %s89
    %s90 = sphi 0, %s87
    %s91 = sphi 0, %s90
    %s107 = sphi 0, %s91
  $region4: #{relative_moe_layer_forward.7} parent=0 // loop_header_branch
    %12 = sbr.rel (%p10) target = $region8
  $region5: #{relative_moe_layer_forward.7} parent=0 // loop_body
    %s14 = ssub.s32 %s9, 1
    %s15 = ssub.s32 %s9, 2
    %s16 = sadd.s32 %s9, 1
    %s17 = ssub.s32 %s9, %s16
    %p18 = scmp.eq.s32.totalorder %s17, 0
    %s20 = sadd.s32 %s19, 1
    %s21 = scalar_select %p18, %s19, %s20
    %p24 = pneg %p18
    %p25 = scmp.eq.s32.totalorder %s9, 1
    %p26 = por %p24, %p25
    %p27 = scmp.ne.s32.totalorder %s19, %s22
    %p28 = scmp.eq.s32.totalorder %s9, 0
    %p29 = por %p27, %p28
    %p30 = scmp.ne.s32.totalorder %s19, %s22
    %p31 = scmp.eq.s32.totalorder %s14, 1
    %p32 = por %p30, %p31
    %p33 = scmp.ne.s32.totalorder %s22, %s23
    %p34 = scmp.eq.s32.totalorder %s14, 0
    %p35 = por %p33, %p34
    %p36 = scmp.ne.s32.totalorder %s22, %s23
    %p37 = scmp.eq.s32.totalorder %s15, 1
    %p38 = por %p36, %p37
    %p40 = scmp.ne.s32.totalorder %s23, %s39
    %p41 = scmp.eq.s32.totalorder %s15, 0
    %p42 = por %p40, %p41
    %s44 = sadd.s32 %s43, 1
    %p47 = scmp.eq.s32.totalorder %s9, 1
    %p48 = scmp.ne.s32.totalorder %s43, %s45
    %p49 = scmp.eq.s32.totalorder %s9, 0
    %p50 = por %p48, %p49
    %p51 = scmp.ne.s32.totalorder %s43, %s45
    %p52 = scmp.eq.s32.totalorder %s14, 1
    %p53 = por %p51, %p52
    %p54 = scmp.ne.s32.totalorder %s45, %s46
    %p55 = scmp.eq.s32.totalorder %s14, 0
    %p56 = por %p54, %p55
    %p57 = scmp.ne.s32.totalorder %s45, %s46
    %p58 = scmp.eq.s32.totalorder %s15, 1
    %p59 = por %p57, %p58
    %p61 = scmp.ne.s32.totalorder %s46, %s60
    %p62 = scmp.eq.s32.totalorder %s15, 0
    %p63 = por %p61, %p62
    %s65 = sadd.s32 %s64, 1
    %p68 = scmp.eq.s32.totalorder %s9, 1
    %p69 = scmp.ne.s32.totalorder %s64, %s66
    %p70 = scmp.eq.s32.totalorder %s9, 0
    %p71 = por %p69, %p70
    %p72 = scmp.ne.s32.totalorder %s64, %s66
    %p73 = scmp.eq.s32.totalorder %s14, 1
    %p74 = por %p72, %p73
    %p75 = scmp.ne.s32.totalorder %s66, %s67
    %p76 = scmp.eq.s32.totalorder %s14, 0
    %p77 = por %p75, %p76
    %p78 = scmp.ne.s32.totalorder %s66, %s67
    %p79 = scmp.eq.s32.totalorder %s15, 1
    %p80 = por %p78, %p79
    %p82 = scmp.ne.s32.totalorder %s67, %s81
    %p83 = scmp.eq.s32.totalorder %s15, 0
    %p84 = por %p82, %p83
    %s85 = ssub.s32 %s9, %s16
    %p86 = scmp.eq.s32.totalorder %s85, 0
    %s88 = sadd.s32 %s87, 1
    %s89 = scalar_select %p86, %s87, %s88
    %p92 = pneg %p86
    %p93 = scmp.eq.s32.totalorder %s9, 1
    %p94 = por %p92, %p93
    %p95 = scmp.ne.s32.totalorder %s87, %s90
    %p96 = scmp.eq.s32.totalorder %s9, 0
    %p97 = por %p95, %p96
    %p98 = scmp.ne.s32.totalorder %s87, %s90
    %p99 = scmp.eq.s32.totalorder %s14, 1
    %p100 = por %p98, %p99
    %p101 = scmp.ne.s32.totalorder %s90, %s91
    %p102 = scmp.eq.s32.totalorder %s14, 0
    %p103 = por %p101, %p102
    %p104 = scmp.ne.s32.totalorder %s90, %s91
    %p105 = scmp.eq.s32.totalorder %s15, 1
    %p106 = por %p104, %p105
    %p108 = scmp.ne.s32.totalorder %s91, %s107
    %p109 = scmp.eq.s32.totalorder %s15, 0
    %p110 = por %p108, %p109
    %p111 = scmp.le.s32.totalorder 1, %s9
    %p112 = scmp.lt.s32.totalorder %s9, 3
    %p113 = pnand %p111, %p112
    %p114 = pneg %p113
    // Predicated region
    $region9: #{relative_moe_layer_forward.7} parent=5 // pred_check
      _
    $region10: #{relative_moe_layer_forward.7} parent=5 // pred_check_branch
      %116 = sbr.rel (%p113) target = $region12
    $region11: #{relative_moe_layer_forward.7} parent=5 // pred_region
      %s117 = ssub.s32 %s9, 1
      // Predicated region
      $region13: #{relative_moe_layer_forward.7} parent=11 // pred_check
        %p118 = pneg %p56
      $region14: #{relative_moe_layer_forward.7} parent=11 // pred_check_branch
        %120 = sbr.rel (%p118) target = $region16
      $region15: #{relative_moe_layer_forward.7} parent=11 // pred_region
        _
      $region16: #{relative_moe_layer_forward.7} parent=11 // pred_fallthru
        _
      // Predicated region
      $region17: #{relative_moe_layer_forward.7} parent=11 // pred_check
        %p121 = pneg %p77
      $region18: #{relative_moe_layer_forward.7} parent=11 // pred_check_branch
        %123 = sbr.rel (%p121) target = $region20
      $region19: #{relative_moe_layer_forward.7} parent=11 // pred_region
        _
      $region20: #{relative_moe_layer_forward.7} parent=11 // pred_fallthru
        _
    $region12: #{relative_moe_layer_forward.7} parent=5 // pred_fallthru
      _
    %p124 = scmp.lt.s32.totalorder %s9, 2
    // Predicated region
    $region21: #{relative_moe_layer_forward.7} parent=5 // pred_check
      %p125 = pneg %p124
    $region22: #{relative_moe_layer_forward.7} parent=5 // pred_check_branch
      %127 = sbr.rel (%p125) target = $region24
    $region23: #{relative_moe_layer_forward.7} parent=5 // pred_region
      // Predicated region
      $region25: #{relative_moe_layer_forward.7} parent=23 // pred_check
        %p128 = pneg %p29
      $region26: #{relative_moe_layer_forward.7} parent=23 // pred_check_branch
        %130 = sbr.rel (%p128) target = $region28
      $region27: #{relative_moe_layer_forward.7} parent=23 // pred_region
        %p131 = scmp.lt.s32.totalorder %s9, 1
        %s132 = scalar_select %p131, %s9, 1
        %s133 = smul.addr %s132, 4
        %s134 = scalar_lea.vmem %s0, %s133
      $region28: #{relative_moe_layer_forward.7} parent=23 // pred_fallthru
        _
    $region24: #{relative_moe_layer_forward.7} parent=5 // pred_fallthru
      _
    %p135 = scmp.le.s32.totalorder 1, %s9
    %p136 = scmp.lt.s32.totalorder %s9, 3
    %p137 = pnand %p135, %p136
    %p138 = pneg %p137
    // Predicated region
    $region29: #{relative_moe_layer_forward.7} parent=5 // pred_check
      _
    $region30: #{relative_moe_layer_forward.7} parent=5 // pred_check_branch
      %140 = sbr.rel (%p137) target = $region32
    $region31: #{relative_moe_layer_forward.7} parent=5 // pred_region
      %s141 = ssub.s32 %s9, 1
      %p142 = scmp.lt.s32.totalorder %s14, 1
      %s143 = scalar_select %p142, %s14, 1
      %s144 = smul.addr %s143, 4
      %s145 = scalar_lea.vmem %s0, %s144
      %p146 = pneg %p35
      %p147 = pneg %p32
      %p148 = pneg %p56
      %p149 = pneg %p53
      %p150 = pneg %p77
      %p151 = pneg %p74
      %p152 = pneg %p103
      %p153 = pneg %p100
      %p154 = scmp.lt.s32.totalorder %s14, 1
      %s155 = scalar_select %p154, %s14, 1
      %s156 = smul.addr %s155, 4
      %s157 = scalar_lea.vmem %s3, %s156
      %p158 = scmp.lt.s32.totalorder %s14, 1
      %s159 = scalar_select %p158, %s14, 1
      %s160 = smul.addr %s159, 4
      %s161 = scalar_lea.vmem %s0, %s160
      %p162 = scmp.lt.s32.totalorder %s14, 1
      %s163 = scalar_select %p162, %s14, 1
      %s164 = smul.addr %s163, 4
      %s165 = scalar_lea.vmem %s3, %s164
      %v167 = vld [vmem:[%s161] sm:$0xf]
      %v168 = vld [vmem:[%s1] sm:$0xf]
      %v169 = vld [vmem:[%s1 + $0x4] sm:$0xf]
      %v170 = vld [vmem:[%s2] sm:$0xff]
      %v171 = vld [vmem:[%s2 + $0x8] sm:$0x7f]
      %v172 = vld [vmem:[%s2 + $0x10] sm:$0xff]
      %v173 = vld [vmem:[%s2 + $0x18] sm:$0x7f]
      %v174 = vld [vmem:[%s2 + $0x20] sm:$0xff]
      %v175 = vld [vmem:[%s2 + $0x28] sm:$0x7f]
      %v176 = vld [vmem:[%s2 + $0x30] sm:$0xff]
      %v177 = vld [vmem:[%s2 + $0x38] sm:$0x7f]
      %v178 = vld [vmem:[%s2 + $0x40] sm:$0xff]
      %v179 = vld [vmem:[%s2 + $0x48] sm:$0x7f]
      %v180 = vld [vmem:[%s2 + $0x50] sm:$0xff]
      %v181 = vld [vmem:[%s2 + $0x58] sm:$0x7f]
      %v182 = vld [vmem:[%s2 + $0x60] sm:$0xff]
      %v183 = vld [vmem:[%s2 + $0x68] sm:$0x7f]
      %v184 = vld [vmem:[%s2 + $0x70] sm:$0xff]
      %v185 = vld [vmem:[%s2 + $0x78] sm:$0x7f]
      %v187 = vunpack.c.l.b16 %v167
      %v188 = vpack.c.b16 %v187, %v187
      %189 = vrot.lane.b32.xlu0 %v188, 96
      %v190 = vpop.permute.xlu0 %189
      %v193 = vunpack.c.l.b16 %v168
      %v194 = vunpack.c.l.b16 %v169
      %v195 = vpack.c.b16 %v194, %v193
      %vm196 = vcmask 64512
      %v198 = vsel %vm196, %v190, 0
      %v201 = vsel %vm196, %v195, 0
      %203 = vmatprep.subr.bf16.mxu0 0
      %204 = vmatpush1.bf16.xpose.msra.mxu0 %v201
      %205 = vmatprep.subr.bf16.mxu0 0
      %206 = vmatpush1.bf16.xpose.msra.mxu0 0
      %207 = vmatprep.subr.bf16.mxu0 0
      %208 = vmatpush1.bf16.xpose.msra.mxu0 0
      %209 = vmatprep.subr.bf16.mxu0 0
      %210 = vmatpush1.bf16.xpose.msra.mxu0 0
      %211 = vmatprep.subr.bf16.mxu0 0
      %212 = vmatpush1.bf16.xpose.msra.mxu0 0
      %213 = vmatprep.subr.bf16.mxu0 0
      %214 = vmatpush1.bf16.xpose.msra.mxu0 0
      %215 = vmatprep.subr.bf16.mxu0 0
      %216 = vmatpush1.bf16.xpose.msra.mxu0 0
      %217 = vmatprep.subr.bf16.mxu0 0
      %218 = vmatpush1.bf16.xpose.msra.mxu0 0
      %219 = vmatprep.subr.bf16.mxu0 0
      %220 = vmatpush1.bf16.xpose.msra.mxu0 0
      %221 = vmatprep.subr.bf16.mxu0 0
      %222 = vmatpush1.bf16.xpose.msra.mxu0 0
      %223 = vmatprep.subr.bf16.mxu0 0
      %224 = vmatpush1.bf16.xpose.msra.mxu0 0
      %225 = vmatprep.subr.bf16.mxu0 0
      %226 = vmatpush1.bf16.xpose.msra.mxu0 0
      %227 = vmatprep.subr.bf16.mxu0 0
      %228 = vmatpush1.bf16.xpose.msra.mxu0 0
      %229 = vmatprep.subr.bf16.mxu0 0
      %230 = vmatpush1.bf16.xpose.msra.mxu0 0
      %231 = vmatprep.subr.bf16.mxu0 0
      %232 = vmatpush1.bf16.xpose.msra.mxu0 0
      %233 = vmatprep.subr.bf16.mxu0 0
      %234 = vmatpush1.bf16.xpose.msra.mxu0 0
      %235 = vmatprep.mubr.bf16.mxu0 0
      %236 = vmatmul.mubr.bf16.gmra.mrb[0].mxu0 %v198
      %v237 = vpop.f32.mrb[0].mxu0
      %v238 = vadd.f32 0.0, %v237
      %v239 = vpop.f32.mrb[0].mxu0
      %v240 = vpop.f32.mrb[0].mxu0
      %v241 = vpop.f32.mrb[0].mxu0
      %242 = vdwg.mxu0
      %v244 = vcombine.high %v238, %v238
      %v246 = vunpack.c.l.s4 1966171168
      %v247 = vunpack.c.0.s8 %v246
      %v248 = vlaneseq
      %v249 = vshrl.u32 %v248, 7
      %v250 = vsub.s32 %v247, %v249
      %v251 = vrot.slane %v238, %v250
      %v253 = vunpack.c.l.s4 1966171168
      %v254 = vunpack.c.0.s8 %v253
      %v255 = vlaneseq
      %v256 = vshrl.u32 %v255, 7
      %v257 = vsub.s32 %v254, %v256
      %v258 = vrot.slane %v244, %v257
      %v259 = vcombine.high %v251, %v251
      %v260 = vcombine.high %v258, %v258
      %v262 = vunpack.c.l.s4 1966171168
      %v263 = vunpack.c.0.s8 %v262
      %v264 = vlaneseq
      %v265 = vshrl.u32 %v264, 7
      %v266 = vsub.s32 %v263, %v265
      %v267 = vrot.slane %v251, %v266
      %v269 = vunpack.c.l.s4 1966171168
      %v270 = vunpack.c.0.s8 %v269
      %v271 = vlaneseq
      %v272 = vshrl.u32 %v271, 7
      %v273 = vsub.s32 %v270, %v272
      %v274 = vrot.slane %v258, %v273
      %v276 = vunpack.c.l.s4 1966171168
      %v277 = vunpack.c.0.s8 %v276
      %v278 = vlaneseq
      %v279 = vshrl.u32 %v278, 7
      %v280 = vsub.s32 %v277, %v279
      %v281 = vrot.slane %v259, %v280
      %v283 = vunpack.c.l.s4 1966171168
      %v284 = vunpack.c.0.s8 %v283
      %v285 = vlaneseq
      %v286 = vshrl.u32 %v285, 7
      %v287 = vsub.s32 %v284, %v286
      %v288 = vrot.slane %v260, %v287
      %v289 = vcombine.high %v267, %v267
      %v290 = vcombine.high %v274, %v274
      %v291 = vcombine.high %v281, %v281
      %v292 = vcombine.high %v288, %v288
      %vm293 = vcmask 121856
      %v294 = vsel %vm293, %v267, 0
      %vm296 = vcmask 1046528
      %v298 = vsel %vm296, %v171, 0
      %300 = vmatprep.subr.mxu0 0.0
      %301 = vmatpush1.msra.mxu0 %v170
      %302 = vmatprep.subr.mxu0 0.0
      %303 = vmatpush1.msra.mxu0 %v298
      %304 = vmatprep.subr.mxu0 0.0
      %305 = vmatpush1.msra.mxu0 0.0
      %306 = vmatprep.subr.mxu0 0.0
      %307 = vmatpush1.msra.mxu0 0.0
      %308 = vmatprep.subr.mxu0 0.0
      %309 = vmatpush1.msra.mxu0 0.0
      %310 = vmatprep.subr.mxu0 0.0
      %311 = vmatpush1.msra.mxu0 0.0
      %312 = vmatprep.subr.mxu0 0.0
      %313 = vmatpush1.msra.mxu0 0.0
      %314 = vmatprep.subr.mxu0 0.0
      %315 = vmatpush1.msra.mxu0 0.0
      %316 = vmatprep.subr.mxu0 0.0
      %317 = vmatpush1.msra.mxu0 0.0
      %318 = vmatprep.subr.mxu0 0.0
      %319 = vmatpush1.msra.mxu0 0.0
      %320 = vmatprep.subr.mxu0 0.0
      %321 = vmatpush1.msra.mxu0 0.0
      %322 = vmatprep.subr.mxu0 0.0
      %323 = vmatpush1.msra.mxu0 0.0
      %324 = vmatprep.subr.mxu0 0.0
      %325 = vmatpush1.msra.mxu0 0.0
      %326 = vmatprep.subr.mxu0 0.0
      %327 = vmatpush1.msra.mxu0 0.0
      %328 = vmatprep.subr.mxu0 0.0
      %329 = vmatpush1.msra.mxu0 0.0
      %330 = vmatprep.subr.mxu0 0.0
      %331 = vmatpush1.msra.mxu0 0.0
      %332 = vmatprep.subr.mxu0 0.0
      %333 = vmatpush1.msra.mxu0 0.0
      %334 = vmatprep.subr.mxu0 0.0
      %335 = vmatpush1.msra.mxu0 0.0
      %336 = vmatprep.subr.mxu0 0.0
      %337 = vmatpush1.msra.mxu0 0.0
      %338 = vmatprep.subr.mxu0 0.0
      %339 = vmatpush1.msra.mxu0 0.0
      %340 = vmatprep.subr.mxu0 0.0
      %341 = vmatpush1.msra.mxu0 0.0
      %342 = vmatprep.subr.mxu0 0.0
      %343 = vmatpush1.msra.mxu0 0.0
      %344 = vmatprep.subr.mxu0 0.0
      %345 = vmatpush1.msra.mxu0 0.0
      %346 = vmatprep.subr.mxu0 0.0
      %347 = vmatpush1.msra.mxu0 0.0
      %348 = vmatprep.subr.mxu0 0.0
      %349 = vmatpush1.msra.mxu0 0.0
      %350 = vmatprep.subr.mxu0 0.0
      %351 = vmatpush1.msra.mxu0 0.0
      %352 = vmatprep.subr.mxu0 0.0
      %353 = vmatpush1.msra.mxu0 0.0
      %354 = vmatprep.subr.mxu0 0.0
      %355 = vmatpush1.msra.mxu0 0.0
      %356 = vmatprep.subr.mxu0 0.0
      %357 = vmatpush1.msra.mxu0 0.0
      %358 = vmatprep.subr.mxu0 0.0
      %359 = vmatpush1.msra.mxu0 0.0
      %360 = vmatprep.subr.mxu0 0.0
      %361 = vmatpush1.msra.mxu0 0.0
      %362 = vmatprep.subr.mxu0 0.0
      %363 = vmatpush1.msra.mxu0 0.0
      %364 = vmatprep.mubr.f32.mxu0 0.0
      %365 = vmatmul.mubr.f32.gmra.mrb[0].mxu0 %v294
      %v366 = vpop.f32.mrb[0].mxu0
      %v367 = vadd.f32 0.0, %v366
      %v368 = vpop.f32.mrb[0].mxu0
      %369 = vdwg.mxu0
      %v370 = vsel %vm293, %v281, 0
      %v373 = vsel %vm296, %v173, 0
      %375 = vmatprep.subr.mxu0 0.0
      %376 = vmatpush1.msra.mxu0 %v172
      %377 = vmatprep.subr.mxu0 0.0
      %378 = vmatpush1.msra.mxu0 %v373
      %379 = vmatprep.subr.mxu0 0.0
      %380 = vmatpush1.msra.mxu0 0.0
      %381 = vmatprep.subr.mxu0 0.0
      %382 = vmatpush1.msra.mxu0 0.0
      %383 = vmatprep.subr.mxu0 0.0
      %384 = vmatpush1.msra.mxu0 0.0
      %385 = vmatprep.subr.mxu0 0.0
      %386 = vmatpush1.msra.mxu0 0.0
      %387 = vmatprep.subr.mxu0 0.0
      %388 = vmatpush1.msra.mxu0 0.0
      %389 = vmatprep.subr.mxu0 0.0
      %390 = vmatpush1.msra.mxu0 0.0
      %391 = vmatprep.subr.mxu0 0.0
      %392 = vmatpush1.msra.mxu0 0.0
      %393 = vmatprep.subr.mxu0 0.0
      %394 = vmatpush1.msra.mxu0 0.0
      %395 = vmatprep.subr.mxu0 0.0
      %396 = vmatpush1.msra.mxu0 0.0
      %397 = vmatprep.subr.mxu0 0.0
      %398 = vmatpush1.msra.mxu0 0.0
      %399 = vmatprep.subr.mxu0 0.0
      %400 = vmatpush1.msra.mxu0 0.0
      %401 = vmatprep.subr.mxu0 0.0
      %402 = vmatpush1.msra.mxu0 0.0
      %403 = vmatprep.subr.mxu0 0.0
      %404 = vmatpush1.msra.mxu0 0.0
      %405 = vmatprep.subr.mxu0 0.0
      %406 = vmatpush1.msra.mxu0 0.0
      %407 = vmatprep.subr.mxu0 0.0
      %408 = vmatpush1.msra.mxu0 0.0
      %409 = vmatprep.subr.mxu0 0.0
      %410 = vmatpush1.msra.mxu0 0.0
      %411 = vmatprep.subr.mxu0 0.0
      %412 = vmatpush1.msra.mxu0 0.0
      %413 = vmatprep.subr.mxu0 0.0
      %414 = vmatpush1.msra.mxu0 0.0
      %415 = vmatprep.subr.mxu0 0.0
      %416 = vmatpush1.msra.mxu0 0.0
      %417 = vmatprep.subr.mxu0 0.0
      %418 = vmatpush1.msra.mxu0 0.0
      %419 = vmatprep.subr.mxu0 0.0
      %420 = vmatpush1.msra.mxu0 0.0
      %421 = vmatprep.subr.mxu0 0.0
      %422 = vmatpush1.msra.mxu0 0.0
      %423 = vmatprep.subr.mxu0 0.0
      %424 = vmatpush1.msra.mxu0 0.0
      %425 = vmatprep.subr.mxu0 0.0
      %426 = vmatpush1.msra.mxu0 0.0
      %427 = vmatprep.subr.mxu0 0.0
      %428 = vmatpush1.msra.mxu0 0.0
      %429 = vmatprep.subr.mxu0 0.0
      %430 = vmatpush1.msra.mxu0 0.0
      %431 = vmatprep.subr.mxu0 0.0
      %432 = vmatpush1.msra.mxu0 0.0
      %433 = vmatprep.subr.mxu0 0.0
      %434 = vmatpush1.msra.mxu0 0.0
      %435 = vmatprep.subr.mxu0 0.0
      %436 = vmatpush1.msra.mxu0 0.0
      %437 = vmatprep.subr.mxu0 0.0
      %438 = vmatpush1.msra.mxu0 0.0
      %439 = vmatprep.mubr.f32.mxu0 0.0
      %440 = vmatmul.mubr.f32.gmra.mrb[0].mxu0 %v370
      %v441 = vpop.f32.mrb[0].mxu0
      %v442 = vadd.f32 0.0, %v441
      %v443 = vpop.f32.mrb[0].mxu0
      %444 = vdwg.mxu0
      %v445 = vsel %vm293, %v289, 0
      %v448 = vsel %vm296, %v175, 0
      %450 = vmatprep.subr.mxu0 0.0
      %451 = vmatpush1.msra.mxu0 %v174
      %452 = vmatprep.subr.mxu0 0.0
      %453 = vmatpush1.msra.mxu0 %v448
      %454 = vmatprep.subr.mxu0 0.0
      %455 = vmatpush1.msra.mxu0 0.0
      %456 = vmatprep.subr.mxu0 0.0
      %457 = vmatpush1.msra.mxu0 0.0
      %458 = vmatprep.subr.mxu0 0.0
      %459 = vmatpush1.msra.mxu0 0.0
      %460 = vmatprep.subr.mxu0 0.0
      %461 = vmatpush1.msra.mxu0 0.0
      %462 = vmatprep.subr.mxu0 0.0
      %463 = vmatpush1.msra.mxu0 0.0
      %464 = vmatprep.subr.mxu0 0.0
      %465 = vmatpush1.msra.mxu0 0.0
      %466 = vmatprep.subr.mxu0 0.0
      %467 = vmatpush1.msra.mxu0 0.0
      %468 = vmatprep.subr.mxu0 0.0
      %469 = vmatpush1.msra.mxu0 0.0
      %470 = vmatprep.subr.mxu0 0.0
      %471 = vmatpush1.msra.mxu0 0.0
      %472 = vmatprep.subr.mxu0 0.0
      %473 = vmatpush1.msra.mxu0 0.0
      %474 = vmatprep.subr.mxu0 0.0
      %475 = vmatpush1.msra.mxu0 0.0
      %476 = vmatprep.subr.mxu0 0.0
      %477 = vmatpush1.msra.mxu0 0.0
      %478 = vmatprep.subr.mxu0 0.0
      %479 = vmatpush1.msra.mxu0 0.0
      %480 = vmatprep.subr.mxu0 0.0
      %481 = vmatpush1.msra.mxu0 0.0
      %482 = vmatprep.subr.mxu0 0.0
      %483 = vmatpush1.msra.mxu0 0.0
      %484 = vmatprep.subr.mxu0 0.0
      %485 = vmatpush1.msra.mxu0 0.0
      %486 = vmatprep.subr.mxu0 0.0
      %487 = vmatpush1.msra.mxu0 0.0
      %488 = vmatprep.subr.mxu0 0.0
      %489 = vmatpush1.msra.mxu0 0.0
      %490 = vmatprep.subr.mxu0 0.0
      %491 = vmatpush1.msra.mxu0 0.0
      %492 = vmatprep.subr.mxu0 0.0
      %493 = vmatpush1.msra.mxu0 0.0
      %494 = vmatprep.subr.mxu0 0.0
      %495 = vmatpush1.msra.mxu0 0.0
      %496 = vmatprep.subr.mxu0 0.0
      %497 = vmatpush1.msra.mxu0 0.0
      %498 = vmatprep.subr.mxu0 0.0
      %499 = vmatpush1.msra.mxu0 0.0
      %500 = vmatprep.subr.mxu0 0.0
      %501 = vmatpush1.msra.mxu0 0.0
      %502 = vmatprep.subr.mxu0 0.0
      %503 = vmatpush1.msra.mxu0 0.0
      %504 = vmatprep.subr.mxu0 0.0
      %505 = vmatpush1.msra.mxu0 0.0
      %506 = vmatprep.subr.mxu0 0.0
      %507 = vmatpush1.msra.mxu0 0.0
      %508 = vmatprep.subr.mxu0 0.0
      %509 = vmatpush1.msra.mxu0 0.0
      %510 = vmatprep.subr.mxu0 0.0
      %511 = vmatpush1.msra.mxu0 0.0
      %512 = vmatprep.subr.mxu0 0.0
      %513 = vmatpush1.msra.mxu0 0.0
      %514 = vmatprep.mubr.f32.mxu0 0.0
      %515 = vmatmul.mubr.f32.gmra.mrb[0].mxu0 %v445
      %v516 = vpop.f32.mrb[0].mxu0
      %v517 = vadd.f32 0.0, %v516
      %v518 = vpop.f32.mrb[0].mxu0
      %519 = vdwg.mxu0
      %v520 = vsel %vm293, %v291, 0
      %v523 = vsel %vm296, %v177, 0
      %525 = vmatprep.subr.mxu0 0.0
      %526 = vmatpush1.msra.mxu0 %v176
      %527 = vmatprep.subr.mxu0 0.0
      %528 = vmatpush1.msra.mxu0 %v523
      %529 = vmatprep.subr.mxu0 0.0
      %530 = vmatpush1.msra.mxu0 0.0
      %531 = vmatprep.subr.mxu0 0.0
      %532 = vmatpush1.msra.mxu0 0.0
      %533 = vmatprep.subr.mxu0 0.0
      %534 = vmatpush1.msra.mxu0 0.0
      %535 = vmatprep.subr.mxu0 0.0
      %536 = vmatpush1.msra.mxu0 0.0
      %537 = vmatprep.subr.mxu0 0.0
      %538 = vmatpush1.msra.mxu0 0.0
      %539 = vmatprep.subr.mxu0 0.0
      %540 = vmatpush1.msra.mxu0 0.0
      %541 = vmatprep.subr.mxu0 0.0
      %542 = vmatpush1.msra.mxu0 0.0
      %543 = vmatprep.subr.mxu0 0.0
      %544 = vmatpush1.msra.mxu0 0.0
      %545 = vmatprep.subr.mxu0 0.0
      %546 = vmatpush1.msra.mxu0 0.0
      %547 = vmatprep.subr.mxu0 0.0
      %548 = vmatpush1.msra.mxu0 0.0
      %549 = vmatprep.subr.mxu0 0.0
      %550 = vmatpush1.msra.mxu0 0.0
      %551 = vmatprep.subr.mxu0 0.0
      %552 = vmatpush1.msra.mxu0 0.0
      %553 = vmatprep.subr.mxu0 0.0
      %554 = vmatpush1.msra.mxu0 0.0
      %555 = vmatprep.subr.mxu0 0.0
      %556 = vmatpush1.msra.mxu0 0.0
      %557 = vmatprep.subr.mxu0 0.0
      %558 = vmatpush1.msra.mxu0 0.0
      %559 = vmatprep.subr.mxu0 0.0
      %560 = vmatpush1.msra.mxu0 0.0
      %561 = vmatprep.subr.mxu0 0.0
      %562 = vmatpush1.msra.mxu0 0.0
      %563 = vmatprep.subr.mxu0 0.0
      %564 = vmatpush1.msra.mxu0 0.0
      %565 = vmatprep.subr.mxu0 0.0
      %566 = vmatpush1.msra.mxu0 0.0
      %567 = vmatprep.subr.mxu0 0.0
      %568 = vmatpush1.msra.mxu0 0.0
      %569 = vmatprep.subr.mxu0 0.0
      %570 = vmatpush1.msra.mxu0 0.0
      %571 = vmatprep.subr.mxu0 0.0
      %572 = vmatpush1.msra.mxu0 0.0
      %573 = vmatprep.subr.mxu0 0.0
      %574 = vmatpush1.msra.mxu0 0.0
      %575 = vmatprep.subr.mxu0 0.0
      %576 = vmatpush1.msra.mxu0 0.0
      %577 = vmatprep.subr.mxu0 0.0
      %578 = vmatpush1.msra.mxu0 0.0
      %579 = vmatprep.subr.mxu0 0.0
      %580 = vmatpush1.msra.mxu0 0.0
      %581 = vmatprep.subr.mxu0 0.0
      %582 = vmatpush1.msra.mxu0 0.0
      %583 = vmatprep.subr.mxu0 0.0
      %584 = vmatpush1.msra.mxu0 0.0
      %585 = vmatprep.subr.mxu0 0.0
      %586 = vmatpush1.msra.mxu0 0.0
      %587 = vmatprep.subr.mxu0 0.0
      %588 = vmatpush1.msra.mxu0 0.0
      %589 = vmatprep.mubr.f32.mxu0 0.0
      %590 = vmatmul.mubr.f32.gmra.mrb[0].mxu0 %v520
      %v591 = vpop.f32.mrb[0].mxu0
      %v592 = vadd.f32 0.0, %v591
      %v593 = vpop.f32.mrb[0].mxu0
      %594 = vdwg.mxu0
      %v595 = vsel %vm293, %v274, 0
      %v598 = vsel %vm296, %v179, 0
      %600 = vmatprep.subr.mxu0 0.0
      %601 = vmatpush1.msra.mxu0 %v178
      %602 = vmatprep.subr.mxu0 0.0
      %603 = vmatpush1.msra.mxu0 %v598
      %604 = vmatprep.subr.mxu0 0.0
      %605 = vmatpush1.msra.mxu0 0.0
      %606 = vmatprep.subr.mxu0 0.0
      %607 = vmatpush1.msra.mxu0 0.0
      %608 = vmatprep.subr.mxu0 0.0
      %609 = vmatpush1.msra.mxu0 0.0
      %610 = vmatprep.subr.mxu0 0.0
      %611 = vmatpush1.msra.mxu0 0.0
      %612 = vmatprep.subr.mxu0 0.0
      %613 = vmatpush1.msra.mxu0 0.0
      %614 = vmatprep.subr.mxu0 0.0
      %615 = vmatpush1.msra.mxu0 0.0
      %616 = vmatprep.subr.mxu0 0.0
      %617 = vmatpush1.msra.mxu0 0.0
      %618 = vmatprep.subr.mxu0 0.0
      %619 = vmatpush1.msra.mxu0 0.0
      %620 = vmatprep.subr.mxu0 0.0
      %621 = vmatpush1.msra.mxu0 0.0
      %622 = vmatprep.subr.mxu0 0.0
      %623 = vmatpush1.msra.mxu0 0.0
      %624 = vmatprep.subr.mxu0 0.0
      %625 = vmatpush1.msra.mxu0 0.0
      %626 = vmatprep.subr.mxu0 0.0
      %627 = vmatpush1.msra.mxu0 0.0
      %628 = vmatprep.subr.mxu0 0.0
      %629 = vmatpush1.msra.mxu0 0.0
      %630 = vmatprep.subr.mxu0 0.0
      %631 = vmatpush1.msra.mxu0 0.0
      %632 = vmatprep.subr.mxu0 0.0
      %633 = vmatpush1.msra.mxu0 0.0
      %634 = vmatprep.subr.mxu0 0.0
      %635 = vmatpush1.msra.mxu0 0.0
      %636 = vmatprep.subr.mxu0 0.0
      %637 = vmatpush1.msra.mxu0 0.0
      %638 = vmatprep.subr.mxu0 0.0
      %639 = vmatpush1.msra.mxu0 0.0
      %640 = vmatprep.subr.mxu0 0.0
      %641 = vmatpush1.msra.mxu0 0.0
      %642 = vmatprep.subr.mxu0 0.0
      %643 = vmatpush1.msra.mxu0 0.0
      %644 = vmatprep.subr.mxu0 0.0
      %645 = vmatpush1.msra.mxu0 0.0
      %646 = vmatprep.subr.mxu0 0.0
      %647 = vmatpush1.msra.mxu0 0.0
      %648 = vmatprep.subr.mxu0 0.0
      %649 = vmatpush1.msra.mxu0 0.0
      %650 = vmatprep.subr.mxu0 0.0
      %651 = vmatpush1.msra.mxu0 0.0
      %652 = vmatprep.subr.mxu0 0.0
      %653 = vmatpush1.msra.mxu0 0.0
      %654 = vmatprep.subr.mxu0 0.0
      %655 = vmatpush1.msra.mxu0 0.0
      %656 = vmatprep.subr.mxu0 0.0
      %657 = vmatpush1.msra.mxu0 0.0
      %658 = vmatprep.subr.mxu0 0.0
      %659 = vmatpush1.msra.mxu0 0.0
      %660 = vmatprep.subr.mxu0 0.0
      %661 = vmatpush1.msra.mxu0 0.0
      %662 = vmatprep.subr.mxu0 0.0
      %663 = vmatpush1.msra.mxu0 0.0
      %664 = vmatprep.mubr.f32.mxu0 0.0
      %665 = vmatmul.mubr.f32.gmra.mrb[0].mxu0 %v595
      %v666 = vpop.f32.mrb[0].mxu0
      %v667 = vadd.f32 0.0, %v666
      %v668 = vpop.f32.mrb[0].mxu0
      %669 = vdwg.mxu0
      %v670 = vsel %vm293, %v288, 0
      %v673 = vsel %vm296, %v181, 0
      %675 = vmatprep.subr.mxu0 0.0
      %676 = vmatpush1.msra.mxu0 %v180
      %677 = vmatprep.subr.mxu0 0.0
      %678 = vmatpush1.msra.mxu0 %v673
      %679 = vmatprep.subr.mxu0 0.0
      %680 = vmatpush1.msra.mxu0 0.0
      %681 = vmatprep.subr.mxu0 0.0
      %682 = vmatpush1.msra.mxu0 0.0
      %683 = vmatprep.subr.mxu0 0.0
      %684 = vmatpush1.msra.mxu0 0.0
      %685 = vmatprep.subr.mxu0 0.0
      %686 = vmatpush1.msra.mxu0 0.0
      %687 = vmatprep.subr.mxu0 0.0
      %688 = vmatpush1.msra.mxu0 0.0
      %689 = vmatprep.subr.mxu0 0.0
      %690 = vmatpush1.msra.mxu0 0.0
      %691 = vmatprep.subr.mxu0 0.0
      %692 = vmatpush1.msra.mxu0 0.0
      %693 = vmatprep.subr.mxu0 0.0
      %694 = vmatpush1.msra.mxu0 0.0
      %695 = vmatprep.subr.mxu0 0.0
      %696 = vmatpush1.msra.mxu0 0.0
      %697 = vmatprep.subr.mxu0 0.0
      %698 = vmatpush1.msra.mxu0 0.0
      %699 = vmatprep.subr.mxu0 0.0
      %700 = vmatpush1.msra.mxu0 0.0
      %701 = vmatprep.subr.mxu0 0.0
      %702 = vmatpush1.msra.mxu0 0.0
      %703 = vmatprep.subr.mxu0 0.0
      %704 = vmatpush1.msra.mxu0 0.0
      %705 = vmatprep.subr.mxu0 0.0
      %706 = vmatpush1.msra.mxu0 0.0
      %707 = vmatprep.subr.mxu0 0.0
      %708 = vmatpush1.msra.mxu0 0.0
      %709 = vmatprep.subr.mxu0 0.0
      %710 = vmatpush1.msra.mxu0 0.0
      %711 = vmatprep.subr.mxu0 0.0
      %712 = vmatpush1.msra.mxu0 0.0
      %713 = vmatprep.subr.mxu0 0.0
      %714 = vmatpush1.msra.mxu0 0.0
      %715 = vmatprep.subr.mxu0 0.0
      %716 = vmatpush1.msra.mxu0 0.0
      %717 = vmatprep.subr.mxu0 0.0
      %718 = vmatpush1.msra.mxu0 0.0
      %719 = vmatprep.subr.mxu0 0.0
      %720 = vmatpush1.msra.mxu0 0.0
      %721 = vmatprep.subr.mxu0 0.0
      %722 = vmatpush1.msra.mxu0 0.0
      %723 = vmatprep.subr.mxu0 0.0
      %724 = vmatpush1.msra.mxu0 0.0
      %725 = vmatprep.subr.mxu0 0.0
      %726 = vmatpush1.msra.mxu0 0.0
      %727 = vmatprep.subr.mxu0 0.0
      %728 = vmatpush1.msra.mxu0 0.0
      %729 = vmatprep.subr.mxu0 0.0
      %730 = vmatpush1.msra.mxu0 0.0
      %731 = vmatprep.subr.mxu0 0.0
      %732 = vmatpush1.msra.mxu0 0.0
      %733 = vmatprep.subr.mxu0 0.0
      %734 = vmatpush1.msra.mxu0 0.0
      %735 = vmatprep.subr.mxu0 0.0
      %736 = vmatpush1.msra.mxu0 0.0
      %737 = vmatprep.subr.mxu0 0.0
      %738 = vmatpush1.msra.mxu0 0.0
      %739 = vmatprep.mubr.f32.mxu0 0.0
      %740 = vmatmul.mubr.f32.gmra.mrb[0].mxu0 %v670
      %v741 = vpop.f32.mrb[0].mxu0
      %v742 = vadd.f32 0.0, %v741
      %v743 = vpop.f32.mrb[0].mxu0
      %744 = vdwg.mxu0
      %v745 = vsel %vm293, %v290, 0
      %v748 = vsel %vm296, %v183, 0
      %750 = vmatprep.subr.mxu0 0.0
      %751 = vmatpush1.msra.mxu0 %v182
      %752 = vmatprep.subr.mxu0 0.0
      %753 = vmatpush1.msra.mxu0 %v748
      %754 = vmatprep.subr.mxu0 0.0
      %755 = vmatpush1.msra.mxu0 0.0
      %756 = vmatprep.subr.mxu0 0.0
      %757 = vmatpush1.msra.mxu0 0.0
      %758 = vmatprep.subr.mxu0 0.0
      %759 = vmatpush1.msra.mxu0 0.0
      %760 = vmatprep.subr.mxu0 0.0
      %761 = vmatpush1.msra.mxu0 0.0
      %762 = vmatprep.subr.mxu0 0.0
      %763 = vmatpush1.msra.mxu0 0.0
      %764 = vmatprep.subr.mxu0 0.0
      %765 = vmatpush1.msra.mxu0 0.0
      %766 = vmatprep.subr.mxu0 0.0
      %767 = vmatpush1.msra.mxu0 0.0
      %768 = vmatprep.subr.mxu0 0.0
      %769 = vmatpush1.msra.mxu0 0.0
      %770 = vmatprep.subr.mxu0 0.0
      %771 = vmatpush1.msra.mxu0 0.0
      %772 = vmatprep.subr.mxu0 0.0
      %773 = vmatpush1.msra.mxu0 0.0
      %774 = vmatprep.subr.mxu0 0.0
      %775 = vmatpush1.msra.mxu0 0.0
      %776 = vmatprep.subr.mxu0 0.0
      %777 = vmatpush1.msra.mxu0 0.0
      %778 = vmatprep.subr.mxu0 0.0
      %779 = vmatpush1.msra.mxu0 0.0
      %780 = vmatprep.subr.mxu0 0.0
      %781 = vmatpush1.msra.mxu0 0.0
      %782 = vmatprep.subr.mxu0 0.0
      %783 = vmatpush1.msra.mxu0 0.0
      %784 = vmatprep.subr.mxu0 0.0
      %785 = vmatpush1.msra.mxu0 0.0
      %786 = vmatprep.subr.mxu0 0.0
      %787 = vmatpush1.msra.mxu0 0.0
      %788 = vmatprep.subr.mxu0 0.0
      %789 = vmatpush1.msra.mxu0 0.0
      %790 = vmatprep.subr.mxu0 0.0
      %791 = vmatpush1.msra.mxu0 0.0
      %792 = vmatprep.subr.mxu0 0.0
      %793 = vmatpush1.msra.mxu0 0.0
      %794 = vmatprep.subr.mxu0 0.0
      %795 = vmatpush1.msra.mxu0 0.0
      %796 = vmatprep.subr.mxu0 0.0
      %797 = vmatpush1.msra.mxu0 0.0
      %798 = vmatprep.subr.mxu0 0.0
      %799 = vmatpush1.msra.mxu0 0.0
      %800 = vmatprep.subr.mxu0 0.0
      %801 = vmatpush1.msra.mxu0 0.0
      %802 = vmatprep.subr.mxu0 0.0
      %803 = vmatpush1.msra.mxu0 0.0
      %804 = vmatprep.subr.mxu0 0.0
      %805 = vmatpush1.msra.mxu0 0.0
      %806 = vmatprep.subr.mxu0 0.0
      %807 = vmatpush1.msra.mxu0 0.0
      %808 = vmatprep.subr.mxu0 0.0
      %809 = vmatpush1.msra.mxu0 0.0
      %810 = vmatprep.subr.mxu0 0.0
      %811 = vmatpush1.msra.mxu0 0.0
      %812 = vmatprep.subr.mxu0 0.0
      %813 = vmatpush1.msra.mxu0 0.0
      %814 = vmatprep.mubr.f32.mxu0 0.0
      %815 = vmatmul.mubr.f32.gmra.mrb[0].mxu0 %v745
      %v816 = vpop.f32.mrb[0].mxu0
      %v817 = vadd.f32 0.0, %v816
      %v818 = vpop.f32.mrb[0].mxu0
      %819 = vdwg.mxu0
      %v820 = vsel %vm293, %v292, 0
      %v823 = vsel %vm296, %v185, 0
      %825 = vmatprep.subr.mxu0 0.0
      %826 = vmatpush1.msra.mxu0 %v184
      %827 = vmatprep.subr.mxu0 0.0
      %828 = vmatpush1.msra.mxu0 %v823
      %829 = vmatprep.subr.mxu0 0.0
      %830 = vmatpush1.msra.mxu0 0.0
      %831 = vmatprep.subr.mxu0 0.0
      %832 = vmatpush1.msra.mxu0 0.0
      %833 = vmatprep.subr.mxu0 0.0
      %834 = vmatpush1.msra.mxu0 0.0
      %835 = vmatprep.subr.mxu0 0.0
      %836 = vmatpush1.msra.mxu0 0.0
      %837 = vmatprep.subr.mxu0 0.0
      %838 = vmatpush1.msra.mxu0 0.0
      %839 = vmatprep.subr.mxu0 0.0
      %840 = vmatpush1.msra.mxu0 0.0
      %841 = vmatprep.subr.mxu0 0.0
      %842 = vmatpush1.msra.mxu0 0.0
      %843 = vmatprep.subr.mxu0 0.0
      %844 = vmatpush1.msra.mxu0 0.0
      %845 = vmatprep.subr.mxu0 0.0
      %846 = vmatpush1.msra.mxu0 0.0
      %847 = vmatprep.subr.mxu0 0.0
      %848 = vmatpush1.msra.mxu0 0.0
      %849 = vmatprep.subr.mxu0 0.0
      %850 = vmatpush1.msra.mxu0 0.0
      %851 = vmatprep.subr.mxu0 0.0
      %852 = vmatpush1.msra.mxu0 0.0
      %853 = vmatprep.subr.mxu0 0.0
      %854 = vmatpush1.msra.mxu0 0.0
      %855 = vmatprep.subr.mxu0 0.0
      %856 = vmatpush1.msra.mxu0 0.0
      %857 = vmatprep.subr.mxu0 0.0
      %858 = vmatpush1.msra.mxu0 0.0
      %859 = vmatprep.subr.mxu0 0.0
      %860 = vmatpush1.msra.mxu0 0.0
      %861 = vmatprep.subr.mxu0 0.0
      %862 = vmatpush1.msra.mxu0 0.0
      %863 = vmatprep.subr.mxu0 0.0
      %864 = vmatpush1.msra.mxu0 0.0
      %865 = vmatprep.subr.mxu0 0.0
      %866 = vmatpush1.msra.mxu0 0.0
      %867 = vmatprep.subr.mxu0 0.0
      %868 = vmatpush1.msra.mxu0 0.0
      %869 = vmatprep.subr.mxu0 0.0
      %870 = vmatpush1.msra.mxu0 0.0
      %871 = vmatprep.subr.mxu0 0.0
      %872 = vmatpush1.msra.mxu0 0.0
      %873 = vmatprep.subr.mxu0 0.0
      %874 = vmatpush1.msra.mxu0 0.0
      %875 = vmatprep.subr.mxu0 0.0
      %876 = vmatpush1.msra.mxu0 0.0
      %877 = vmatprep.subr.mxu0 0.0
      %878 = vmatpush1.msra.mxu0 0.0
      %879 = vmatprep.subr.mxu0 0.0
      %880 = vmatpush1.msra.mxu0 0.0
      %881 = vmatprep.subr.mxu0 0.0
      %882 = vmatpush1.msra.mxu0 0.0
      %883 = vmatprep.subr.mxu0 0.0
      %884 = vmatpush1.msra.mxu0 0.0
      %885 = vmatprep.subr.mxu0 0.0
      %886 = vmatpush1.msra.mxu0 0.0
      %887 = vmatprep.subr.mxu0 0.0
      %888 = vmatpush1.msra.mxu0 0.0
      %889 = vmatprep.mubr.f32.mxu0 0.0
      %890 = vmatmul.mubr.f32.gmra.mrb[0].mxu0 %v820
      %v891 = vpop.f32.mrb[0].mxu0
      %v892 = vadd.f32 0.0, %v891
      %v893 = vpop.f32.mrb[0].mxu0
      %894 = vdwg.mxu0
      %895 = vrot.lane.b32.xlu0 %v188, 64
      %v896 = vpop.permute.xlu0 %895
      %v905 = vrot.slane %v442, 7
      %vm906 = vcmask 1041409
      %v907 = vsel %vm906, %v905, %v367
      %v908 = vrot.slane %v517, 6
      %vm909 = vcmask 1042434
      %v910 = vsel %vm909, %v908, %v907
      %v911 = vrot.slane %v592, 5
      %vm912 = vcmask 1043459
      %v913 = vsel %vm912, %v911, %v910
      %v914 = vrot.slane %v667, 4
      %vm915 = vcmask 1044484
      %v916 = vsel %vm915, %v914, %v913
      %v917 = vrot.slane %v742, 3
      %vm918 = vcmask 1045509
      %v919 = vsel %vm918, %v917, %v916
      %v920 = vrot.slane %v817, 2
      %vm921 = vcmask 1046534
      %v922 = vsel %vm921, %v920, %v919
      %v923 = vrot.slane %v892, 1
      %vm924 = vcmask 1047559
      %v925 = vsel %vm924, %v923, %v922
      %v928 = vsel %vm196, %v167, 0
      %v931 = vsel %vm196, %v896, 0
      %933 = vmatprep.subr.bf16.mxu0 0
      %934 = vmatpush1.bf16.xpose.msra.mxu0 %v931
      %935 = vmatprep.subr.bf16.mxu0 0
      %936 = vmatpush1.bf16.xpose.msra.mxu0 0
      %937 = vmatprep.subr.bf16.mxu0 0
      %938 = vmatpush1.bf16.xpose.msra.mxu0 0
      %939 = vmatprep.subr.bf16.mxu0 0
      %940 = vmatpush1.bf16.xpose.msra.mxu0 0
      %941 = vmatprep.subr.bf16.mxu0 0
      %942 = vmatpush1.bf16.xpose.msra.mxu0 0
      %943 = vmatprep.subr.bf16.mxu0 0
      %944 = vmatpush1.bf16.xpose.msra.mxu0 0
      %945 = vmatprep.subr.bf16.mxu0 0
      %946 = vmatpush1.bf16.xpose.msra.mxu0 0
      %947 = vmatprep.subr.bf16.mxu0 0
      %948 = vmatpush1.bf16.xpose.msra.mxu0 0
      %949 = vmatprep.subr.bf16.mxu0 0
      %950 = vmatpush1.bf16.xpose.msra.mxu0 0
      %951 = vmatprep.subr.bf16.mxu0 0
      %952 = vmatpush1.bf16.xpose.msra.mxu0 0
      %953 = vmatprep.subr.bf16.mxu0 0
      %954 = vmatpush1.bf16.xpose.msra.mxu0 0
      %955 = vmatprep.subr.bf16.mxu0 0
      %956 = vmatpush1.bf16.xpose.msra.mxu0 0
      %957 = vmatprep.subr.bf16.mxu0 0
      %958 = vmatpush1.bf16.xpose.msra.mxu0 0
      %959 = vmatprep.subr.bf16.mxu0 0
      %960 = vmatpush1.bf16.xpose.msra.mxu0 0
      %961 = vmatprep.subr.bf16.mxu0 0
      %962 = vmatpush1.bf16.xpose.msra.mxu0 0
      %963 = vmatprep.subr.bf16.mxu0 0
      %964 = vmatpush1.bf16.xpose.msra.mxu0 0
      %965 = vmatprep.mubr.bf16.mxu0 0
      %966 = vmatmul.mubr.bf16.gmra.mrb[0].mxu0 %v928
      %v967 = vpop.f32.mrb[0].mxu0
      %v968 = vadd.f32 %v925, %v967
      %v969 = vpop.f32.mrb[0].mxu0
      %v970 = vpop.f32.mrb[0].mxu0
      %v971 = vpop.f32.mrb[0].mxu0
      %972 = vdwg.mxu0
      %v973 = vmul.f32 %v968, 0.35355338
      %v974 = vsel %vm196, %v973, -inf
      %975 = vmax.xlane.f32.xlu0 %v974
      %v976 = vpop.xlane.xlu0 %975
      %v977 = vsub.f32 %v973, %v976
      %v978 = vmul.f32 %v977, 1.442695
      %v979 = vpow.pop %v978
      %v980 = vsel %vm196, %v979, 0.0
      %981 = vadd.xlane.f32.xlu0 %v980
      %v982 = vpop.xlane.xlu0 %981
      %v983 = vrcp.pop %v982
      %v984 = vmul.f32 %v979, %v983
      %v985 = vpack.c.bf16 %v984, %v984
      %986 = vrot.lane.b32.xlu0 %v188, 32
      %v987 = vpop.permute.xlu0 %986
      %v989 = vsel %vm196, %v985, 0
      %vm991 = vcmask 1043456
      %v993 = vsel %vm991, %v987, 0
      %995 = vmatprep.subr.bf16.mxu0 0
      %996 = vmatpush1.bf16.msra.mxu0 %v993
      %997 = vmatprep.subr.bf16.mxu0 0
      %998 = vmatpush1.bf16.msra.mxu0 0
      %999 = vmatprep.subr.bf16.mxu0 0
      %1000 = vmatpush1.bf16.msra.mxu0 0
      %1001 = vmatprep.subr.bf16.mxu0 0
      %1002 = vmatpush1.bf16.msra.mxu0 0
      %1003 = vmatprep.subr.bf16.mxu0 0
      %1004 = vmatpush1.bf16.msra.mxu0 0
      %1005 = vmatprep.subr.bf16.mxu0 0
      %1006 = vmatpush1.bf16.msra.mxu0 0
      %1007 = vmatprep.subr.bf16.mxu0 0
      %1008 = vmatpush1.bf16.msra.mxu0 0
      %1009 = vmatprep.subr.bf16.mxu0 0
      %1010 = vmatpush1.bf16.msra.mxu0 0
      %1011 = vmatprep.subr.bf16.mxu0 0
      %1012 = vmatpush1.bf16.msra.mxu0 0
      %1013 = vmatprep.subr.bf16.mxu0 0
      %1014 = vmatpush1.bf16.msra.mxu0 0
      %1015 = vmatprep.subr.bf16.mxu0 0
      %1016 = vmatpush1.bf16.msra.mxu0 0
      %1017 = vmatprep.subr.bf16.mxu0 0
      %1018 = vmatpush1.bf16.msra.mxu0 0
      %1019 = vmatprep.subr.bf16.mxu0 0
      %1020 = vmatpush1.bf16.msra.mxu0 0
      %1021 = vmatprep.subr.bf16.mxu0 0
      %1022 = vmatpush1.bf16.msra.mxu0 0
      %1023 = vmatprep.subr.bf16.mxu0 0
      %1024 = vmatpush1.bf16.msra.mxu0 0
      %1025 = vmatprep.subr.bf16.mxu0 0
      %1026 = vmatpush1.bf16.msra.mxu0 0
      %1027 = vmatprep.mubr.bf16.mxu0 0
      %1028 = vmatmul.mubr.bf16.gmra.mrb[0].mxu0 %v989
      %v1029 = vpop.f32.mrb[0].mxu0
      %v1030 = vadd.f32 0.0, %v1029
      %v1031 = vpop.f32.mrb[0].mxu0
      %v1032 = vpop.f32.mrb[0].mxu0
      %v1033 = vpop.f32.mrb[0].mxu0
      %1034 = vdwg.mxu0
      %1035 = vrot.lane.b32.xlu0 %v188, 88
      %v1036 = vpop.permute.xlu0 %1035
      %1037 = vrot.lane.b32.xlu0 %v195, 120
      %v1038 = vpop.permute.xlu0 %1037
      %v1040 = vsel %vm196, %v1036, 0
      %v1043 = vsel %vm196, %v1038, 0
      %1045 = vmatprep.subr.bf16.mxu0 0
      %1046 = vmatpush1.bf16.xpose.msra.mxu0 %v1043
      %1047 = vmatprep.subr.bf16.mxu0 0
      %1048 = vmatpush1.bf16.xpose.msra.mxu0 0
      %1049 = vmatprep.subr.bf16.mxu0 0
      %1050 = vmatpush1.bf16.xpose.msra.mxu0 0
      %1051 = vmatprep.subr.bf16.mxu0 0
      %1052 = vmatpush1.bf16.xpose.msra.mxu0 0
      %1053 = vmatprep.subr.bf16.mxu0 0
      %1054 = vmatpush1.bf16.xpose.msra.mxu0 0
      %1055 = vmatprep.subr.bf16.mxu0 0
      %1056 = vmatpush1.bf16.xpose.msra.mxu0 0
      %1057 = vmatprep.subr.bf16.mxu0 0
      %1058 = vmatpush1.bf16.xpose.msra.mxu0 0
      %1059 = vmatprep.subr.bf16.mxu0 0
      %1060 = vmatpush1.bf16.xpose.msra.mxu0 0
      %1061 = vmatprep.subr.bf16.mxu0 0
      %1062 = vmatpush1.bf16.xpose.msra.mxu0 0
      %1063 = vmatprep.subr.bf16.mxu0 0
      %1064 = vmatpush1.bf16.xpose.msra.mxu0 0
      %1065 = vmatprep.subr.bf16.mxu0 0
      %1066 = vmatpush1.bf16.xpose.msra.mxu0 0
      %1067 = vmatprep.subr.bf16.mxu0 0
      %1068 = vmatpush1.bf16.xpose.msra.mxu0 0
      %1069 = vmatprep.subr.bf16.mxu0 0
      %1070 = vmatpush1.bf16.xpose.msra.mxu0 0
      %1071 = vmatprep.subr.bf16.mxu0 0
      %1072 = vmatpush1.bf16.xpose.msra.mxu0 0
      %1073 = vmatprep.subr.bf16.mxu0 0
      %1074 = vmatpush1.bf16.xpose.msra.mxu0 0
      %1075 = vmatprep.subr.bf16.mxu0 0
      %1076 = vmatpush1.bf16.xpose.msra.mxu0 0
      %1077 = vmatprep.mubr.bf16.mxu0 0
      %1078 = vmatmul.mubr.bf16.gmra.mrb[0].mxu0 %v1040
      %v1079 = vpop.f32.mrb[0].mxu0
      %v1080 = vadd.f32 0.0, %v1079
      %v1081 = vpop.f32.mrb[0].mxu0
      %v1082 = vpop.f32.mrb[0].mxu0
      %v1083 = vpop.f32.mrb[0].mxu0
      %1084 = vdwg.mxu0
      %v1086 = vcombine.high %v1080, %v1080
      %v1088 = vunpack.c.l.s4 1966171168
      %v1089 = vunpack.c.0.s8 %v1088
      %v1090 = vlaneseq
      %v1091 = vshrl.u32 %v1090, 7
      %v1092 = vsub.s32 %v1089, %v1091
      %v1093 = vrot.slane %v1080, %v1092
      %v1095 = vunpack.c.l.s4 1966171168
      %v1096 = vunpack.c.0.s8 %v1095
      %v1097 = vlaneseq
      %v1098 = vshrl.u32 %v1097, 7
      %v1099 = vsub.s32 %v1096, %v1098
      %v1100 = vrot.slane %v1086, %v1099
      %v1101 = vcombine.high %v1093, %v1093
      %v1102 = vcombine.high %v1100, %v1100
      %v1104 = vunpack.c.l.s4 1966171168
      %v1105 = vunpack.c.0.s8 %v1104
      %v1106 = vlaneseq
      %v1107 = vshrl.u32 %v1106, 7
      %v1108 = vsub.s32 %v1105, %v1107
      %v1109 = vrot.slane %v1093, %v1108
      %v1111 = vunpack.c.l.s4 1966171168
      %v1112 = vunpack.c.0.s8 %v1111
      %v1113 = vlaneseq
      %v1114 = vshrl.u32 %v1113, 7
      %v1115 = vsub.s32 %v1112, %v1114
      %v1116 = vrot.slane %v1100, %v1115
      %v1118 = vunpack.c.l.s4 1966171168
      %v1119 = vunpack.c.0.s8 %v1118
      %v1120 = vlaneseq
      %v1121 = vshrl.u32 %v1120, 7
      %v1122 = vsub.s32 %v1119, %v1121
      %v1123 = vrot.slane %v1101, %v1122
      %v1125 = vunpack.c.l.s4 1966171168
      %v1126 = vunpack.c.0.s8 %v1125
      %v1127 = vlaneseq
      %v1128 = vshrl.u32 %v1127, 7
      %v1129 = vsub.s32 %v1126, %v1128
      %v1130 = vrot.slane %v1102, %v1129
      %v1131 = vcombine.high %v1109, %v1109
      %v1132 = vcombine.high %v1116, %v1116
      %v1133 = vcombine.high %v1123, %v1123
      %v1134 = vcombine.high %v1130, %v1130
      %v1135 = vsel %vm293, %v1109, 0
      %1137 = vmatprep.subr.mxu0 0.0
      %1138 = vmatpush1.msra.mxu0 %v170
      %1139 = vmatprep.subr.mxu0 0.0
      %1140 = vmatpush1.msra.mxu0 %v298
      %1141 = vmatprep.subr.mxu0 0.0
      %1142 = vmatpush1.msra.mxu0 0.0
      %1143 = vmatprep.subr.mxu0 0.0
      %1144 = vmatpush1.msra.mxu0 0.0
      %1145 = vmatprep.subr.mxu0 0.0
      %1146 = vmatpush1.msra.mxu0 0.0
      %1147 = vmatprep.subr.mxu0 0.0
      %1148 = vmatpush1.msra.mxu0 0.0
      %1149 = vmatprep.subr.mxu0 0.0
      %1150 = vmatpush1.msra.mxu0 0.0
      %1151 = vmatprep.subr.mxu0 0.0
      %1152 = vmatpush1.msra.mxu0 0.0
      %1153 = vmatprep.subr.mxu0 0.0
      %1154 = vmatpush1.msra.mxu0 0.0
      %1155 = vmatprep.subr.mxu0 0.0
      %1156 = vmatpush1.msra.mxu0 0.0
      %1157 = vmatprep.subr.mxu0 0.0
      %1158 = vmatpush1.msra.mxu0 0.0
      %1159 = vmatprep.subr.mxu0 0.0
      %1160 = vmatpush1.msra.mxu0 0.0
      %1161 = vmatprep.subr.mxu0 0.0
      %1162 = vmatpush1.msra.mxu0 0.0
      %1163 = vmatprep.subr.mxu0 0.0
      %1164 = vmatpush1.msra.mxu0 0.0
      %1165 = vmatprep.subr.mxu0 0.0
      %1166 = vmatpush1.msra.mxu0 0.0
      %1167 = vmatprep.subr.mxu0 0.0
      %1168 = vmatpush1.msra.mxu0 0.0
      %1169 = vmatprep.subr.mxu0 0.0
      %1170 = vmatpush1.msra.mxu0 0.0
      %1171 = vmatprep.subr.mxu0 0.0
      %1172 = vmatpush1.msra.mxu0 0.0
      %1173 = vmatprep.subr.mxu0 0.0
      %1174 = vmatpush1.msra.mxu0 0.0
      %1175 = vmatprep.subr.mxu0 0.0
      %1176 = vmatpush1.msra.mxu0 0.0
      %1177 = vmatprep.subr.mxu0 0.0
      %1178 = vmatpush1.msra.mxu0 0.0
      %1179 = vmatprep.subr.mxu0 0.0
      %1180 = vmatpush1.msra.mxu0 0.0
      %1181 = vmatprep.subr.mxu0 0.0
      %1182 = vmatpush1.msra.mxu0 0.0
      %1183 = vmatprep.subr.mxu0 0.0
      %1184 = vmatpush1.msra.mxu0 0.0
      %1185 = vmatprep.subr.mxu0 0.0
      %1186 = vmatpush1.msra.mxu0 0.0
      %1187 = vmatprep.subr.mxu0 0.0
      %1188 = vmatpush1.msra.mxu0 0.0
      %1189 = vmatprep.subr.mxu0 0.0
      %1190 = vmatpush1.msra.mxu0 0.0
      %1191 = vmatprep.subr.mxu0 0.0
      %1192 = vmatpush1.msra.mxu0 0.0
      %1193 = vmatprep.subr.mxu0 0.0
      %1194 = vmatpush1.msra.mxu0 0.0
      %1195 = vmatprep.subr.mxu0 0.0
      %1196 = vmatpush1.msra.mxu0 0.0
      %1197 = vmatprep.subr.mxu0 0.0
      %1198 = vmatpush1.msra.mxu0 0.0
      %1199 = vmatprep.subr.mxu0 0.0
      %1200 = vmatpush1.msra.mxu0 0.0
      %1201 = vmatprep.mubr.f32.mxu0 0.0
      %1202 = vmatmul.mubr.f32.gmra.mrb[0].mxu0 %v1135
      %v1203 = vpop.f32.mrb[0].mxu0
      %v1204 = vadd.f32 0.0, %v1203
      %v1205 = vpop.f32.mrb[0].mxu0
      %1206 = vdwg.mxu0
      %v1207 = vsel %vm293, %v1123, 0
      %1209 = vmatprep.subr.mxu0 0.0
      %1210 = vmatpush1.msra.mxu0 %v172
      %1211 = vmatprep.subr.mxu0 0.0
      %1212 = vmatpush1.msra.mxu0 %v373
      %1213 = vmatprep.subr.mxu0 0.0
      %1214 = vmatpush1.msra.mxu0 0.0
      %1215 = vmatprep.subr.mxu0 0.0
      %1216 = vmatpush1.msra.mxu0 0.0
      %1217 = vmatprep.subr.mxu0 0.0
      %1218 = vmatpush1.msra.mxu0 0.0
      %1219 = vmatprep.subr.mxu0 0.0
      %1220 = vmatpush1.msra.mxu0 0.0
      %1221 = vmatprep.subr.mxu0 0.0
      %1222 = vmatpush1.msra.mxu0 0.0
      %1223 = vmatprep.subr.mxu0 0.0
      %1224 = vmatpush1.msra.mxu0 0.0
      %1225 = vmatprep.subr.mxu0 0.0
      %1226 = vmatpush1.msra.mxu0 0.0
      %1227 = vmatprep.subr.mxu0 0.0
      %1228 = vmatpush1.msra.mxu0 0.0
      %1229 = vmatprep.subr.mxu0 0.0
      %1230 = vmatpush1.msra.mxu0 0.0
      %1231 = vmatprep.subr.mxu0 0.0
      %1232 = vmatpush1.msra.mxu0 0.0
      %1233 = vmatprep.subr.mxu0 0.0
      %1234 = vmatpush1.msra.mxu0 0.0
      %1235 = vmatprep.subr.mxu0 0.0
      %1236 = vmatpush1.msra.mxu0 0.0
      %1237 = vmatprep.subr.mxu0 0.0
      %1238 = vmatpush1.msra.mxu0 0.0
      %1239 = vmatprep.subr.mxu0 0.0
      %1240 = vmatpush1.msra.mxu0 0.0
      %1241 = vmatprep.subr.mxu0 0.0
      %1242 = vmatpush1.msra.mxu0 0.0
      %1243 = vmatprep.subr.mxu0 0.0
      %1244 = vmatpush1.msra.mxu0 0.0
      %1245 = vmatprep.subr.mxu0 0.0
      %1246 = vmatpush1.msra.mxu0 0.0
      %1247 = vmatprep.subr.mxu0 0.0
      %1248 = vmatpush1.msra.mxu0 0.0
      %1249 = vmatprep.subr.mxu0 0.0
      %1250 = vmatpush1.msra.mxu0 0.0
      %1251 = vmatprep.subr.mxu0 0.0
      %1252 = vmatpush1.msra.mxu0 0.0
      %1253 = vmatprep.subr.mxu0 0.0
      %1254 = vmatpush1.msra.mxu0 0.0
      %1255 = vmatprep.subr.mxu0 0.0
      %1256 = vmatpush1.msra.mxu0 0.0
      %1257 = vmatprep.subr.mxu0 0.0
      %1258 = vmatpush1.msra.mxu0 0.0
      %1259 = vmatprep.subr.mxu0 0.0
      %1260 = vmatpush1.msra.mxu0 0.0
      %1261 = vmatprep.subr.mxu0 0.0
      %1262 = vmatpush1.msra.mxu0 0.0
      %1263 = vmatprep.subr.mxu0 0.0
      %1264 = vmatpush1.msra.mxu0 0.0
      %1265 = vmatprep.subr.mxu0 0.0
      %1266 = vmatpush1.msra.mxu0 0.0
      %1267 = vmatprep.subr.mxu0 0.0
      %1268 = vmatpush1.msra.mxu0 0.0
      %1269 = vmatprep.subr.mxu0 0.0
      %1270 = vmatpush1.msra.mxu0 0.0
      %1271 = vmatprep.subr.mxu0 0.0
      %1272 = vmatpush1.msra.mxu0 0.0
      %1273 = vmatprep.mubr.f32.mxu0 0.0
      %1274 = vmatmul.mubr.f32.gmra.mrb[0].mxu0 %v1207
      %v1275 = vpop.f32.mrb[0].mxu0
      %v1276 = vadd.f32 0.0, %v1275
      %v1277 = vpop.f32.mrb[0].mxu0
      %1278 = vdwg.mxu0
      %v1279 = vsel %vm293, %v1131, 0
      %1281 = vmatprep.subr.mxu0 0.0
      %1282 = vmatpush1.msra.mxu0 %v174
      %1283 = vmatprep.subr.mxu0 0.0
      %1284 = vmatpush1.msra.mxu0 %v448
      %1285 = vmatprep.subr.mxu0 0.0
      %1286 = vmatpush1.msra.mxu0 0.0
      %1287 = vmatprep.subr.mxu0 0.0
      %1288 = vmatpush1.msra.mxu0 0.0
      %1289 = vmatprep.subr.mxu0 0.0
      %1290 = vmatpush1.msra.mxu0 0.0
      %1291 = vmatprep.subr.mxu0 0.0
      %1292 = vmatpush1.msra.mxu0 0.0
      %1293 = vmatprep.subr.mxu0 0.0
      %1294 = vmatpush1.msra.mxu0 0.0
      %1295 = vmatprep.subr.mxu0 0.0
      %1296 = vmatpush1.msra.mxu0 0.0
      %1297 = vmatprep.subr.mxu0 0.0
      %1298 = vmatpush1.msra.mxu0 0.0
      %1299 = vmatprep.subr.mxu0 0.0
      %1300 = vmatpush1.msra.mxu0 0.0
      %1301 = vmatprep.subr.mxu0 0.0
      %1302 = vmatpush1.msra.mxu0 0.0
      %1303 = vmatprep.subr.mxu0 0.0
      %1304 = vmatpush1.msra.mxu0 0.0
      %1305 = vmatprep.subr.mxu0 0.0
      %1306 = vmatpush1.msra.mxu0 0.0
      %1307 = vmatprep.subr.mxu0 0.0
      %1308 = vmatpush1.msra.mxu0 0.0
      %1309 = vmatprep.subr.mxu0 0.0
      %1310 = vmatpush1.msra.mxu0 0.0
      %1311 = vmatprep.subr.mxu0 0.0
      %1312 = vmatpush1.msra.mxu0 0.0
      %1313 = vmatprep.subr.mxu0 0.0
      %1314 = vmatpush1.msra.mxu0 0.0
      %1315 = vmatprep.subr.mxu0 0.0
      %1316 = vmatpush1.msra.mxu0 0.0
      %1317 = vmatprep.subr.mxu0 0.0
      %1318 = vmatpush1.msra.mxu0 0.0
      %1319 = vmatprep.subr.mxu0 0.0
      %1320 = vmatpush1.msra.mxu0 0.0
      %1321 = vmatprep.subr.mxu0 0.0
      %1322 = vmatpush1.msra.mxu0 0.0
      %1323 = vmatprep.subr.mxu0 0.0
      %1324 = vmatpush1.msra.mxu0 0.0
      %1325 = vmatprep.subr.mxu0 0.0
      %1326 = vmatpush1.msra.mxu0 0.0
      %1327 = vmatprep.subr.mxu0 0.0
      %1328 = vmatpush1.msra.mxu0 0.0
      %1329 = vmatprep.subr.mxu0 0.0
      %1330 = vmatpush1.msra.mxu0 0.0
      %1331 = vmatprep.subr.mxu0 0.0
      %1332 = vmatpush1.msra.mxu0 0.0
      %1333 = vmatprep.subr.mxu0 0.0
      %1334 = vmatpush1.msra.mxu0 0.0
      %1335 = vmatprep.subr.mxu0 0.0
      %1336 = vmatpush1.msra.mxu0 0.0
      %1337 = vmatprep.subr.mxu0 0.0
      %1338 = vmatpush1.msra.mxu0 0.0
      %1339 = vmatprep.subr.mxu0 0.0
      %1340 = vmatpush1.msra.mxu0 0.0
      %1341 = vmatprep.subr.mxu0 0.0
      %1342 = vmatpush1.msra.mxu0 0.0
      %1343 = vmatprep.subr.mxu0 0.0
      %1344 = vmatpush1.msra.mxu0 0.0
      %1345 = vmatprep.mubr.f32.mxu0 0.0
      %1346 = vmatmul.mubr.f32.gmra.mrb[0].mxu0 %v1279
      %v1347 = vpop.f32.mrb[0].mxu0
      %v1348 = vadd.f32 0.0, %v1347
      %v1349 = vpop.f32.mrb[0].mxu0
      %1350 = vdwg.mxu0
      %v1351 = vsel %vm293, %v1133, 0
      %1353 = vmatprep.subr.mxu0 0.0
      %1354 = vmatpush1.msra.mxu0 %v176
      %1355 = vmatprep.subr.mxu0 0.0
      %1356 = vmatpush1.msra.mxu0 %v523
      %1357 = vmatprep.subr.mxu0 0.0
      %1358 = vmatpush1.msra.mxu0 0.0
      %1359 = vmatprep.subr.mxu0 0.0
      %1360 = vmatpush1.msra.mxu0 0.0
      %1361 = vmatprep.subr.mxu0 0.0
      %1362 = vmatpush1.msra.mxu0 0.0
      %1363 = vmatprep.subr.mxu0 0.0
      %1364 = vmatpush1.msra.mxu0 0.0
      %1365 = vmatprep.subr.mxu0 0.0
      %1366 = vmatpush1.msra.mxu0 0.0
      %1367 = vmatprep.subr.mxu0 0.0
      %1368 = vmatpush1.msra.mxu0 0.0
      %1369 = vmatprep.subr.mxu0 0.0
      %1370 = vmatpush1.msra.mxu0 0.0
      %1371 = vmatprep.subr.mxu0 0.0
      %1372 = vmatpush1.msra.mxu0 0.0
      %1373 = vmatprep.subr.mxu0 0.0
      %1374 = vmatpush1.msra.mxu0 0.0
      %1375 = vmatprep.subr.mxu0 0.0
      %1376 = vmatpush1.msra.mxu0 0.0
      %1377 = vmatprep.subr.mxu0 0.0
      %1378 = vmatpush1.msra.mxu0 0.0
      %1379 = vmatprep.subr.mxu0 0.0
      %1380 = vmatpush1.msra.mxu0 0.0
      %1381 = vmatprep.subr.mxu0 0.0
      %1382 = vmatpush1.msra.mxu0 0.0
      %1383 = vmatprep.subr.mxu0 0.0
      %1384 = vmatpush1.msra.mxu0 0.0
      %1385 = vmatprep.subr.mxu0 0.0
      %1386 = vmatpush1.msra.mxu0 0.0
      %1387 = vmatprep.subr.mxu0 0.0
      %1388 = vmatpush1.msra.mxu0 0.0
      %1389 = vmatprep.subr.mxu0 0.0
      %1390 = vmatpush1.msra.mxu0 0.0
      %1391 = vmatprep.subr.mxu0 0.0
      %1392 = vmatpush1.msra.mxu0 0.0
      %1393 = vmatprep.subr.mxu0 0.0
      %1394 = vmatpush1.msra.mxu0 0.0
      %1395 = vmatprep.subr.mxu0 0.0
      %1396 = vmatpush1.msra.mxu0 0.0
      %1397 = vmatprep.subr.mxu0 0.0
      %1398 = vmatpush1.msra.mxu0 0.0
      %1399 = vmatprep.subr.mxu0 0.0
      %1400 = vmatpush1.msra.mxu0 0.0
      %1401 = vmatprep.subr.mxu0 0.0
      %1402 = vmatpush1.msra.mxu0 0.0
      %1403 = vmatprep.subr.mxu0 0.0
      %1404 = vmatpush1.msra.mxu0 0.0
      %1405 = vmatprep.subr.mxu0 0.0
      %1406 = vmatpush1.msra.mxu0 0.0
      %1407 = vmatprep.subr.mxu0 0.0
      %1408 = vmatpush1.msra.mxu0 0.0
      %1409 = vmatprep.subr.mxu0 0.0
      %1410 = vmatpush1.msra.mxu0 0.0
      %1411 = vmatprep.subr.mxu0 0.0
      %1412 = vmatpush1.msra.mxu0 0.0
      %1413 = vmatprep.subr.mxu0 0.0
      %1414 = vmatpush1.msra.mxu0 0.0
      %1415 = vmatprep.subr.mxu0 0.0
      %1416 = vmatpush1.msra.mxu0 0.0
      %1417 = vmatprep.mubr.f32.mxu0 0.0
      %1418 = vmatmul.mubr.f32.gmra.mrb[0].mxu0 %v1351
      %v1419 = vpop.f32.mrb[0].mxu0
      %v1420 = vadd.f32 0.0, %v1419
      %v1421 = vpop.f32.mrb[0].mxu0
      %1422 = vdwg.mxu0
      %v1423 = vsel %vm293, %v1116, 0
      %1425 = vmatprep.subr.mxu0 0.0
      %1426 = vmatpush1.msra.mxu0 %v178
      %1427 = vmatprep.subr.mxu0 0.0
      %1428 = vmatpush1.msra.mxu0 %v598
      %1429 = vmatprep.subr.mxu0 0.0
      %1430 = vmatpush1.msra.mxu0 0.0
      %1431 = vmatprep.subr.mxu0 0.0
      %1432 = vmatpush1.msra.mxu0 0.0
      %1433 = vmatprep.subr.mxu0 0.0
      %1434 = vmatpush1.msra.mxu0 0.0
      %1435 = vmatprep.subr.mxu0 0.0
      %1436 = vmatpush1.msra.mxu0 0.0
      %1437 = vmatprep.subr.mxu0 0.0
      %1438 = vmatpush1.msra.mxu0 0.0
      %1439 = vmatprep.subr.mxu0 0.0
      %1440 = vmatpush1.msra.mxu0 0.0
      %1441 = vmatprep.subr.mxu0 0.0
      %1442 = vmatpush1.msra.mxu0 0.0
      %1443 = vmatprep.subr.mxu0 0.0
      %1444 = vmatpush1.msra.mxu0 0.0
      %1445 = vmatprep.subr.mxu0 0.0
      %1446 = vmatpush1.msra.mxu0 0.0
      %1447 = vmatprep.subr.mxu0 0.0
      %1448 = vmatpush1.msra.mxu0 0.0
      %1449 = vmatprep.subr.mxu0 0.0
      %1450 = vmatpush1.msra.mxu0 0.0
      %1451 = vmatprep.subr.mxu0 0.0
      %1452 = vmatpush1.msra.mxu0 0.0
      %1453 = vmatprep.subr.mxu0 0.0
      %1454 = vmatpush1.msra.mxu0 0.0
      %1455 = vmatprep.subr.mxu0 0.0
      %1456 = vmatpush1.msra.mxu0 0.0
      %1457 = vmatprep.subr.mxu0 0.0
      %1458 = vmatpush1.msra.mxu0 0.0
      %1459 = vmatprep.subr.mxu0 0.0
      %1460 = vmatpush1.msra.mxu0 0.0
      %1461 = vmatprep.subr.mxu0 0.0
      %1462 = vmatpush1.msra.mxu0 0.0
      %1463 = vmatprep.subr.mxu0 0.0
      %1464 = vmatpush1.msra.mxu0 0.0
      %1465 = vmatprep.subr.mxu0 0.0
      %1466 = vmatpush1.msra.mxu0 0.0
      %1467 = vmatprep.subr.mxu0 0.0
      %1468 = vmatpush1.msra.mxu0 0.0
      %1469 = vmatprep.subr.mxu0 0.0
      %1470 = vmatpush1.msra.mxu0 0.0
      %1471 = vmatprep.subr.mxu0 0.0
      %1472 = vmatpush1.msra.mxu0 0.0
      %1473 = vmatprep.subr.mxu0 0.0
      %1474 = vmatpush1.msra.mxu0 0.0
      %1475 = vmatprep.subr.mxu0 0.0
      %1476 = vmatpush1.msra.mxu0 0.0
      %1477 = vmatprep.subr.mxu0 0.0
      %1478 = vmatpush1.msra.mxu0 0.0
      %1479 = vmatprep.subr.mxu0 0.0
      %1480 = vmatpush1.msra.mxu0 0.0
      %1481 = vmatprep.subr.mxu0 0.0
      %1482 = vmatpush1.msra.mxu0 0.0
      %1483 = vmatprep.subr.mxu0 0.0
      %1484 = vmatpush1.msra.mxu0 0.0
      %1485 = vmatprep.subr.mxu0 0.0
      %1486 = vmatpush1.msra.mxu0 0.0
      %1487 = vmatprep.subr.mxu0 0.0
      %1488 = vmatpush1.msra.mxu0 0.0
      %1489 = vmatprep.mubr.f32.mxu0 0.0
      %1490 = vmatmul.mubr.f32.gmra.mrb[0].mxu0 %v1423
      %v1491 = vpop.f32.mrb[0].mxu0
      %v1492 = vadd.f32 0.0, %v1491
      %v1493 = vpop.f32.mrb[0].mxu0
      %1494 = vdwg.mxu0
      %v1495 = vsel %vm293, %v1130, 0
      %1497 = vmatprep.subr.mxu0 0.0
      %1498 = vmatpush1.msra.mxu0 %v180
      %1499 = vmatprep.subr.mxu0 0.0
      %1500 = vmatpush1.msra.mxu0 %v673
      %1501 = vmatprep.subr.mxu0 0.0
      %1502 = vmatpush1.msra.mxu0 0.0
      %1503 = vmatprep.subr.mxu0 0.0
      %1504 = vmatpush1.msra.mxu0 0.0
      %1505 = vmatprep.subr.mxu0 0.0
      %1506 = vmatpush1.msra.mxu0 0.0
      %1507 = vmatprep.subr.mxu0 0.0
      %1508 = vmatpush1.msra.mxu0 0.0
      %1509 = vmatprep.subr.mxu0 0.0
      %1510 = vmatpush1.msra.mxu0 0.0
      %1511 = vmatprep.subr.mxu0 0.0
      %1512 = vmatpush1.msra.mxu0 0.0
      %1513 = vmatprep.subr.mxu0 0.0
      %1514 = vmatpush1.msra.mxu0 0.0
      %1515 = vmatprep.subr.mxu0 0.0
      %1516 = vmatpush1.msra.mxu0 0.0
      %1517 = vmatprep.subr.mxu0 0.0
      %1518 = vmatpush1.msra.mxu0 0.0
      %1519 = vmatprep.subr.mxu0 0.0
      %1520 = vmatpush1.msra.mxu0 0.0
      %1521 = vmatprep.subr.mxu0 0.0
      %1522 = vmatpush1.msra.mxu0 0.0
      %1523 = vmatprep.subr.mxu0 0.0
      %1524 = vmatpush1.msra.mxu0 0.0
      %1525 = vmatprep.subr.mxu0 0.0
      %1526 = vmatpush1.msra.mxu0 0.0
      %1527 = vmatprep.subr.mxu0 0.0
      %1528 = vmatpush1.msra.mxu0 0.0
      %1529 = vmatprep.subr.mxu0 0.0
      %1530 = vmatpush1.msra.mxu0 0.0
      %1531 = vmatprep.subr.mxu0 0.0
      %1532 = vmatpush1.msra.mxu0 0.0
      %1533 = vmatprep.subr.mxu0 0.0
      %1534 = vmatpush1.msra.mxu0 0.0
      %1535 = vmatprep.subr.mxu0 0.0
      %1536 = vmatpush1.msra.mxu0 0.0
      %1537 = vmatprep.subr.mxu0 0.0
      %1538 = vmatpush1.msra.mxu0 0.0
      %1539 = vmatprep.subr.mxu0 0.0
      %1540 = vmatpush1.msra.mxu0 0.0
      %1541 = vmatprep.subr.mxu0 0.0
      %1542 = vmatpush1.msra.mxu0 0.0
      %1543 = vmatprep.subr.mxu0 0.0
      %1544 = vmatpush1.msra.mxu0 0.0
      %1545 = vmatprep.subr.mxu0 0.0
      %1546 = vmatpush1.msra.mxu0 0.0
      %1547 = vmatprep.subr.mxu0 0.0
      %1548 = vmatpush1.msra.mxu0 0.0
      %1549 = vmatprep.subr.mxu0 0.0
      %1550 = vmatpush1.msra.mxu0 0.0
      %1551 = vmatprep.subr.mxu0 0.0
      %1552 = vmatpush1.msra.mxu0 0.0
      %1553 = vmatprep.subr.mxu0 0.0
      %1554 = vmatpush1.msra.mxu0 0.0
      %1555 = vmatprep.subr.mxu0 0.0
      %1556 = vmatpush1.msra.mxu0 0.0
      %1557 = vmatprep.subr.mxu0 0.0
      %1558 = vmatpush1.msra.mxu0 0.0
      %1559 = vmatprep.subr.mxu0 0.0
      %1560 = vmatpush1.msra.mxu0 0.0
      %1561 = vmatprep.mubr.f32.mxu0 0.0
      %1562 = vmatmul.mubr.f32.gmra.mrb[0].mxu0 %v1495
      %v1563 = vpop.f32.mrb[0].mxu0
      %v1564 = vadd.f32 0.0, %v1563
      %v1565 = vpop.f32.mrb[0].mxu0
      %1566 = vdwg.mxu0
      %v1567 = vsel %vm293, %v1132, 0
      %1569 = vmatprep.subr.mxu0 0.0
      %1570 = vmatpush1.msra.mxu0 %v182
      %1571 = vmatprep.subr.mxu0 0.0
      %1572 = vmatpush1.msra.mxu0 %v748
      %1573 = vmatprep.subr.mxu0 0.0
      %1574 = vmatpush1.msra.mxu0 0.0
      %1575 = vmatprep.subr.mxu0 0.0
      %1576 = vmatpush1.msra.mxu0 0.0
      %1577 = vmatprep.subr.mxu0 0.0
      %1578 = vmatpush1.msra.mxu0 0.0
      %1579 = vmatprep.subr.mxu0 0.0
      %1580 = vmatpush1.msra.mxu0 0.0
      %1581 = vmatprep.subr.mxu0 0.0
      %1582 = vmatpush1.msra.mxu0 0.0
      %1583 = vmatprep.subr.mxu0 0.0
      %1584 = vmatpush1.msra.mxu0 0.0
      %1585 = vmatprep.subr.mxu0 0.0
      %1586 = vmatpush1.msra.mxu0 0.0
      %1587 = vmatprep.subr.mxu0 0.0
      %1588 = vmatpush1.msra.mxu0 0.0
      %1589 = vmatprep.subr.mxu0 0.0
      %1590 = vmatpush1.msra.mxu0 0.0
      %1591 = vmatprep.subr.mxu0 0.0
      %1592 = vmatpush1.msra.mxu0 0.0
      %1593 = vmatprep.subr.mxu0 0.0
      %1594 = vmatpush1.msra.mxu0 0.0
      %1595 = vmatprep.subr.mxu0 0.0
      %1596 = vmatpush1.msra.mxu0 0.0
      %1597 = vmatprep.subr.mxu0 0.0
      %1598 = vmatpush1.msra.mxu0 0.0
      %1599 = vmatprep.subr.mxu0 0.0
      %1600 = vmatpush1.msra.mxu0 0.0
      %1601 = vmatprep.subr.mxu0 0.0
      %1602 = vmatpush1.msra.mxu0 0.0
      %1603 = vmatprep.subr.mxu0 0.0
      %1604 = vmatpush1.msra.mxu0 0.0
      %1605 = vmatprep.subr.mxu0 0.0
      %1606 = vmatpush1.msra.mxu0 0.0
      %1607 = vmatprep.subr.mxu0 0.0
      %1608 = vmatpush1.msra.mxu0 0.0
      %1609 = vmatprep.subr.mxu0 0.0
      %1610 = vmatpush1.msra.mxu0 0.0
      %1611 = vmatprep.subr.mxu0 0.0
      %1612 = vmatpush1.msra.mxu0 0.0
      %1613 = vmatprep.subr.mxu0 0.0
      %1614 = vmatpush1.msra.mxu0 0.0
      %1615 = vmatprep.subr.mxu0 0.0
      %1616 = vmatpush1.msra.mxu0 0.0
      %1617 = vmatprep.subr.mxu0 0.0
      %1618 = vmatpush1.msra.mxu0 0.0
      %1619 = vmatprep.subr.mxu0 0.0
      %1620 = vmatpush1.msra.mxu0 0.0
      %1621 = vmatprep.subr.mxu0 0.0
      %1622 = vmatpush1.msra.mxu0 0.0
      %1623 = vmatprep.subr.mxu0 0.0
      %1624 = vmatpush1.msra.mxu0 0.0
      %1625 = vmatprep.subr.mxu0 0.0
      %1626 = vmatpush1.msra.mxu0 0.0
      %1627 = vmatprep.subr.mxu0 0.0
      %1628 = vmatpush1.msra.mxu0 0.0
      %1629 = vmatprep.subr.mxu0 0.0
      %1630 = vmatpush1.msra.mxu0 0.0
      %1631 = vmatprep.subr.mxu0 0.0
      %1632 = vmatpush1.msra.mxu0 0.0
      %1633 = vmatprep.mubr.f32.mxu0 0.0
      %1634 = vmatmul.mubr.f32.gmra.mrb[0].mxu0 %v1567
      %v1635 = vpop.f32.mrb[0].mxu0
      %v1636 = vadd.f32 0.0, %v1635
      %v1637 = vpop.f32.mrb[0].mxu0
      %1638 = vdwg.mxu0
      %v1639 = vsel %vm293, %v1134, 0
      %1641 = vmatprep.subr.mxu0 0.0
      %1642 = vmatpush1.msra.mxu0 %v184
      %1643 = vmatprep.subr.mxu0 0.0
      %1644 = vmatpush1.msra.mxu0 %v823
      %1645 = vmatprep.subr.mxu0 0.0
      %1646 = vmatpush1.msra.mxu0 0.0
      %1647 = vmatprep.subr.mxu0 0.0
      %1648 = vmatpush1.msra.mxu0 0.0
      %1649 = vmatprep.subr.mxu0 0.0
      %1650 = vmatpush1.msra.mxu0 0.0
      %1651 = vmatprep.subr.mxu0 0.0
      %1652 = vmatpush1.msra.mxu0 0.0
      %1653 = vmatprep.subr.mxu0 0.0
      %1654 = vmatpush1.msra.mxu0 0.0
      %1655 = vmatprep.subr.mxu0 0.0
      %1656 = vmatpush1.msra.mxu0 0.0
      %1657 = vmatprep.subr.mxu0 0.0
      %1658 = vmatpush1.msra.mxu0 0.0
      %1659 = vmatprep.subr.mxu0 0.0
      %1660 = vmatpush1.msra.mxu0 0.0
      %1661 = vmatprep.subr.mxu0 0.0
      %1662 = vmatpush1.msra.mxu0 0.0
      %1663 = vmatprep.subr.mxu0 0.0
      %1664 = vmatpush1.msra.mxu0 0.0
      %1665 = vmatprep.subr.mxu0 0.0
      %1666 = vmatpush1.msra.mxu0 0.0
      %1667 = vmatprep.subr.mxu0 0.0
      %1668 = vmatpush1.msra.mxu0 0.0
      %1669 = vmatprep.subr.mxu0 0.0
      %1670 = vmatpush1.msra.mxu0 0.0
      %1671 = vmatprep.subr.mxu0 0.0
      %1672 = vmatpush1.msra.mxu0 0.0
      %1673 = vmatprep.subr.mxu0 0.0
      %1674 = vmatpush1.msra.mxu0 0.0
      %1675 = vmatprep.subr.mxu0 0.0
      %1676 = vmatpush1.msra.mxu0 0.0
      %1677 = vmatprep.subr.mxu0 0.0
      %1678 = vmatpush1.msra.mxu0 0.0
      %1679 = vmatprep.subr.mxu0 0.0
      %1680 = vmatpush1.msra.mxu0 0.0
      %1681 = vmatprep.subr.mxu0 0.0
      %1682 = vmatpush1.msra.mxu0 0.0
      %1683 = vmatprep.subr.mxu0 0.0
      %1684 = vmatpush1.msra.mxu0 0.0
      %1685 = vmatprep.subr.mxu0 0.0
      %1686 = vmatpush1.msra.mxu0 0.0
      %1687 = vmatprep.subr.mxu0 0.0
      %1688 = vmatpush1.msra.mxu0 0.0
      %1689 = vmatprep.subr.mxu0 0.0
      %1690 = vmatpush1.msra.mxu0 0.0
      %1691 = vmatprep.subr.mxu0 0.0
      %1692 = vmatpush1.msra.mxu0 0.0
      %1693 = vmatprep.subr.mxu0 0.0
      %1694 = vmatpush1.msra.mxu0 0.0
      %1695 = vmatprep.subr.mxu0 0.0
      %1696 = vmatpush1.msra.mxu0 0.0
      %1697 = vmatprep.subr.mxu0 0.0
      %1698 = vmatpush1.msra.mxu0 0.0
      %1699 = vmatprep.subr.mxu0 0.0
      %1700 = vmatpush1.msra.mxu0 0.0
      %1701 = vmatprep.subr.mxu0 0.0
      %1702 = vmatpush1.msra.mxu0 0.0
      %1703 = vmatprep.subr.mxu0 0.0
      %1704 = vmatpush1.msra.mxu0 0.0
      %1705 = vmatprep.mubr.f32.mxu0 0.0
      %1706 = vmatmul.mubr.f32.gmra.mrb[0].mxu0 %v1639
      %v1707 = vpop.f32.mrb[0].mxu0
      %v1708 = vadd.f32 0.0, %v1707
      %v1709 = vpop.f32.mrb[0].mxu0
      %1710 = vdwg.mxu0
      %1711 = vrot.lane.b32.xlu0 %v188, 120
      %v1712 = vpop.permute.xlu0 %1711
      %1713 = vrot.lane.b32.xlu0 %v188, 56
      %v1714 = vpop.permute.xlu0 %1713
      %v1723 = vrot.slane %v1276, 7
      %v1724 = vsel %vm906, %v1723, %v1204
      %v1725 = vrot.slane %v1348, 6
      %v1726 = vsel %vm909, %v1725, %v1724
      %v1727 = vrot.slane %v1420, 5
      %v1728 = vsel %vm912, %v1727, %v1726
      %v1729 = vrot.slane %v1492, 4
      %v1730 = vsel %vm915, %v1729, %v1728
      %v1731 = vrot.slane %v1564, 3
      %v1732 = vsel %vm918, %v1731, %v1730
      %v1733 = vrot.slane %v1636, 2
      %v1734 = vsel %vm921, %v1733, %v1732
      %v1735 = vrot.slane %v1708, 1
      %v1736 = vsel %vm924, %v1735, %v1734
      %v1739 = vsel %vm196, %v1712, 0
      %v1742 = vsel %vm196, %v1714, 0
      %1744 = vmatprep.subr.bf16.mxu0 0
      %1745 = vmatpush1.bf16.xpose.msra.mxu0 %v1742
      %1746 = vmatprep.subr.bf16.mxu0 0
      %1747 = vmatpush1.bf16.xpose.msra.mxu0 0
      %1748 = vmatprep.subr.bf16.mxu0 0
      %1749 = vmatpush1.bf16.xpose.msra.mxu0 0
      %1750 = vmatprep.subr.bf16.mxu0 0
      %1751 = vmatpush1.bf16.xpose.msra.mxu0 0
      %1752 = vmatprep.subr.bf16.mxu0 0
      %1753 = vmatpush1.bf16.xpose.msra.mxu0 0
      %1754 = vmatprep.subr.bf16.mxu0 0
      %1755 = vmatpush1.bf16.xpose.msra.mxu0 0
      %1756 = vmatprep.subr.bf16.mxu0 0
      %1757 = vmatpush1.bf16.xpose.msra.mxu0 0
      %1758 = vmatprep.subr.bf16.mxu0 0
      %1759 = vmatpush1.bf16.xpose.msra.mxu0 0
      %1760 = vmatprep.subr.bf16.mxu0 0
      %1761 = vmatpush1.bf16.xpose.msra.mxu0 0
      %1762 = vmatprep.subr.bf16.mxu0 0
      %1763 = vmatpush1.bf16.xpose.msra.mxu0 0
      %1764 = vmatprep.subr.bf16.mxu0 0
      %1765 = vmatpush1.bf16.xpose.msra.mxu0 0
      %1766 = vmatprep.subr.bf16.mxu0 0
      %1767 = vmatpush1.bf16.xpose.msra.mxu0 0
      %1768 = vmatprep.subr.bf16.mxu0 0
      %1769 = vmatpush1.bf16.xpose.msra.mxu0 0
      %1770 = vmatprep.subr.bf16.mxu0 0
      %1771 = vmatpush1.bf16.xpose.msra.mxu0 0
      %1772 = vmatprep.subr.bf16.mxu0 0
      %1773 = vmatpush1.bf16.xpose.msra.mxu0 0
      %1774 = vmatprep.subr.bf16.mxu0 0
      %1775 = vmatpush1.bf16.xpose.msra.mxu0 0
      %1776 = vmatprep.mubr.bf16.mxu0 0
      %1777 = vmatmul.mubr.bf16.gmra.mrb[0].mxu0 %v1739
      %v1778 = vpop.f32.mrb[0].mxu0
      %v1779 = vadd.f32 %v1736, %v1778
      %v1780 = vpop.f32.mrb[0].mxu0
      %v1781 = vpop.f32.mrb[0].mxu0
      %v1782 = vpop.f32.mrb[0].mxu0
      %1783 = vdwg.mxu0
      %v1784 = vmul.f32 %v1779, 0.35355338
      %v1785 = vsel %vm196, %v1784, -inf
      %1786 = vmax.xlane.f32.xlu0 %v1785
      %v1787 = vpop.xlane.xlu0 %1786
      %v1788 = vsub.f32 %v1784, %v1787
      %v1789 = vmul.f32 %v1788, 1.442695
      %v1790 = vpow.pop %v1789
      %v1791 = vsel %vm196, %v1790, 0.0
      %1792 = vadd.xlane.f32.xlu0 %v1791
      %v1793 = vpop.xlane.xlu0 %1792
      %v1794 = vrcp.pop %v1793
      %v1795 = vmul.f32 %v1790, %v1794
      %v1796 = vpack.c.bf16 %v1795, %v1795
      %1797 = vrot.lane.b32.xlu0 %v188, 24
      %v1798 = vpop.permute.xlu0 %1797
      %v1800 = vsel %vm196, %v1796, 0
      %v1803 = vsel %vm991, %v1798, 0
      %1805 = vmatprep.subr.bf16.mxu0 0
      %1806 = vmatpush1.bf16.msra.mxu0 %v1803
      %1807 = vmatprep.subr.bf16.mxu0 0
      %1808 = vmatpush1.bf16.msra.mxu0 0
      %1809 = vmatprep.subr.bf16.mxu0 0
      %1810 = vmatpush1.bf16.msra.mxu0 0
      %1811 = vmatprep.subr.bf16.mxu0 0
      %1812 = vmatpush1.bf16.msra.mxu0 0
      %1813 = vmatprep.subr.bf16.mxu0 0
      %1814 = vmatpush1.bf16.msra.mxu0 0
      %1815 = vmatprep.subr.bf16.mxu0 0
      %1816 = vmatpush1.bf16.msra.mxu0 0
      %1817 = vmatprep.subr.bf16.mxu0 0
      %1818 = vmatpush1.bf16.msra.mxu0 0
      %1819 = vmatprep.subr.bf16.mxu0 0
      %1820 = vmatpush1.bf16.msra.mxu0 0
      %1821 = vmatprep.subr.bf16.mxu0 0
      %1822 = vmatpush1.bf16.msra.mxu0 0
      %1823 = vmatprep.subr.bf16.mxu0 0
      %1824 = vmatpush1.bf16.msra.mxu0 0
      %1825 = vmatprep.subr.bf16.mxu0 0
      %1826 = vmatpush1.bf16.msra.mxu0 0
      %1827 = vmatprep.subr.bf16.mxu0 0
      %1828 = vmatpush1.bf16.msra.mxu0 0
      %1829 = vmatprep.subr.bf16.mxu0 0
      %1830 = vmatpush1.bf16.msra.mxu0 0
      %1831 = vmatprep.subr.bf16.mxu0 0
      %1832 = vmatpush1.bf16.msra.mxu0 0
      %1833 = vmatprep.subr.bf16.mxu0 0
      %1834 = vmatpush1.bf16.msra.mxu0 0
      %1835 = vmatprep.subr.bf16.mxu0 0
      %1836 = vmatpush1.bf16.msra.mxu0 0
      %1837 = vmatprep.mubr.bf16.mxu0 0
      %1838 = vmatmul.mubr.bf16.gmra.mrb[0].mxu0 %v1800
      %v1839 = vpop.f32.mrb[0].mxu0
      %v1840 = vadd.f32 0.0, %v1839
      %v1841 = vpop.f32.mrb[0].mxu0
      %v1842 = vpop.f32.mrb[0].mxu0
      %v1843 = vpop.f32.mrb[0].mxu0
      %1844 = vdwg.mxu0
      %1845 = vrot.lane.b32.xlu0 %v188, 80
      %v1846 = vpop.permute.xlu0 %1845
      %1847 = vrot.lane.b32.xlu0 %v195, 112
      %v1848 = vpop.permute.xlu0 %1847
      %v1850 = vsel %vm196, %v1846, 0
      %v1853 = vsel %vm196, %v1848, 0
      %1855 = vmatprep.subr.bf16.mxu0 0
      %1856 = vmatpush1.bf16.xpose.msra.mxu0 %v1853
      %1857 = vmatprep.subr.bf16.mxu0 0
      %1858 = vmatpush1.bf16.xpose.msra.mxu0 0
      %1859 = vmatprep.subr.bf16.mxu0 0
      %1860 = vmatpush1.bf16.xpose.msra.mxu0 0
      %1861 = vmatprep.subr.bf16.mxu0 0
      %1862 = vmatpush1.bf16.xpose.msra.mxu0 0
      %1863 = vmatprep.subr.bf16.mxu0 0
      %1864 = vmatpush1.bf16.xpose.msra.mxu0 0
      %1865 = vmatprep.subr.bf16.mxu0 0
      %1866 = vmatpush1.bf16.xpose.msra.mxu0 0
      %1867 = vmatprep.subr.bf16.mxu0 0
      %1868 = vmatpush1.bf16.xpose.msra.mxu0 0
      %1869 = vmatprep.subr.bf16.mxu0 0
      %1870 = vmatpush1.bf16.xpose.msra.mxu0 0
      %1871 = vmatprep.subr.bf16.mxu0 0
      %1872 = vmatpush1.bf16.xpose.msra.mxu0 0
      %1873 = vmatprep.subr.bf16.mxu0 0
      %1874 = vmatpush1.bf16.xpose.msra.mxu0 0
      %1875 = vmatprep.subr.bf16.mxu0 0
      %1876 = vmatpush1.bf16.xpose.msra.mxu0 0
      %1877 = vmatprep.subr.bf16.mxu0 0
      %1878 = vmatpush1.bf16.xpose.msra.mxu0 0
      %1879 = vmatprep.subr.bf16.mxu0 0
      %1880 = vmatpush1.bf16.xpose.msra.mxu0 0
      %1881 = vmatprep.subr.bf16.mxu0 0
      %1882 = vmatpush1.bf16.xpose.msra.mxu0 0
      %1883 = vmatprep.subr.bf16.mxu0 0
      %1884 = vmatpush1.bf16.xpose.msra.mxu0 0
      %1885 = vmatprep.subr.bf16.mxu0 0
      %1886 = vmatpush1.bf16.xpose.msra.mxu0 0
      %1887 = vmatprep.mubr.bf16.mxu0 0
      %1888 = vmatmul.mubr.bf16.gmra.mrb[0].mxu0 %v1850
      %v1889 = vpop.f32.mrb[0].mxu0
      %v1890 = vadd.f32 0.0, %v1889
      %v1891 = vpop.f32.mrb[0].mxu0
      %v1892 = vpop.f32.mrb[0].mxu0
      %v1893 = vpop.f32.mrb[0].mxu0
      %1894 = vdwg.mxu0
      %v1896 = vcombine.high %v1890, %v1890
      %v1898 = vunpack.c.l.s4 1966171168
      %v1899 = vunpack.c.0.s8 %v1898
      %v1900 = vlaneseq
      %v1901 = vshrl.u32 %v1900, 7
      %v1902 = vsub.s32 %v1899, %v1901
      %v1903 = vrot.slane %v1890, %v1902
      %v1905 = vunpack.c.l.s4 1966171168
      %v1906 = vunpack.c.0.s8 %v1905
      %v1907 = vlaneseq
      %v1908 = vshrl.u32 %v1907, 7
      %v1909 = vsub.s32 %v1906, %v1908
      %v1910 = vrot.slane %v1896, %v1909
      %v1911 = vcombine.high %v1903, %v1903
      %v1912 = vcombine.high %v1910, %v1910
      %v1914 = vunpack.c.l.s4 1966171168
      %v1915 = vunpack.c.0.s8 %v1914
      %v1916 = vlaneseq
      %v1917 = vshrl.u32 %v1916, 7
      %v1918 = vsub.s32 %v1915, %v1917
      %v1919 = vrot.slane %v1903, %v1918
      %v1921 = vunpack.c.l.s4 1966171168
      %v1922 = vunpack.c.0.s8 %v1921
      %v1923 = vlaneseq
      %v1924 = vshrl.u32 %v1923, 7
      %v1925 = vsub.s32 %v1922, %v1924
      %v1926 = vrot.slane %v1910, %v1925
      %v1928 = vunpack.c.l.s4 1966171168
      %v1929 = vunpack.c.0.s8 %v1928
      %v1930 = vlaneseq
      %v1931 = vshrl.u32 %v1930, 7
      %v1932 = vsub.s32 %v1929, %v1931
      %v1933 = vrot.slane %v1911, %v1932
      %v1935 = vunpack.c.l.s4 1966171168
      %v1936 = vunpack.c.0.s8 %v1935
      %v1937 = vlaneseq
      %v1938 = vshrl.u32 %v1937, 7
      %v1939 = vsub.s32 %v1936, %v1938
      %v1940 = vrot.slane %v1912, %v1939
      %v1941 = vcombine.high %v1919, %v1919
      %v1942 = vcombine.high %v1926, %v1926
      %v1943 = vcombine.high %v1933, %v1933
      %v1944 = vcombine.high %v1940, %v1940
      %v1945 = vsel %vm293, %v1919, 0
      %1947 = vmatprep.subr.mxu0 0.0
      %1948 = vmatpush1.msra.mxu0 %v170
      %1949 = vmatprep.subr.mxu0 0.0
      %1950 = vmatpush1.msra.mxu0 %v298
      %1951 = vmatprep.subr.mxu0 0.0
      %1952 = vmatpush1.msra.mxu0 0.0
      %1953 = vmatprep.subr.mxu0 0.0
      %1954 = vmatpush1.msra.mxu0 0.0
      %1955 = vmatprep.subr.mxu0 0.0
      %1956 = vmatpush1.msra.mxu0 0.0
      %1957 = vmatprep.subr.mxu0 0.0
      %1958 = vmatpush1.msra.mxu0 0.0
      %1959 = vmatprep.subr.mxu0 0.0
      %1960 = vmatpush1.msra.mxu0 0.0
      %1961 = vmatprep.subr.mxu0 0.0
      %1962 = vmatpush1.msra.mxu0 0.0
      %1963 = vmatprep.subr.mxu0 0.0
      %1964 = vmatpush1.msra.mxu0 0.0
      %1965 = vmatprep.subr.mxu0 0.0
      %1966 = vmatpush1.msra.mxu0 0.0
      %1967 = vmatprep.subr.mxu0 0.0
      %1968 = vmatpush1.msra.mxu0 0.0
      %1969 = vmatprep.subr.mxu0 0.0
      %1970 = vmatpush1.msra.mxu0 0.0
      %1971 = vmatprep.subr.mxu0 0.0
      %1972 = vmatpush1.msra.mxu0 0.0
      %1973 = vmatprep.subr.mxu0 0.0
      %1974 = vmatpush1.msra.mxu0 0.0
      %1975 = vmatprep.subr.mxu0 0.0
      %1976 = vmatpush1.msra.mxu0 0.0
      %1977 = vmatprep.subr.mxu0 0.0
      %1978 = vmatpush1.msra.mxu0 0.0
      %1979 = vmatprep.subr.mxu0 0.0
      %1980 = vmatpush1.msra.mxu0 0.0
      %1981 = vmatprep.subr.mxu0 0.0
      %1982 = vmatpush1.msra.mxu0 0.0
      %1983 = vmatprep.subr.mxu0 0.0
      %1984 = vmatpush1.msra.mxu0 0.0
      %1985 = vmatprep.subr.mxu0 0.0
      %1986 = vmatpush1.msra.mxu0 0.0
      %1987 = vmatprep.subr.mxu0 0.0
      %1988 = vmatpush1.msra.mxu0 0.0
      %1989 = vmatprep.subr.mxu0 0.0
      %1990 = vmatpush1.msra.mxu0 0.0
      %1991 = vmatprep.subr.mxu0 0.0
      %1992 = vmatpush1.msra.mxu0 0.0
      %1993 = vmatprep.subr.mxu0 0.0
      %1994 = vmatpush1.msra.mxu0 0.0
      %1995 = vmatprep.subr.mxu0 0.0
      %1996 = vmatpush1.msra.mxu0 0.0
      %1997 = vmatprep.subr.mxu0 0.0
      %1998 = vmatpush1.msra.mxu0 0.0
      %1999 = vmatprep.subr.mxu0 0.0
      %2000 = vmatpush1.msra.mxu0 0.0
      %2001 = vmatprep.subr.mxu0 0.0
      %2002 = vmatpush1.msra.mxu0 0.0
      %2003 = vmatprep.subr.mxu0 0.0
      %2004 = vmatpush1.msra.mxu0 0.0
      %2005 = vmatprep.subr.mxu0 0.0
      %2006 = vmatpush1.msra.mxu0 0.0
      %2007 = vmatprep.subr.mxu0 0.0
      %2008 = vmatpush1.msra.mxu0 0.0
      %2009 = vmatprep.subr.mxu0 0.0
      %2010 = vmatpush1.msra.mxu0 0.0
      %2011 = vmatprep.mubr.f32.mxu0 0.0
      %2012 = vmatmul.mubr.f32.gmra.mrb[0].mxu0 %v1945
      %v2013 = vpop.f32.mrb[0].mxu0
      %v2014 = vadd.f32 0.0, %v2013
      %v2015 = vpop.f32.mrb[0].mxu0
      %2016 = vdwg.mxu0
      %v2017 = vsel %vm293, %v1933, 0
      %2019 = vmatprep.subr.mxu0 0.0
      %2020 = vmatpush1.msra.mxu0 %v172
      %2021 = vmatprep.subr.mxu0 0.0
      %2022 = vmatpush1.msra.mxu0 %v373
      %2023 = vmatprep.subr.mxu0 0.0
      %2024 = vmatpush1.msra.mxu0 0.0
      %2025 = vmatprep.subr.mxu0 0.0
      %2026 = vmatpush1.msra.mxu0 0.0
      %2027 = vmatprep.subr.mxu0 0.0
      %2028 = vmatpush1.msra.mxu0 0.0
      %2029 = vmatprep.subr.mxu0 0.0
      %2030 = vmatpush1.msra.mxu0 0.0
      %2031 = vmatprep.subr.mxu0 0.0
      %2032 = vmatpush1.msra.mxu0 0.0
      %2033 = vmatprep.subr.mxu0 0.0
      %2034 = vmatpush1.msra.mxu0 0.0
      %2035 = vmatprep.subr.mxu0 0.0
      %2036 = vmatpush1.msra.mxu0 0.0
      %2037 = vmatprep.subr.mxu0 0.0
      %2038 = vmatpush1.msra.mxu0 0.0
      %2039 = vmatprep.subr.mxu0 0.0
      %2040 = vmatpush1.msra.mxu0 0.0
      %2041 = vmatprep.subr.mxu0 0.0
      %2042 = vmatpush1.msra.mxu0 0.0
      %2043 = vmatprep.subr.mxu0 0.0
      %2044 = vmatpush1.msra.mxu0 0.0
      %2045 = vmatprep.subr.mxu0 0.0
      %2046 = vmatpush1.msra.mxu0 0.0
      %2047 = vmatprep.subr.mxu0 0.0
      %2048 = vmatpush1.msra.mxu0 0.0
      %2049 = vmatprep.subr.mxu0 0.0
      %2050 = vmatpush1.msra.mxu0 0.0
      %2051 = vmatprep.subr.mxu0 0.0
      %2052 = vmatpush1.msra.mxu0 0.0
      %2053 = vmatprep.subr.mxu0 0.0
      %2054 = vmatpush1.msra.mxu0 0.0
      %2055 = vmatprep.subr.mxu0 0.0
      %2056 = vmatpush1.msra.mxu0 0.0
      %2057 = vmatprep.subr.mxu0 0.0
      %2058 = vmatpush1.msra.mxu0 0.0
      %2059 = vmatprep.subr.mxu0 0.0
      %2060 = vmatpush1.msra.mxu0 0.0
      %2061 = vmatprep.subr.mxu0 0.0
      %2062 = vmatpush1.msra.mxu0 0.0
      %2063 = vmatprep.subr.mxu0 0.0
      %2064 = vmatpush1.msra.mxu0 0.0
      %2065 = vmatprep.subr.mxu0 0.0
      %2066 = vmatpush1.msra.mxu0 0.0
      %2067 = vmatprep.subr.mxu0 0.0
      %2068 = vmatpush1.msra.mxu0 0.0
      %2069 = vmatprep.subr.mxu0 0.0
      %2070 = vmatpush1.msra.mxu0 0.0
      %2071 = vmatprep.subr.mxu0 0.0
      %2072 = vmatpush1.msra.mxu0 0.0
      %2073 = vmatprep.subr.mxu0 0.0
      %2074 = vmatpush1.msra.mxu0 0.0
      %2075 = vmatprep.subr.mxu0 0.0
      %2076 = vmatpush1.msra.mxu0 0.0
      %2077 = vmatprep.subr.mxu0 0.0
      %2078 = vmatpush1.msra.mxu0 0.0
      %2079 = vmatprep.subr.mxu0 0.0
      %2080 = vmatpush1.msra.mxu0 0.0
      %2081 = vmatprep.subr.mxu0 0.0
      %2082 = vmatpush1.msra.mxu0 0.0
      %2083 = vmatprep.mubr.f32.mxu0 0.0
      %2084 = vmatmul.mubr.f32.gmra.mrb[0].mxu0 %v2017
      %v2085 = vpop.f32.mrb[0].mxu0
      %v2086 = vadd.f32 0.0, %v2085
      %v2087 = vpop.f32.mrb[0].mxu0
      %2088 = vdwg.mxu0
      %v2089 = vsel %vm293, %v1941, 0
      %2091 = vmatprep.subr.mxu0 0.0
      %2092 = vmatpush1.msra.mxu0 %v174
      %2093 = vmatprep.subr.mxu0 0.0
      %2094 = vmatpush1.msra.mxu0 %v448
      %2095 = vmatprep.subr.mxu0 0.0
      %2096 = vmatpush1.msra.mxu0 0.0
      %2097 = vmatprep.subr.mxu0 0.0
      %2098 = vmatpush1.msra.mxu0 0.0
      %2099 = vmatprep.subr.mxu0 0.0
      %2100 = vmatpush1.msra.mxu0 0.0
      %2101 = vmatprep.subr.mxu0 0.0
      %2102 = vmatpush1.msra.mxu0 0.0
      %2103 = vmatprep.subr.mxu0 0.0
      %2104 = vmatpush1.msra.mxu0 0.0
      %2105 = vmatprep.subr.mxu0 0.0
      %2106 = vmatpush1.msra.mxu0 0.0
      %2107 = vmatprep.subr.mxu0 0.0
      %2108 = vmatpush1.msra.mxu0 0.0
      %2109 = vmatprep.subr.mxu0 0.0
      %2110 = vmatpush1.msra.mxu0 0.0
      %2111 = vmatprep.subr.mxu0 0.0
      %2112 = vmatpush1.msra.mxu0 0.0
      %2113 = vmatprep.subr.mxu0 0.0
      %2114 = vmatpush1.msra.mxu0 0.0
      %2115 = vmatprep.subr.mxu0 0.0
      %2116 = vmatpush1.msra.mxu0 0.0
      %2117 = vmatprep.subr.mxu0 0.0
      %2118 = vmatpush1.msra.mxu0 0.0
      %2119 = vmatprep.subr.mxu0 0.0
      %2120 = vmatpush1.msra.mxu0 0.0
      %2121 = vmatprep.subr.mxu0 0.0
      %2122 = vmatpush1.msra.mxu0 0.0
      %2123 = vmatprep.subr.mxu0 0.0
      %2124 = vmatpush1.msra.mxu0 0.0
      %2125 = vmatprep.subr.mxu0 0.0
      %2126 = vmatpush1.msra.mxu0 0.0
      %2127 = vmatprep.subr.mxu0 0.0
      %2128 = vmatpush1.msra.mxu0 0.0
      %2129 = vmatprep.subr.mxu0 0.0
      %2130 = vmatpush1.msra.mxu0 0.0
      %2131 = vmatprep.subr.mxu0 0.0
      %2132 = vmatpush1.msra.mxu0 0.0
      %2133 = vmatprep.subr.mxu0 0.0
      %2134 = vmatpush1.msra.mxu0 0.0
      %2135 = vmatprep.subr.mxu0 0.0
      %2136 = vmatpush1.msra.mxu0 0.0
      %2137 = vmatprep.subr.mxu0 0.0
      %2138 = vmatpush1.msra.mxu0 0.0
      %2139 = vmatprep.subr.mxu0 0.0
      %2140 = vmatpush1.msra.mxu0 0.0
      %2141 = vmatprep.subr.mxu0 0.0
      %2142 = vmatpush1.msra.mxu0 0.0
      %2143 = vmatprep.subr.mxu0 0.0
      %2144 = vmatpush1.msra.mxu0 0.0
      %2145 = vmatprep.subr.mxu0 0.0
      %2146 = vmatpush1.msra.mxu0 0.0
      %2147 = vmatprep.subr.mxu0 0.0
      %2148 = vmatpush1.msra.mxu0 0.0
      %2149 = vmatprep.subr.mxu0 0.0
      %2150 = vmatpush1.msra.mxu0 0.0
      %2151 = vmatprep.subr.mxu0 0.0
      %2152 = vmatpush1.msra.mxu0 0.0
      %2153 = vmatprep.subr.mxu0 0.0
      %2154 = vmatpush1.msra.mxu0 0.0
      %2155 = vmatprep.mubr.f32.mxu0 0.0
      %2156 = vmatmul.mubr.f32.gmra.mrb[0].mxu0 %v2089
      %v2157 = vpop.f32.mrb[0].mxu0
      %v2158 = vadd.f32 0.0, %v2157
      %v2159 = vpop.f32.mrb[0].mxu0
      %2160 = vdwg.mxu0
      %v2161 = vsel %vm293, %v1943, 0
      %2163 = vmatprep.subr.mxu0 0.0
      %2164 = vmatpush1.msra.mxu0 %v176
      %2165 = vmatprep.subr.mxu0 0.0
      %2166 = vmatpush1.msra.mxu0 %v523
      %2167 = vmatprep.subr.mxu0 0.0
      %2168 = vmatpush1.msra.mxu0 0.0
      %2169 = vmatprep.subr.mxu0 0.0
      %2170 = vmatpush1.msra.mxu0 0.0
      %2171 = vmatprep.subr.mxu0 0.0
      %2172 = vmatpush1.msra.mxu0 0.0
      %2173 = vmatprep.subr.mxu0 0.0
      %2174 = vmatpush1.msra.mxu0 0.0
      %2175 = vmatprep.subr.mxu0 0.0
      %2176 = vmatpush1.msra.mxu0 0.0
      %2177 = vmatprep.subr.mxu0 0.0
      %2178 = vmatpush1.msra.mxu0 0.0
      %2179 = vmatprep.subr.mxu0 0.0
      %2180 = vmatpush1.msra.mxu0 0.0
      %2181 = vmatprep.subr.mxu0 0.0
      %2182 = vmatpush1.msra.mxu0 0.0
      %2183 = vmatprep.subr.mxu0 0.0
      %2184 = vmatpush1.msra.mxu0 0.0
      %2185 = vmatprep.subr.mxu0 0.0
      %2186 = vmatpush1.msra.mxu0 0.0
      %2187 = vmatprep.subr.mxu0 0.0
      %2188 = vmatpush1.msra.mxu0 0.0
      %2189 = vmatprep.subr.mxu0 0.0
      %2190 = vmatpush1.msra.mxu0 0.0
      %2191 = vmatprep.subr.mxu0 0.0
      %2192 = vmatpush1.msra.mxu0 0.0
      %2193 = vmatprep.subr.mxu0 0.0
      %2194 = vmatpush1.msra.mxu0 0.0
      %2195 = vmatprep.subr.mxu0 0.0
      %2196 = vmatpush1.msra.mxu0 0.0
      %2197 = vmatprep.subr.mxu0 0.0
      %2198 = vmatpush1.msra.mxu0 0.0
      %2199 = vmatprep.subr.mxu0 0.0
      %2200 = vmatpush1.msra.mxu0 0.0
      %2201 = vmatprep.subr.mxu0 0.0
      %2202 = vmatpush1.msra.mxu0 0.0
      %2203 = vmatprep.subr.mxu0 0.0
      %2204 = vmatpush1.msra.mxu0 0.0
      %2205 = vmatprep.subr.mxu0 0.0
      %2206 = vmatpush1.msra.mxu0 0.0
      %2207 = vmatprep.subr.mxu0 0.0
      %2208 = vmatpush1.msra.mxu0 0.0
      %2209 = vmatprep.subr.mxu0 0.0
      %2210 = vmatpush1.msra.mxu0 0.0
      %2211 = vmatprep.subr.mxu0 0.0
      %2212 = vmatpush1.msra.mxu0 0.0
      %2213 = vmatprep.subr.mxu0 0.0
      %2214 = vmatpush1.msra.mxu0 0.0
      %2215 = vmatprep.subr.mxu0 0.0
      %2216 = vmatpush1.msra.mxu0 0.0
      %2217 = vmatprep.subr.mxu0 0.0
      %2218 = vmatpush1.msra.mxu0 0.0
      %2219 = vmatprep.subr.mxu0 0.0
      %2220 = vmatpush1.msra.mxu0 0.0
      %2221 = vmatprep.subr.mxu0 0.0
      %2222 = vmatpush1.msra.mxu0 0.0
      %2223 = vmatprep.subr.mxu0 0.0
      %2224 = vmatpush1.msra.mxu0 0.0
      %2225 = vmatprep.subr.mxu0 0.0
      %2226 = vmatpush1.msra.mxu0 0.0
      %2227 = vmatprep.mubr.f32.mxu0 0.0
      %2228 = vmatmul.mubr.f32.gmra.mrb[0].mxu0 %v2161
      %v2229 = vpop.f32.mrb[0].mxu0
      %v2230 = vadd.f32 0.0, %v2229
      %v2231 = vpop.f32.mrb[0].mxu0
      %2232 = vdwg.mxu0
      %v2233 = vsel %vm293, %v1926, 0
      %2235 = vmatprep.subr.mxu0 0.0
      %2236 = vmatpush1.msra.mxu0 %v178
      %2237 = vmatprep.subr.mxu0 0.0
      %2238 = vmatpush1.msra.mxu0 %v598
      %2239 = vmatprep.subr.mxu0 0.0
      %2240 = vmatpush1.msra.mxu0 0.0
      %2241 = vmatprep.subr.mxu0 0.0
      %2242 = vmatpush1.msra.mxu0 0.0
      %2243 = vmatprep.subr.mxu0 0.0
      %2244 = vmatpush1.msra.mxu0 0.0
      %2245 = vmatprep.subr.mxu0 0.0
      %2246 = vmatpush1.msra.mxu0 0.0
      %2247 = vmatprep.subr.mxu0 0.0
      %2248 = vmatpush1.msra.mxu0 0.0
      %2249 = vmatprep.subr.mxu0 0.0
      %2250 = vmatpush1.msra.mxu0 0.0
      %2251 = vmatprep.subr.mxu0 0.0
      %2252 = vmatpush1.msra.mxu0 0.0
      %2253 = vmatprep.subr.mxu0 0.0
      %2254 = vmatpush1.msra.mxu0 0.0
      %2255 = vmatprep.subr.mxu0 0.0
      %2256 = vmatpush1.msra.mxu0 0.0
      %2257 = vmatprep.subr.mxu0 0.0
      %2258 = vmatpush1.msra.mxu0 0.0
      %2259 = vmatprep.subr.mxu0 0.0
      %2260 = vmatpush1.msra.mxu0 0.0
      %2261 = vmatprep.subr.mxu0 0.0
      %2262 = vmatpush1.msra.mxu0 0.0
      %2263 = vmatprep.subr.mxu0 0.0
      %2264 = vmatpush1.msra.mxu0 0.0
      %2265 = vmatprep.subr.mxu0 0.0
      %2266 = vmatpush1.msra.mxu0 0.0
      %2267 = vmatprep.subr.mxu0 0.0
      %2268 = vmatpush1.msra.mxu0 0.0
      %2269 = vmatprep.subr.mxu0 0.0
      %2270 = vmatpush1.msra.mxu0 0.0
      %2271 = vmatprep.subr.mxu0 0.0
      %2272 = vmatpush1.msra.mxu0 0.0
      %2273 = vmatprep.subr.mxu0 0.0
      %2274 = vmatpush1.msra.mxu0 0.0
      %2275 = vmatprep.subr.mxu0 0.0
      %2276 = vmatpush1.msra.mxu0 0.0
      %2277 = vmatprep.subr.mxu0 0.0
      %2278 = vmatpush1.msra.mxu0 0.0
      %2279 = vmatprep.subr.mxu0 0.0
      %2280 = vmatpush1.msra.mxu0 0.0
      %2281 = vmatprep.subr.mxu0 0.0
      %2282 = vmatpush1.msra.mxu0 0.0
      %2283 = vmatprep.subr.mxu0 0.0
      %2284 = vmatpush1.msra.mxu0 0.0
      %2285 = vmatprep.subr.mxu0 0.0
      %2286 = vmatpush1.msra.mxu0 0.0
      %2287 = vmatprep.subr.mxu0 0.0
      %2288 = vmatpush1.msra.mxu0 0.0
      %2289 = vmatprep.subr.mxu0 0.0
      %2290 = vmatpush1.msra.mxu0 0.0
      %2291 = vmatprep.subr.mxu0 0.0
      %2292 = vmatpush1.msra.mxu0 0.0
      %2293 = vmatprep.subr.mxu0 0.0
      %2294 = vmatpush1.msra.mxu0 0.0
      %2295 = vmatprep.subr.mxu0 0.0
      %2296 = vmatpush1.msra.mxu0 0.0
      %2297 = vmatprep.subr.mxu0 0.0
      %2298 = vmatpush1.msra.mxu0 0.0
      %2299 = vmatprep.mubr.f32.mxu0 0.0
      %2300 = vmatmul.mubr.f32.gmra.mrb[0].mxu0 %v2233
      %v2301 = vpop.f32.mrb[0].mxu0
      %v2302 = vadd.f32 0.0, %v2301
      %v2303 = vpop.f32.mrb[0].mxu0
      %2304 = vdwg.mxu0
      %v2305 = vsel %vm293, %v1940, 0
      %2307 = vmatprep.subr.mxu0 0.0
      %2308 = vmatpush1.msra.mxu0 %v180
      %2309 = vmatprep.subr.mxu0 0.0
      %2310 = vmatpush1.msra.mxu0 %v673
      %2311 = vmatprep.subr.mxu0 0.0
      %2312 = vmatpush1.msra.mxu0 0.0
      %2313 = vmatprep.subr.mxu0 0.0
      %2314 = vmatpush1.msra.mxu0 0.0
      %2315 = vmatprep.subr.mxu0 0.0
      %2316 = vmatpush1.msra.mxu0 0.0
      %2317 = vmatprep.subr.mxu0 0.0
      %2318 = vmatpush1.msra.mxu0 0.0
      %2319 = vmatprep.subr.mxu0 0.0
      %2320 = vmatpush1.msra.mxu0 0.0
      %2321 = vmatprep.subr.mxu0 0.0
      %2322 = vmatpush1.msra.mxu0 0.0
      %2323 = vmatprep.subr.mxu0 0.0
      %2324 = vmatpush1.msra.mxu0 0.0
      %2325 = vmatprep.subr.mxu0 0.0
      %2326 = vmatpush1.msra.mxu0 0.0
      %2327 = vmatprep.subr.mxu0 0.0
      %2328 = vmatpush1.msra.mxu0 0.0
      %2329 = vmatprep.subr.mxu0 0.0
      %2330 = vmatpush1.msra.mxu0 0.0
      %2331 = vmatprep.subr.mxu0 0.0
      %2332 = vmatpush1.msra.mxu0 0.0
      %2333 = vmatprep.subr.mxu0 0.0
      %2334 = vmatpush1.msra.mxu0 0.0
      %2335 = vmatprep.subr.mxu0 0.0
      %2336 = vmatpush1.msra.mxu0 0.0
      %2337 = vmatprep.subr.mxu0 0.0
      %2338 = vmatpush1.msra.mxu0 0.0
      %2339 = vmatprep.subr.mxu0 0.0
      %2340 = vmatpush1.msra.mxu0 0.0
      %2341 = vmatprep.subr.mxu0 0.0
      %2342 = vmatpush1.msra.mxu0 0.0
      %2343 = vmatprep.subr.mxu0 0.0
      %2344 = vmatpush1.msra.mxu0 0.0
      %2345 = vmatprep.subr.mxu0 0.0
      %2346 = vmatpush1.msra.mxu0 0.0
      %2347 = vmatprep.subr.mxu0 0.0
      %2348 = vmatpush1.msra.mxu0 0.0
      %2349 = vmatprep.subr.mxu0 0.0
      %2350 = vmatpush1.msra.mxu0 0.0
      %2351 = vmatprep.subr.mxu0 0.0
      %2352 = vmatpush1.msra.mxu0 0.0
      %2353 = vmatprep.subr.mxu0 0.0
      %2354 = vmatpush1.msra.mxu0 0.0
      %2355 = vmatprep.subr.mxu0 0.0
      %2356 = vmatpush1.msra.mxu0 0.0
      %2357 = vmatprep.subr.mxu0 0.0
      %2358 = vmatpush1.msra.mxu0 0.0
      %2359 = vmatprep.subr.mxu0 0.0
      %2360 = vmatpush1.msra.mxu0 0.0
      %2361 = vmatprep.subr.mxu0 0.0
      %2362 = vmatpush1.msra.mxu0 0.0
      %2363 = vmatprep.subr.mxu0 0.0
      %2364 = vmatpush1.msra.mxu0 0.0
      %2365 = vmatprep.subr.mxu0 0.0
      %2366 = vmatpush1.msra.mxu0 0.0
      %2367 = vmatprep.subr.mxu0 0.0
      %2368 = vmatpush1.msra.mxu0 0.0
      %2369 = vmatprep.subr.mxu0 0.0
      %2370 = vmatpush1.msra.mxu0 0.0
      %2371 = vmatprep.mubr.f32.mxu0 0.0
      %2372 = vmatmul.mubr.f32.gmra.mrb[0].mxu0 %v2305
      %v2373 = vpop.f32.mrb[0].mxu0
      %v2374 = vadd.f32 0.0, %v2373
      %v2375 = vpop.f32.mrb[0].mxu0
      %2376 = vdwg.mxu0
      %v2377 = vsel %vm293, %v1942, 0
      %2379 = vmatprep.subr.mxu0 0.0
      %2380 = vmatpush1.msra.mxu0 %v182
      %2381 = vmatprep.subr.mxu0 0.0
      %2382 = vmatpush1.msra.mxu0 %v748
      %2383 = vmatprep.subr.mxu0 0.0
      %2384 = vmatpush1.msra.mxu0 0.0
      %2385 = vmatprep.subr.mxu0 0.0
      %2386 = vmatpush1.msra.mxu0 0.0
      %2387 = vmatprep.subr.mxu0 0.0
      %2388 = vmatpush1.msra.mxu0 0.0
      %2389 = vmatprep.subr.mxu0 0.0
      %2390 = vmatpush1.msra.mxu0 0.0
      %2391 = vmatprep.subr.mxu0 0.0
      %2392 = vmatpush1.msra.mxu0 0.0
      %2393 = vmatprep.subr.mxu0 0.0
      %2394 = vmatpush1.msra.mxu0 0.0
      %2395 = vmatprep.subr.mxu0 0.0
      %2396 = vmatpush1.msra.mxu0 0.0
      %2397 = vmatprep.subr.mxu0 0.0
      %2398 = vmatpush1.msra.mxu0 0.0
      %2399 = vmatprep.subr.mxu0 0.0
      %2400 = vmatpush1.msra.mxu0 0.0
      %2401 = vmatprep.subr.mxu0 0.0
      %2402 = vmatpush1.msra.mxu0 0.0
      %2403 = vmatprep.subr.mxu0 0.0
      %2404 = vmatpush1.msra.mxu0 0.0
      %2405 = vmatprep.subr.mxu0 0.0
      %2406 = vmatpush1.msra.mxu0 0.0
      %2407 = vmatprep.subr.mxu0 0.0
      %2408 = vmatpush1.msra.mxu0 0.0
      %2409 = vmatprep.subr.mxu0 0.0
      %2410 = vmatpush1.msra.mxu0 0.0
      %2411 = vmatprep.subr.mxu0 0.0
      %2412 = vmatpush1.msra.mxu0 0.0
      %2413 = vmatprep.subr.mxu0 0.0
      %2414 = vmatpush1.msra.mxu0 0.0
      %2415 = vmatprep.subr.mxu0 0.0
      %2416 = vmatpush1.msra.mxu0 0.0
      %2417 = vmatprep.subr.mxu0 0.0
      %2418 = vmatpush1.msra.mxu0 0.0
      %2419 = vmatprep.subr.mxu0 0.0
      %2420 = vmatpush1.msra.mxu0 0.0
      %2421 = vmatprep.subr.mxu0 0.0
      %2422 = vmatpush1.msra.mxu0 0.0
      %2423 = vmatprep.subr.mxu0 0.0
      %2424 = vmatpush1.msra.mxu0 0.0
      %2425 = vmatprep.subr.mxu0 0.0
      %2426 = vmatpush1.msra.mxu0 0.0
      %2427 = vmatprep.subr.mxu0 0.0
      %2428 = vmatpush1.msra.mxu0 0.0
      %2429 = vmatprep.subr.mxu0 0.0
      %2430 = vmatpush1.msra.mxu0 0.0
      %2431 = vmatprep.subr.mxu0 0.0
      %2432 = vmatpush1.msra.mxu0 0.0
      %2433 = vmatprep.subr.mxu0 0.0
      %2434 = vmatpush1.msra.mxu0 0.0
      %2435 = vmatprep.subr.mxu0 0.0
      %2436 = vmatpush1.msra.mxu0 0.0
      %2437 = vmatprep.subr.mxu0 0.0
      %2438 = vmatpush1.msra.mxu0 0.0
      %2439 = vmatprep.subr.mxu0 0.0
      %2440 = vmatpush1.msra.mxu0 0.0
      %2441 = vmatprep.subr.mxu0 0.0
      %2442 = vmatpush1.msra.mxu0 0.0
      %2443 = vmatprep.mubr.f32.mxu0 0.0
      %2444 = vmatmul.mubr.f32.gmra.mrb[0].mxu0 %v2377
      %v2445 = vpop.f32.mrb[0].mxu0
      %v2446 = vadd.f32 0.0, %v2445
      %v2447 = vpop.f32.mrb[0].mxu0
      %2448 = vdwg.mxu0
      %v2449 = vsel %vm293, %v1944, 0
      %2451 = vmatprep.subr.mxu0 0.0
      %2452 = vmatpush1.msra.mxu0 %v184
      %2453 = vmatprep.subr.mxu0 0.0
      %2454 = vmatpush1.msra.mxu0 %v823
      %2455 = vmatprep.subr.mxu0 0.0
      %2456 = vmatpush1.msra.mxu0 0.0
      %2457 = vmatprep.subr.mxu0 0.0
      %2458 = vmatpush1.msra.mxu0 0.0
      %2459 = vmatprep.subr.mxu0 0.0
      %2460 = vmatpush1.msra.mxu0 0.0
      %2461 = vmatprep.subr.mxu0 0.0
      %2462 = vmatpush1.msra.mxu0 0.0
      %2463 = vmatprep.subr.mxu0 0.0
      %2464 = vmatpush1.msra.mxu0 0.0
      %2465 = vmatprep.subr.mxu0 0.0
      %2466 = vmatpush1.msra.mxu0 0.0
      %2467 = vmatprep.subr.mxu0 0.0
      %2468 = vmatpush1.msra.mxu0 0.0
      %2469 = vmatprep.subr.mxu0 0.0
      %2470 = vmatpush1.msra.mxu0 0.0
      %2471 = vmatprep.subr.mxu0 0.0
      %2472 = vmatpush1.msra.mxu0 0.0
      %2473 = vmatprep.subr.mxu0 0.0
      %2474 = vmatpush1.msra.mxu0 0.0
      %2475 = vmatprep.subr.mxu0 0.0
      %2476 = vmatpush1.msra.mxu0 0.0
      %2477 = vmatprep.subr.mxu0 0.0
      %2478 = vmatpush1.msra.mxu0 0.0
      %2479 = vmatprep.subr.mxu0 0.0
      %2480 = vmatpush1.msra.mxu0 0.0
      %2481 = vmatprep.subr.mxu0 0.0
      %2482 = vmatpush1.msra.mxu0 0.0
      %2483 = vmatprep.subr.mxu0 0.0
      %2484 = vmatpush1.msra.mxu0 0.0
      %2485 = vmatprep.subr.mxu0 0.0
      %2486 = vmatpush1.msra.mxu0 0.0
      %2487 = vmatprep.subr.mxu0 0.0
      %2488 = vmatpush1.msra.mxu0 0.0
      %2489 = vmatprep.subr.mxu0 0.0
      %2490 = vmatpush1.msra.mxu0 0.0
      %2491 = vmatprep.subr.mxu0 0.0
      %2492 = vmatpush1.msra.mxu0 0.0
      %2493 = vmatprep.subr.mxu0 0.0
      %2494 = vmatpush1.msra.mxu0 0.0
      %2495 = vmatprep.subr.mxu0 0.0
      %2496 = vmatpush1.msra.mxu0 0.0
      %2497 = vmatprep.subr.mxu0 0.0
      %2498 = vmatpush1.msra.mxu0 0.0
      %2499 = vmatprep.subr.mxu0 0.0
      %2500 = vmatpush1.msra.mxu0 0.0
      %2501 = vmatprep.subr.mxu0 0.0
      %2502 = vmatpush1.msra.mxu0 0.0
      %2503 = vmatprep.subr.mxu0 0.0
      %2504 = vmatpush1.msra.mxu0 0.0
      %2505 = vmatprep.subr.mxu0 0.0
      %2506 = vmatpush1.msra.mxu0 0.0
      %2507 = vmatprep.subr.mxu0 0.0
      %2508 = vmatpush1.msra.mxu0 0.0
      %2509 = vmatprep.subr.mxu0 0.0
      %2510 = vmatpush1.msra.mxu0 0.0
      %2511 = vmatprep.subr.mxu0 0.0
      %2512 = vmatpush1.msra.mxu0 0.0
      %2513 = vmatprep.subr.mxu0 0.0
      %2514 = vmatpush1.msra.mxu0 0.0
      %2515 = vmatprep.mubr.f32.mxu0 0.0
      %2516 = vmatmul.mubr.f32.gmra.mrb[0].mxu0 %v2449
      %v2517 = vpop.f32.mrb[0].mxu0
      %v2518 = vadd.f32 0.0, %v2517
      %v2519 = vpop.f32.mrb[0].mxu0
      %2520 = vdwg.mxu0
      %2521 = vrot.lane.b32.xlu0 %v188, 112
      %v2522 = vpop.permute.xlu0 %2521
      %2523 = vrot.lane.b32.xlu0 %v188, 48
      %v2524 = vpop.permute.xlu0 %2523
      %v2533 = vrot.slane %v2086, 7
      %v2534 = vsel %vm906, %v2533, %v2014
      %v2535 = vrot.slane %v2158, 6
      %v2536 = vsel %vm909, %v2535, %v2534
      %v2537 = vrot.slane %v2230, 5
      %v2538 = vsel %vm912, %v2537, %v2536
      %v2539 = vrot.slane %v2302, 4
      %v2540 = vsel %vm915, %v2539, %v2538
      %v2541 = vrot.slane %v2374, 3
      %v2542 = vsel %vm918, %v2541, %v2540
      %v2543 = vrot.slane %v2446, 2
      %v2544 = vsel %vm921, %v2543, %v2542
      %v2545 = vrot.slane %v2518, 1
      %v2546 = vsel %vm924, %v2545, %v2544
      %v2549 = vsel %vm196, %v2522, 0
      %v2552 = vsel %vm196, %v2524, 0
      %2554 = vmatprep.subr.bf16.mxu0 0
      %2555 = vmatpush1.bf16.xpose.msra.mxu0 %v2552
      %2556 = vmatprep.subr.bf16.mxu0 0
      %2557 = vmatpush1.bf16.xpose.msra.mxu0 0
      %2558 = vmatprep.subr.bf16.mxu0 0
      %2559 = vmatpush1.bf16.xpose.msra.mxu0 0
      %2560 = vmatprep.subr.bf16.mxu0 0
      %2561 = vmatpush1.bf16.xpose.msra.mxu0 0
      %2562 = vmatprep.subr.bf16.mxu0 0
      %2563 = vmatpush1.bf16.xpose.msra.mxu0 0
      %2564 = vmatprep.subr.bf16.mxu0 0
      %2565 = vmatpush1.bf16.xpose.msra.mxu0 0
      %2566 = vmatprep.subr.bf16.mxu0 0
      %2567 = vmatpush1.bf16.xpose.msra.mxu0 0
      %2568 = vmatprep.subr.bf16.mxu0 0
      %2569 = vmatpush1.bf16.xpose.msra.mxu0 0
      %2570 = vmatprep.subr.bf16.mxu0 0
      %2571 = vmatpush1.bf16.xpose.msra.mxu0 0
      %2572 = vmatprep.subr.bf16.mxu0 0
      %2573 = vmatpush1.bf16.xpose.msra.mxu0 0
      %2574 = vmatprep.subr.bf16.mxu0 0
      %2575 = vmatpush1.bf16.xpose.msra.mxu0 0
      %2576 = vmatprep.subr.bf16.mxu0 0
      %2577 = vmatpush1.bf16.xpose.msra.mxu0 0
      %2578 = vmatprep.subr.bf16.mxu0 0
      %2579 = vmatpush1.bf16.xpose.msra.mxu0 0
      %2580 = vmatprep.subr.bf16.mxu0 0
      %2581 = vmatpush1.bf16.xpose.msra.mxu0 0
      %2582 = vmatprep.subr.bf16.mxu0 0
      %2583 = vmatpush1.bf16.xpose.msra.mxu0 0
      %2584 = vmatprep.subr.bf16.mxu0 0
      %2585 = vmatpush1.bf16.xpose.msra.mxu0 0
      %2586 = vmatprep.mubr.bf16.mxu0 0
      %2587 = vmatmul.mubr.bf16.gmra.mrb[0].mxu0 %v2549
      %v2588 = vpop.f32.mrb[0].mxu0
      %v2589 = vadd.f32 %v2546, %v2588
      %v2590 = vpop.f32.mrb[0].mxu0
      %v2591 = vpop.f32.mrb[0].mxu0
      %v2592 = vpop.f32.mrb[0].mxu0
      %2593 = vdwg.mxu0
      %v2594 = vmul.f32 %v2589, 0.35355338
      %v2595 = vsel %vm196, %v2594, -inf
      %2596 = vmax.xlane.f32.xlu0 %v2595
      %v2597 = vpop.xlane.xlu0 %2596
      %v2598 = vsub.f32 %v2594, %v2597
      %v2599 = vmul.f32 %v2598, 1.442695
      %v2600 = vpow.pop %v2599
      %v2601 = vsel %vm196, %v2600, 0.0
      %2602 = vadd.xlane.f32.xlu0 %v2601
      %v2603 = vpop.xlane.xlu0 %2602
      %v2604 = vrcp.pop %v2603
      %v2605 = vmul.f32 %v2600, %v2604
      %v2606 = vpack.c.bf16 %v2605, %v2605
      %2607 = vrot.lane.b32.xlu0 %v188, 16
      %v2608 = vpop.permute.xlu0 %2607
      %v2610 = vsel %vm196, %v2606, 0
      %v2613 = vsel %vm991, %v2608, 0
      %2615 = vmatprep.subr.bf16.mxu0 0
      %2616 = vmatpush1.bf16.msra.mxu0 %v2613
      %2617 = vmatprep.subr.bf16.mxu0 0
      %2618 = vmatpush1.bf16.msra.mxu0 0
      %2619 = vmatprep.subr.bf16.mxu0 0
      %2620 = vmatpush1.bf16.msra.mxu0 0
      %2621 = vmatprep.subr.bf16.mxu0 0
      %2622 = vmatpush1.bf16.msra.mxu0 0
      %2623 = vmatprep.subr.bf16.mxu0 0
      %2624 = vmatpush1.bf16.msra.mxu0 0
      %2625 = vmatprep.subr.bf16.mxu0 0
      %2626 = vmatpush1.bf16.msra.mxu0 0
      %2627 = vmatprep.subr.bf16.mxu0 0
      %2628 = vmatpush1.bf16.msra.mxu0 0
      %2629 = vmatprep.subr.bf16.mxu0 0
      %2630 = vmatpush1.bf16.msra.mxu0 0
      %2631 = vmatprep.subr.bf16.mxu0 0
      %2632 = vmatpush1.bf16.msra.mxu0 0
      %2633 = vmatprep.subr.bf16.mxu0 0
      %2634 = vmatpush1.bf16.msra.mxu0 0
      %2635 = vmatprep.subr.bf16.mxu0 0
      %2636 = vmatpush1.bf16.msra.mxu0 0
      %2637 = vmatprep.subr.bf16.mxu0 0
      %2638 = vmatpush1.bf16.msra.mxu0 0
      %2639 = vmatprep.subr.bf16.mxu0 0
      %2640 = vmatpush1.bf16.msra.mxu0 0
      %2641 = vmatprep.subr.bf16.mxu0 0
      %2642 = vmatpush1.bf16.msra.mxu0 0
      %2643 = vmatprep.subr.bf16.mxu0 0
      %2644 = vmatpush1.bf16.msra.mxu0 0
      %2645 = vmatprep.subr.bf16.mxu0 0
      %2646 = vmatpush1.bf16.msra.mxu0 0
      %2647 = vmatprep.mubr.bf16.mxu0 0
      %2648 = vmatmul.mubr.bf16.gmra.mrb[0].mxu0 %v2610
      %v2649 = vpop.f32.mrb[0].mxu0
      %v2650 = vadd.f32 0.0, %v2649
      %v2651 = vpop.f32.mrb[0].mxu0
      %v2652 = vpop.f32.mrb[0].mxu0
      %v2653 = vpop.f32.mrb[0].mxu0
      %2654 = vdwg.mxu0
      %2655 = vrot.lane.b32.xlu0 %v188, 72
      %v2656 = vpop.permute.xlu0 %2655
      %2657 = vrot.lane.b32.xlu0 %v195, 104
      %v2658 = vpop.permute.xlu0 %2657
      %v2660 = vsel %vm196, %v2656, 0
      %v2663 = vsel %vm196, %v2658, 0
      %2665 = vmatprep.subr.bf16.mxu0 0
      %2666 = vmatpush1.bf16.xpose.msra.mxu0 %v2663
      %2667 = vmatprep.subr.bf16.mxu0 0
      %2668 = vmatpush1.bf16.xpose.msra.mxu0 0
      %2669 = vmatprep.subr.bf16.mxu0 0
      %2670 = vmatpush1.bf16.xpose.msra.mxu0 0
      %2671 = vmatprep.subr.bf16.mxu0 0
      %2672 = vmatpush1.bf16.xpose.msra.mxu0 0
      %2673 = vmatprep.subr.bf16.mxu0 0
      %2674 = vmatpush1.bf16.xpose.msra.mxu0 0
      %2675 = vmatprep.subr.bf16.mxu0 0
      %2676 = vmatpush1.bf16.xpose.msra.mxu0 0
      %2677 = vmatprep.subr.bf16.mxu0 0
      %2678 = vmatpush1.bf16.xpose.msra.mxu0 0
      %2679 = vmatprep.subr.bf16.mxu0 0
      %2680 = vmatpush1.bf16.xpose.msra.mxu0 0
      %2681 = vmatprep.subr.bf16.mxu0 0
      %2682 = vmatpush1.bf16.xpose.msra.mxu0 0
      %2683 = vmatprep.subr.bf16.mxu0 0
      %2684 = vmatpush1.bf16.xpose.msra.mxu0 0
      %2685 = vmatprep.subr.bf16.mxu0 0
      %2686 = vmatpush1.bf16.xpose.msra.mxu0 0
      %2687 = vmatprep.subr.bf16.mxu0 0
      %2688 = vmatpush1.bf16.xpose.msra.mxu0 0
      %2689 = vmatprep.subr.bf16.mxu0 0
      %2690 = vmatpush1.bf16.xpose.msra.mxu0 0
      %2691 = vmatprep.subr.bf16.mxu0 0
      %2692 = vmatpush1.bf16.xpose.msra.mxu0 0
      %2693 = vmatprep.subr.bf16.mxu0 0
      %2694 = vmatpush1.bf16.xpose.msra.mxu0 0
      %2695 = vmatprep.subr.bf16.mxu0 0
      %2696 = vmatpush1.bf16.xpose.msra.mxu0 0
      %2697 = vmatprep.mubr.bf16.mxu0 0
      %2698 = vmatmul.mubr.bf16.gmra.mrb[0].mxu0 %v2660
      %v2699 = vpop.f32.mrb[0].mxu0
      %v2700 = vadd.f32 0.0, %v2699
      %v2701 = vpop.f32.mrb[0].mxu0
      %v2702 = vpop.f32.mrb[0].mxu0
      %v2703 = vpop.f32.mrb[0].mxu0
      %2704 = vdwg.mxu0
      %v2706 = vcombine.high %v2700, %v2700
      %v2708 = vunpack.c.l.s4 1966171168
      %v2709 = vunpack.c.0.s8 %v2708
      %v2710 = vlaneseq
      %v2711 = vshrl.u32 %v2710, 7
      %v2712 = vsub.s32 %v2709, %v2711
      %v2713 = vrot.slane %v2700, %v2712
      %v2715 = vunpack.c.l.s4 1966171168
      %v2716 = vunpack.c.0.s8 %v2715
      %v2717 = vlaneseq
      %v2718 = vshrl.u32 %v2717, 7
      %v2719 = vsub.s32 %v2716, %v2718
      %v2720 = vrot.slane %v2706, %v2719
      %v2721 = vcombine.high %v2713, %v2713
      %v2722 = vcombine.high %v2720, %v2720
      %v2724 = vunpack.c.l.s4 1966171168
      %v2725 = vunpack.c.0.s8 %v2724
      %v2726 = vlaneseq
      %v2727 = vshrl.u32 %v2726, 7
      %v2728 = vsub.s32 %v2725, %v2727
      %v2729 = vrot.slane %v2713, %v2728
      %v2731 = vunpack.c.l.s4 1966171168
      %v2732 = vunpack.c.0.s8 %v2731
      %v2733 = vlaneseq
      %v2734 = vshrl.u32 %v2733, 7
      %v2735 = vsub.s32 %v2732, %v2734
      %v2736 = vrot.slane %v2720, %v2735
      %v2738 = vunpack.c.l.s4 1966171168
      %v2739 = vunpack.c.0.s8 %v2738
      %v2740 = vlaneseq
      %v2741 = vshrl.u32 %v2740, 7
      %v2742 = vsub.s32 %v2739, %v2741
      %v2743 = vrot.slane %v2721, %v2742
      %v2745 = vunpack.c.l.s4 1966171168
      %v2746 = vunpack.c.0.s8 %v2745
      %v2747 = vlaneseq
      %v2748 = vshrl.u32 %v2747, 7
      %v2749 = vsub.s32 %v2746, %v2748
      %v2750 = vrot.slane %v2722, %v2749
      %v2751 = vcombine.high %v2729, %v2729
      %v2752 = vcombine.high %v2736, %v2736
      %v2753 = vcombine.high %v2743, %v2743
      %v2754 = vcombine.high %v2750, %v2750
      %v2755 = vsel %vm293, %v2729, 0
      %2757 = vmatprep.subr.mxu0 0.0
      %2758 = vmatpush1.msra.mxu0 %v170
      %2759 = vmatprep.subr.mxu0 0.0
      %2760 = vmatpush1.msra.mxu0 %v298
      %2761 = vmatprep.subr.mxu0 0.0
      %2762 = vmatpush1.msra.mxu0 0.0
      %2763 = vmatprep.subr.mxu0 0.0
      %2764 = vmatpush1.msra.mxu0 0.0
      %2765 = vmatprep.subr.mxu0 0.0
      %2766 = vmatpush1.msra.mxu0 0.0
      %2767 = vmatprep.subr.mxu0 0.0
      %2768 = vmatpush1.msra.mxu0 0.0
      %2769 = vmatprep.subr.mxu0 0.0
      %2770 = vmatpush1.msra.mxu0 0.0
      %2771 = vmatprep.subr.mxu0 0.0
      %2772 = vmatpush1.msra.mxu0 0.0
      %2773 = vmatprep.subr.mxu0 0.0
      %2774 = vmatpush1.msra.mxu0 0.0
      %2775 = vmatprep.subr.mxu0 0.0
      %2776 = vmatpush1.msra.mxu0 0.0
      %2777 = vmatprep.subr.mxu0 0.0
      %2778 = vmatpush1.msra.mxu0 0.0
      %2779 = vmatprep.subr.mxu0 0.0
      %2780 = vmatpush1.msra.mxu0 0.0
      %2781 = vmatprep.subr.mxu0 0.0
      %2782 = vmatpush1.msra.mxu0 0.0
      %2783 = vmatprep.subr.mxu0 0.0
      %2784 = vmatpush1.msra.mxu0 0.0
      %2785 = vmatprep.subr.mxu0 0.0
      %2786 = vmatpush1.msra.mxu0 0.0
      %2787 = vmatprep.subr.mxu0 0.0
      %2788 = vmatpush1.msra.mxu0 0.0
      %2789 = vmatprep.subr.mxu0 0.0
      %2790 = vmatpush1.msra.mxu0 0.0
      %2791 = vmatprep.subr.mxu0 0.0
      %2792 = vmatpush1.msra.mxu0 0.0
      %2793 = vmatprep.subr.mxu0 0.0
      %2794 = vmatpush1.msra.mxu0 0.0
      %2795 = vmatprep.subr.mxu0 0.0
      %2796 = vmatpush1.msra.mxu0 0.0
      %2797 = vmatprep.subr.mxu0 0.0
      %2798 = vmatpush1.msra.mxu0 0.0
      %2799 = vmatprep.subr.mxu0 0.0
      %2800 = vmatpush1.msra.mxu0 0.0
      %2801 = vmatprep.subr.mxu0 0.0
      %2802 = vmatpush1.msra.mxu0 0.0
      %2803 = vmatprep.subr.mxu0 0.0
      %2804 = vmatpush1.msra.mxu0 0.0
      %2805 = vmatprep.subr.mxu0 0.0
      %2806 = vmatpush1.msra.mxu0 0.0
      %2807 = vmatprep.subr.mxu0 0.0
      %2808 = vmatpush1.msra.mxu0 0.0
      %2809 = vmatprep.subr.mxu0 0.0
      %2810 = vmatpush1.msra.mxu0 0.0
      %2811 = vmatprep.subr.mxu0 0.0
      %2812 = vmatpush1.msra.mxu0 0.0
      %2813 = vmatprep.subr.mxu0 0.0
      %2814 = vmatpush1.msra.mxu0 0.0
      %2815 = vmatprep.subr.mxu0 0.0
      %2816 = vmatpush1.msra.mxu0 0.0
      %2817 = vmatprep.subr.mxu0 0.0
      %2818 = vmatpush1.msra.mxu0 0.0
      %2819 = vmatprep.subr.mxu0 0.0
      %2820 = vmatpush1.msra.mxu0 0.0
      %2821 = vmatprep.mubr.f32.mxu0 0.0
      %2822 = vmatmul.mubr.f32.gmra.mrb[0].mxu0 %v2755
      %v2823 = vpop.f32.mrb[0].mxu0
      %v2824 = vadd.f32 0.0, %v2823
      %v2825 = vpop.f32.mrb[0].mxu0
      %2826 = vdwg.mxu0
      %v2827 = vsel %vm293, %v2743, 0
      %2829 = vmatprep.subr.mxu0 0.0
      %2830 = vmatpush1.msra.mxu0 %v172
      %2831 = vmatprep.subr.mxu0 0.0
      %2832 = vmatpush1.msra.mxu0 %v373
      %2833 = vmatprep.subr.mxu0 0.0
      %2834 = vmatpush1.msra.mxu0 0.0
      %2835 = vmatprep.subr.mxu0 0.0
      %2836 = vmatpush1.msra.mxu0 0.0
      %2837 = vmatprep.subr.mxu0 0.0
      %2838 = vmatpush1.msra.mxu0 0.0
      %2839 = vmatprep.subr.mxu0 0.0
      %2840 = vmatpush1.msra.mxu0 0.0
      %2841 = vmatprep.subr.mxu0 0.0
      %2842 = vmatpush1.msra.mxu0 0.0
      %2843 = vmatprep.subr.mxu0 0.0
      %2844 = vmatpush1.msra.mxu0 0.0
      %2845 = vmatprep.subr.mxu0 0.0
      %2846 = vmatpush1.msra.mxu0 0.0
      %2847 = vmatprep.subr.mxu0 0.0
      %2848 = vmatpush1.msra.mxu0 0.0
      %2849 = vmatprep.subr.mxu0 0.0
      %2850 = vmatpush1.msra.mxu0 0.0
      %2851 = vmatprep.subr.mxu0 0.0
      %2852 = vmatpush1.msra.mxu0 0.0
      %2853 = vmatprep.subr.mxu0 0.0
      %2854 = vmatpush1.msra.mxu0 0.0
      %2855 = vmatprep.subr.mxu0 0.0
      %2856 = vmatpush1.msra.mxu0 0.0
      %2857 = vmatprep.subr.mxu0 0.0
      %2858 = vmatpush1.msra.mxu0 0.0
      %2859 = vmatprep.subr.mxu0 0.0
      %2860 = vmatpush1.msra.mxu0 0.0
      %2861 = vmatprep.subr.mxu0 0.0
      %2862 = vmatpush1.msra.mxu0 0.0
      %2863 = vmatprep.subr.mxu0 0.0
      %2864 = vmatpush1.msra.mxu0 0.0
      %2865 = vmatprep.subr.mxu0 0.0
      %2866 = vmatpush1.msra.mxu0 0.0
      %2867 = vmatprep.subr.mxu0 0.0
      %2868 = vmatpush1.msra.mxu0 0.0
      %2869 = vmatprep.subr.mxu0 0.0
      %2870 = vmatpush1.msra.mxu0 0.0
      %2871 = vmatprep.subr.mxu0 0.0
      %2872 = vmatpush1.msra.mxu0 0.0
      %2873 = vmatprep.subr.mxu0 0.0
      %2874 = vmatpush1.msra.mxu0 0.0
      %2875 = vmatprep.subr.mxu0 0.0
      %2876 = vmatpush1.msra.mxu0 0.0
      %2877 = vmatprep.subr.mxu0 0.0
      %2878 = vmatpush1.msra.mxu0 0.0
      %2879 = vmatprep.subr.mxu0 0.0
      %2880 = vmatpush1.msra.mxu0 0.0
      %2881 = vmatprep.subr.mxu0 0.0
      %2882 = vmatpush1.msra.mxu0 0.0
      %2883 = vmatprep.subr.mxu0 0.0
      %2884 = vmatpush1.msra.mxu0 0.0
      %2885 = vmatprep.subr.mxu0 0.0
      %2886 = vmatpush1.msra.mxu0 0.0
      %2887 = vmatprep.subr.mxu0 0.0
      %2888 = vmatpush1.msra.mxu0 0.0
      %2889 = vmatprep.subr.mxu0 0.0
      %2890 = vmatpush1.msra.mxu0 0.0
      %2891 = vmatprep.subr.mxu0 0.0
      %2892 = vmatpush1.msra.mxu0 0.0
      %2893 = vmatprep.mubr.f32.mxu0 0.0
      %2894 = vmatmul.mubr.f32.gmra.mrb[0].mxu0 %v2827
      %v2895 = vpop.f32.mrb[0].mxu0
      %v2896 = vadd.f32 0.0, %v2895
      %v2897 = vpop.f32.mrb[0].mxu0
      %2898 = vdwg.mxu0
      %v2899 = vsel %vm293, %v2751, 0
      %2901 = vmatprep.subr.mxu0 0.0
      %2902 = vmatpush1.msra.mxu0 %v174
      %2903 = vmatprep.subr.mxu0 0.0
      %2904 = vmatpush1.msra.mxu0 %v448
      %2905 = vmatprep.subr.mxu0 0.0
      %2906 = vmatpush1.msra.mxu0 0.0
      %2907 = vmatprep.subr.mxu0 0.0
      %2908 = vmatpush1.msra.mxu0 0.0
      %2909 = vmatprep.subr.mxu0 0.0
      %2910 = vmatpush1.msra.mxu0 0.0
      %2911 = vmatprep.subr.mxu0 0.0
      %2912 = vmatpush1.msra.mxu0 0.0
      %2913 = vmatprep.subr.mxu0 0.0
      %2914 = vmatpush1.msra.mxu0 0.0
      %2915 = vmatprep.subr.mxu0 0.0
      %2916 = vmatpush1.msra.mxu0 0.0
      %2917 = vmatprep.subr.mxu0 0.0
      %2918 = vmatpush1.msra.mxu0 0.0
      %2919 = vmatprep.subr.mxu0 0.0
      %2920 = vmatpush1.msra.mxu0 0.0
      %2921 = vmatprep.subr.mxu0 0.0
      %2922 = vmatpush1.msra.mxu0 0.0
      %2923 = vmatprep.subr.mxu0 0.0
      %2924 = vmatpush1.msra.mxu0 0.0
      %2925 = vmatprep.subr.mxu0 0.0
      %2926 = vmatpush1.msra.mxu0 0.0
      %2927 = vmatprep.subr.mxu0 0.0
      %2928 = vmatpush1.msra.mxu0 0.0
      %2929 = vmatprep.subr.mxu0 0.0
      %2930 = vmatpush1.msra.mxu0 0.0
      %2931 = vmatprep.subr.mxu0 0.0
      %2932 = vmatpush1.msra.mxu0 0.0
      %2933 = vmatprep.subr.mxu0 0.0
      %2934 = vmatpush1.msra.mxu0 0.0
      %2935 = vmatprep.subr.mxu0 0.0
      %2936 = vmatpush1.msra.mxu0 0.0
      %2937 = vmatprep.subr.mxu0 0.0
      %2938 = vmatpush1.msra.mxu0 0.0
      %2939 = vmatprep.subr.mxu0 0.0
      %2940 = vmatpush1.msra.mxu0 0.0
      %2941 = vmatprep.subr.mxu0 0.0
      %2942 = vmatpush1.msra.mxu0 0.0
      %2943 = vmatprep.subr.mxu0 0.0
      %2944 = vmatpush1.msra.mxu0 0.0
      %2945 = vmatprep.subr.mxu0 0.0
      %2946 = vmatpush1.msra.mxu0 0.0
      %2947 = vmatprep.subr.mxu0 0.0
      %2948 = vmatpush1.msra.mxu0 0.0
      %2949 = vmatprep.subr.mxu0 0.0
      %2950 = vmatpush1.msra.mxu0 0.0
      %2951 = vmatprep.subr.mxu0 0.0
      %2952 = vmatpush1.msra.mxu0 0.0
      %2953 = vmatprep.subr.mxu0 0.0
      %2954 = vmatpush1.msra.mxu0 0.0
      %2955 = vmatprep.subr.mxu0 0.0
      %2956 = vmatpush1.msra.mxu0 0.0
      %2957 = vmatprep.subr.mxu0 0.0
      %2958 = vmatpush1.msra.mxu0 0.0
      %2959 = vmatprep.subr.mxu0 0.0
      %2960 = vmatpush1.msra.mxu0 0.0
      %2961 = vmatprep.subr.mxu0 0.0
      %2962 = vmatpush1.msra.mxu0 0.0
      %2963 = vmatprep.subr.mxu0 0.0
      %2964 = vmatpush1.msra.mxu0 0.0
      %2965 = vmatprep.mubr.f32.mxu0 0.0
      %2966 = vmatmul.mubr.f32.gmra.mrb[0].mxu0 %v2899
      %v2967 = vpop.f32.mrb[0].mxu0
      %v2968 = vadd.f32 0.0, %v2967
      %v2969 = vpop.f32.mrb[0].mxu0
      %2970 = vdwg.mxu0
      %v2971 = vsel %vm293, %v2753, 0
      %2973 = vmatprep.subr.mxu0 0.0
      %2974 = vmatpush1.msra.mxu0 %v176
      %2975 = vmatprep.subr.mxu0 0.0
      %2976 = vmatpush1.msra.mxu0 %v523
      %2977 = vmatprep.subr.mxu0 0.0
      %2978 = vmatpush1.msra.mxu0 0.0
      %2979 = vmatprep.subr.mxu0 0.0
      %2980 = vmatpush1.msra.mxu0 0.0
      %2981 = vmatprep.subr.mxu0 0.0
      %2982 = vmatpush1.msra.mxu0 0.0
      %2983 = vmatprep.subr.mxu0 0.0
      %2984 = vmatpush1.msra.mxu0 0.0
      %2985 = vmatprep.subr.mxu0 0.0
      %2986 = vmatpush1.msra.mxu0 0.0
      %2987 = vmatprep.subr.mxu0 0.0
      %2988 = vmatpush1.msra.mxu0 0.0
      %2989 = vmatprep.subr.mxu0 0.0
      %2990 = vmatpush1.msra.mxu0 0.0
      %2991 = vmatprep.subr.mxu0 0.0
      %2992 = vmatpush1.msra.mxu0 0.0
      %2993 = vmatprep.subr.mxu0 0.0
      %2994 = vmatpush1.msra.mxu0 0.0
      %2995 = vmatprep.subr.mxu0 0.0
      %2996 = vmatpush1.msra.mxu0 0.0
      %2997 = vmatprep.subr.mxu0 0.0
      %2998 = vmatpush1.msra.mxu0 0.0
      %2999 = vmatprep.subr.mxu0 0.0
      %3000 = vmatpush1.msra.mxu0 0.0
      %3001 = vmatprep.subr.mxu0 0.0
      %3002 = vmatpush1.msra.mxu0 0.0
      %3003 = vmatprep.subr.mxu0 0.0
      %3004 = vmatpush1.msra.mxu0 0.0
      %3005 = vmatprep.subr.mxu0 0.0
      %3006 = vmatpush1.msra.mxu0 0.0
      %3007 = vmatprep.subr.mxu0 0.0
      %3008 = vmatpush1.msra.mxu0 0.0
      %3009 = vmatprep.subr.mxu0 0.0
      %3010 = vmatpush1.msra.mxu0 0.0
      %3011 = vmatprep.subr.mxu0 0.0
      %3012 = vmatpush1.msra.mxu0 0.0
      %3013 = vmatprep.subr.mxu0 0.0
      %3014 = vmatpush1.msra.mxu0 0.0
      %3015 = vmatprep.subr.mxu0 0.0
      %3016 = vmatpush1.msra.mxu0 0.0
      %3017 = vmatprep.subr.mxu0 0.0
      %3018 = vmatpush1.msra.mxu0 0.0
      %3019 = vmatprep.subr.mxu0 0.0
      %3020 = vmatpush1.msra.mxu0 0.0
      %3021 = vmatprep.subr.mxu0 0.0
      %3022 = vmatpush1.msra.mxu0 0.0
      %3023 = vmatprep.subr.mxu0 0.0
      %3024 = vmatpush1.msra.mxu0 0.0
      %3025 = vmatprep.subr.mxu0 0.0
      %3026 = vmatpush1.msra.mxu0 0.0
      %3027 = vmatprep.subr.mxu0 0.0
      %3028 = vmatpush1.msra.mxu0 0.0
      %3029 = vmatprep.subr.mxu0 0.0
      %3030 = vmatpush1.msra.mxu0 0.0
      %3031 = vmatprep.subr.mxu0 0.0
      %3032 = vmatpush1.msra.mxu0 0.0
      %3033 = vmatprep.subr.mxu0 0.0
      %3034 = vmatpush1.msra.mxu0 0.0
      %3035 = vmatprep.subr.mxu0 0.0
      %3036 = vmatpush1.msra.mxu0 0.0
      %3037 = vmatprep.mubr.f32.mxu0 0.0
      %3038 = vmatmul.mubr.f32.gmra.mrb[0].mxu0 %v2971
      %v3039 = vpop.f32.mrb[0].mxu0
      %v3040 = vadd.f32 0.0, %v3039
      %v3041 = vpop.f32.mrb[0].mxu0
      %3042 = vdwg.mxu0
      %v3043 = vsel %vm293, %v2736, 0
      %3045 = vmatprep.subr.mxu0 0.0
      %3046 = vmatpush1.msra.mxu0 %v178
      %3047 = vmatprep.subr.mxu0 0.0
      %3048 = vmatpush1.msra.mxu0 %v598
      %3049 = vmatprep.subr.mxu0 0.0
      %3050 = vmatpush1.msra.mxu0 0.0
      %3051 = vmatprep.subr.mxu0 0.0
      %3052 = vmatpush1.msra.mxu0 0.0
      %3053 = vmatprep.subr.mxu0 0.0
      %3054 = vmatpush1.msra.mxu0 0.0
      %3055 = vmatprep.subr.mxu0 0.0
      %3056 = vmatpush1.msra.mxu0 0.0
      %3057 = vmatprep.subr.mxu0 0.0
      %3058 = vmatpush1.msra.mxu0 0.0
      %3059 = vmatprep.subr.mxu0 0.0
      %3060 = vmatpush1.msra.mxu0 0.0
      %3061 = vmatprep.subr.mxu0 0.0
      %3062 = vmatpush1.msra.mxu0 0.0
      %3063 = vmatprep.subr.mxu0 0.0
      %3064 = vmatpush1.msra.mxu0 0.0
      %3065 = vmatprep.subr.mxu0 0.0
      %3066 = vmatpush1.msra.mxu0 0.0
      %3067 = vmatprep.subr.mxu0 0.0
      %3068 = vmatpush1.msra.mxu0 0.0
      %3069 = vmatprep.subr.mxu0 0.0
      %3070 = vmatpush1.msra.mxu0 0.0
      %3071 = vmatprep.subr.mxu0 0.0
      %3072 = vmatpush1.msra.mxu0 0.0
      %3073 = vmatprep.subr.mxu0 0.0
      %3074 = vmatpush1.msra.mxu0 0.0
      %3075 = vmatprep.subr.mxu0 0.0
      %3076 = vmatpush1.msra.mxu0 0.0
      %3077 = vmatprep.subr.mxu0 0.0
      %3078 = vmatpush1.msra.mxu0 0.0
      %3079 = vmatprep.subr.mxu0 0.0
      %3080 = vmatpush1.msra.mxu0 0.0
      %3081 = vmatprep.subr.mxu0 0.0
      %3082 = vmatpush1.msra.mxu0 0.0
      %3083 = vmatprep.subr.mxu0 0.0
      %3084 = vmatpush1.msra.mxu0 0.0
      %3085 = vmatprep.subr.mxu0 0.0
      %3086 = vmatpush1.msra.mxu0 0.0
      %3087 = vmatprep.subr.mxu0 0.0
      %3088 = vmatpush1.msra.mxu0 0.0
      %3089 = vmatprep.subr.mxu0 0.0
      %3090 = vmatpush1.msra.mxu0 0.0
      %3091 = vmatprep.subr.mxu0 0.0
      %3092 = vmatpush1.msra.mxu0 0.0
      %3093 = vmatprep.subr.mxu0 0.0
      %3094 = vmatpush1.msra.mxu0 0.0
      %3095 = vmatprep.subr.mxu0 0.0
      %3096 = vmatpush1.msra.mxu0 0.0
      %3097 = vmatprep.subr.mxu0 0.0
      %3098 = vmatpush1.msra.mxu0 0.0
      %3099 = vmatprep.subr.mxu0 0.0
      %3100 = vmatpush1.msra.mxu0 0.0
      %3101 = vmatprep.subr.mxu0 0.0
      %3102 = vmatpush1.msra.mxu0 0.0
      %3103 = vmatprep.subr.mxu0 0.0
      %3104 = vmatpush1.msra.mxu0 0.0
      %3105 = vmatprep.subr.mxu0 0.0
      %3106 = vmatpush1.msra.mxu0 0.0
      %3107 = vmatprep.subr.mxu0 0.0
      %3108 = vmatpush1.msra.mxu0 0.0
      %3109 = vmatprep.mubr.f32.mxu0 0.0
      %3110 = vmatmul.mubr.f32.gmra.mrb[0].mxu0 %v3043
      %v3111 = vpop.f32.mrb[0].mxu0
      %v3112 = vadd.f32 0.0, %v3111
      %v3113 = vpop.f32.mrb[0].mxu0
      %3114 = vdwg.mxu0
      %v3115 = vsel %vm293, %v2750, 0
      %3117 = vmatprep.subr.mxu0 0.0
      %3118 = vmatpush1.msra.mxu0 %v180
      %3119 = vmatprep.subr.mxu0 0.0
      %3120 = vmatpush1.msra.mxu0 %v673
      %3121 = vmatprep.subr.mxu0 0.0
      %3122 = vmatpush1.msra.mxu0 0.0
      %3123 = vmatprep.subr.mxu0 0.0
      %3124 = vmatpush1.msra.mxu0 0.0
      %3125 = vmatprep.subr.mxu0 0.0
      %3126 = vmatpush1.msra.mxu0 0.0
      %3127 = vmatprep.subr.mxu0 0.0
      %3128 = vmatpush1.msra.mxu0 0.0
      %3129 = vmatprep.subr.mxu0 0.0
      %3130 = vmatpush1.msra.mxu0 0.0
      %3131 = vmatprep.subr.mxu0 0.0
      %3132 = vmatpush1.msra.mxu0 0.0
      %3133 = vmatprep.subr.mxu0 0.0
      %3134 = vmatpush1.msra.mxu0 0.0
      %3135 = vmatprep.subr.mxu0 0.0
      %3136 = vmatpush1.msra.mxu0 0.0
      %3137 = vmatprep.subr.mxu0 0.0
      %3138 = vmatpush1.msra.mxu0 0.0
      %3139 = vmatprep.subr.mxu0 0.0
      %3140 = vmatpush1.msra.mxu0 0.0
      %3141 = vmatprep.subr.mxu0 0.0
      %3142 = vmatpush1.msra.mxu0 0.0
      %3143 = vmatprep.subr.mxu0 0.0
      %3144 = vmatpush1.msra.mxu0 0.0
      %3145 = vmatprep.subr.mxu0 0.0
      %3146 = vmatpush1.msra.mxu0 0.0
      %3147 = vmatprep.subr.mxu0 0.0
      %3148 = vmatpush1.msra.mxu0 0.0
      %3149 = vmatprep.subr.mxu0 0.0
      %3150 = vmatpush1.msra.mxu0 0.0
      %3151 = vmatprep.subr.mxu0 0.0
      %3152 = vmatpush1.msra.mxu0 0.0
      %3153 = vmatprep.subr.mxu0 0.0
      %3154 = vmatpush1.msra.mxu0 0.0
      %3155 = vmatprep.subr.mxu0 0.0
      %3156 = vmatpush1.msra.mxu0 0.0
      %3157 = vmatprep.subr.mxu0 0.0
      %3158 = vmatpush1.msra.mxu0 0.0
      %3159 = vmatprep.subr.mxu0 0.0
      %3160 = vmatpush1.msra.mxu0 0.0
      %3161 = vmatprep.subr.mxu0 0.0
      %3162 = vmatpush1.msra.mxu0 0.0
      %3163 = vmatprep.subr.mxu0 0.0
      %3164 = vmatpush1.msra.mxu0 0.0
      %3165 = vmatprep.subr.mxu0 0.0
      %3166 = vmatpush1.msra.mxu0 0.0
      %3167 = vmatprep.subr.mxu0 0.0
      %3168 = vmatpush1.msra.mxu0 0.0
      %3169 = vmatprep.subr.mxu0 0.0
      %3170 = vmatpush1.msra.mxu0 0.0
      %3171 = vmatprep.subr.mxu0 0.0
      %3172 = vmatpush1.msra.mxu0 0.0
      %3173 = vmatprep.subr.mxu0 0.0
      %3174 = vmatpush1.msra.mxu0 0.0
      %3175 = vmatprep.subr.mxu0 0.0
      %3176 = vmatpush1.msra.mxu0 0.0
      %3177 = vmatprep.subr.mxu0 0.0
      %3178 = vmatpush1.msra.mxu0 0.0
      %3179 = vmatprep.subr.mxu0 0.0
      %3180 = vmatpush1.msra.mxu0 0.0
      %3181 = vmatprep.mubr.f32.mxu0 0.0
      %3182 = vmatmul.mubr.f32.gmra.mrb[0].mxu0 %v3115
      %v3183 = vpop.f32.mrb[0].mxu0
      %v3184 = vadd.f32 0.0, %v3183
      %v3185 = vpop.f32.mrb[0].mxu0
      %3186 = vdwg.mxu0
      %v3187 = vsel %vm293, %v2752, 0
      %3189 = vmatprep.subr.mxu0 0.0
      %3190 = vmatpush1.msra.mxu0 %v182
      %3191 = vmatprep.subr.mxu0 0.0
      %3192 = vmatpush1.msra.mxu0 %v748
      %3193 = vmatprep.subr.mxu0 0.0
      %3194 = vmatpush1.msra.mxu0 0.0
      %3195 = vmatprep.subr.mxu0 0.0
      %3196 = vmatpush1.msra.mxu0 0.0
      %3197 = vmatprep.subr.mxu0 0.0
      %3198 = vmatpush1.msra.mxu0 0.0
      %3199 = vmatprep.subr.mxu0 0.0
      %3200 = vmatpush1.msra.mxu0 0.0
      %3201 = vmatprep.subr.mxu0 0.0
      %3202 = vmatpush1.msra.mxu0 0.0
      %3203 = vmatprep.subr.mxu0 0.0
      %3204 = vmatpush1.msra.mxu0 0.0
      %3205 = vmatprep.subr.mxu0 0.0
      %3206 = vmatpush1.msra.mxu0 0.0
      %3207 = vmatprep.subr.mxu0 0.0
      %3208 = vmatpush1.msra.mxu0 0.0
      %3209 = vmatprep.subr.mxu0 0.0
      %3210 = vmatpush1.msra.mxu0 0.0
      %3211 = vmatprep.subr.mxu0 0.0
      %3212 = vmatpush1.msra.mxu0 0.0
      %3213 = vmatprep.subr.mxu0 0.0
      %3214 = vmatpush1.msra.mxu0 0.0
      %3215 = vmatprep.subr.mxu0 0.0
      %3216 = vmatpush1.msra.mxu0 0.0
      %3217 = vmatprep.subr.mxu0 0.0
      %3218 = vmatpush1.msra.mxu0 0.0
      %3219 = vmatprep.subr.mxu0 0.0
      %3220 = vmatpush1.msra.mxu0 0.0
      %3221 = vmatprep.subr.mxu0 0.0
      %3222 = vmatpush1.msra.mxu0 0.0
      %3223 = vmatprep.subr.mxu0 0.0
      %3224 = vmatpush1.msra.mxu0 0.0
      %3225 = vmatprep.subr.mxu0 0.0
      %3226 = vmatpush1.msra.mxu0 0.0
      %3227 = vmatprep.subr.mxu0 0.0
      %3228 = vmatpush1.msra.mxu0 0.0
      %3229 = vmatprep.subr.mxu0 0.0
      %3230 = vmatpush1.msra.mxu0 0.0
      %3231 = vmatprep.subr.mxu0 0.0
      %3232 = vmatpush1.msra.mxu0 0.0
      %3233 = vmatprep.subr.mxu0 0.0
      %3234 = vmatpush1.msra.mxu0 0.0
      %3235 = vmatprep.subr.mxu0 0.0
      %3236 = vmatpush1.msra.mxu0 0.0
      %3237 = vmatprep.subr.mxu0 0.0
      %3238 = vmatpush1.msra.mxu0 0.0
      %3239 = vmatprep.subr.mxu0 0.0
      %3240 = vmatpush1.msra.mxu0 0.0
      %3241 = vmatprep.subr.mxu0 0.0
      %3242 = vmatpush1.msra.mxu0 0.0
      %3243 = vmatprep.subr.mxu0 0.0
      %3244 = vmatpush1.msra.mxu0 0.0
      %3245 = vmatprep.subr.mxu0 0.0
      %3246 = vmatpush1.msra.mxu0 0.0
      %3247 = vmatprep.subr.mxu0 0.0
      %3248 = vmatpush1.msra.mxu0 0.0
      %3249 = vmatprep.subr.mxu0 0.0
      %3250 = vmatpush1.msra.mxu0 0.0
      %3251 = vmatprep.subr.mxu0 0.0
      %3252 = vmatpush1.msra.mxu0 0.0
      %3253 = vmatprep.mubr.f32.mxu0 0.0
      %3254 = vmatmul.mubr.f32.gmra.mrb[0].mxu0 %v3187
      %v3255 = vpop.f32.mrb[0].mxu0
      %v3256 = vadd.f32 0.0, %v3255
      %v3257 = vpop.f32.mrb[0].mxu0
      %3258 = vdwg.mxu0
      %v3259 = vsel %vm293, %v2754, 0
      %3261 = vmatprep.subr.mxu0 0.0
      %3262 = vmatpush1.msra.mxu0 %v184
      %3263 = vmatprep.subr.mxu0 0.0
      %3264 = vmatpush1.msra.mxu0 %v823
      %3265 = vmatprep.subr.mxu0 0.0
      %3266 = vmatpush1.msra.mxu0 0.0
      %3267 = vmatprep.subr.mxu0 0.0
      %3268 = vmatpush1.msra.mxu0 0.0
      %3269 = vmatprep.subr.mxu0 0.0
      %3270 = vmatpush1.msra.mxu0 0.0
      %3271 = vmatprep.subr.mxu0 0.0
      %3272 = vmatpush1.msra.mxu0 0.0
      %3273 = vmatprep.subr.mxu0 0.0
      %3274 = vmatpush1.msra.mxu0 0.0
      %3275 = vmatprep.subr.mxu0 0.0
      %3276 = vmatpush1.msra.mxu0 0.0
      %3277 = vmatprep.subr.mxu0 0.0
      %3278 = vmatpush1.msra.mxu0 0.0
      %3279 = vmatprep.subr.mxu0 0.0
      %3280 = vmatpush1.msra.mxu0 0.0
      %3281 = vmatprep.subr.mxu0 0.0
      %3282 = vmatpush1.msra.mxu0 0.0
      %3283 = vmatprep.subr.mxu0 0.0
      %3284 = vmatpush1.msra.mxu0 0.0
      %3285 = vmatprep.subr.mxu0 0.0
      %3286 = vmatpush1.msra.mxu0 0.0
      %3287 = vmatprep.subr.mxu0 0.0
      %3288 = vmatpush1.msra.mxu0 0.0
      %3289 = vmatprep.subr.mxu0 0.0
      %3290 = vmatpush1.msra.mxu0 0.0
      %3291 = vmatprep.subr.mxu0 0.0
      %3292 = vmatpush1.msra.mxu0 0.0
      %3293 = vmatprep.subr.mxu0 0.0
      %3294 = vmatpush1.msra.mxu0 0.0
      %3295 = vmatprep.subr.mxu0 0.0
      %3296 = vmatpush1.msra.mxu0 0.0
      %3297 = vmatprep.subr.mxu0 0.0
      %3298 = vmatpush1.msra.mxu0 0.0
      %3299 = vmatprep.subr.mxu0 0.0
      %3300 = vmatpush1.msra.mxu0 0.0
      %3301 = vmatprep.subr.mxu0 0.0
      %3302 = vmatpush1.msra.mxu0 0.0
      %3303 = vmatprep.subr.mxu0 0.0
      %3304 = vmatpush1.msra.mxu0 0.0
      %3305 = vmatprep.subr.mxu0 0.0
      %3306 = vmatpush1.msra.mxu0 0.0
      %3307 = vmatprep.subr.mxu0 0.0
      %3308 = vmatpush1.msra.mxu0 0.0
      %3309 = vmatprep.subr.mxu0 0.0
      %3310 = vmatpush1.msra.mxu0 0.0
      %3311 = vmatprep.subr.mxu0 0.0
      %3312 = vmatpush1.msra.mxu0 0.0
      %3313 = vmatprep.subr.mxu0 0.0
      %3314 = vmatpush1.msra.mxu0 0.0
      %3315 = vmatprep.subr.mxu0 0.0
      %3316 = vmatpush1.msra.mxu0 0.0
      %3317 = vmatprep.subr.mxu0 0.0
      %3318 = vmatpush1.msra.mxu0 0.0
      %3319 = vmatprep.subr.mxu0 0.0
      %3320 = vmatpush1.msra.mxu0 0.0
      %3321 = vmatprep.subr.mxu0 0.0
      %3322 = vmatpush1.msra.mxu0 0.0
      %3323 = vmatprep.subr.mxu0 0.0
      %3324 = vmatpush1.msra.mxu0 0.0
      %3325 = vmatprep.mubr.f32.mxu0 0.0
      %3326 = vmatmul.mubr.f32.gmra.mrb[0].mxu0 %v3259
      %v3327 = vpop.f32.mrb[0].mxu0
      %v3328 = vadd.f32 0.0, %v3327
      %v3329 = vpop.f32.mrb[0].mxu0
      %3330 = vdwg.mxu0
      %3331 = vrot.lane.b32.xlu0 %v188, 104
      %v3332 = vpop.permute.xlu0 %3331
      %3333 = vrot.lane.b32.xlu0 %v188, 40
      %v3334 = vpop.permute.xlu0 %3333
      %v3343 = vrot.slane %v2896, 7
      %v3344 = vsel %vm906, %v3343, %v2824
      %v3345 = vrot.slane %v2968, 6
      %v3346 = vsel %vm909, %v3345, %v3344
      %v3347 = vrot.slane %v3040, 5
      %v3348 = vsel %vm912, %v3347, %v3346
      %v3349 = vrot.slane %v3112, 4
      %v3350 = vsel %vm915, %v3349, %v3348
      %v3351 = vrot.slane %v3184, 3
      %v3352 = vsel %vm918, %v3351, %v3350
      %v3353 = vrot.slane %v3256, 2
      %v3354 = vsel %vm921, %v3353, %v3352
      %v3355 = vrot.slane %v3328, 1
      %v3356 = vsel %vm924, %v3355, %v3354
      %v3359 = vsel %vm196, %v3332, 0
      %v3362 = vsel %vm196, %v3334, 0
      %3364 = vmatprep.subr.bf16.mxu0 0
      %3365 = vmatpush1.bf16.xpose.msra.mxu0 %v3362
      %3366 = vmatprep.subr.bf16.mxu0 0
      %3367 = vmatpush1.bf16.xpose.msra.mxu0 0
      %3368 = vmatprep.subr.bf16.mxu0 0
      %3369 = vmatpush1.bf16.xpose.msra.mxu0 0
      %3370 = vmatprep.subr.bf16.mxu0 0
      %3371 = vmatpush1.bf16.xpose.msra.mxu0 0
      %3372 = vmatprep.subr.bf16.mxu0 0
      %3373 = vmatpush1.bf16.xpose.msra.mxu0 0
      %3374 = vmatprep.subr.bf16.mxu0 0
      %3375 = vmatpush1.bf16.xpose.msra.mxu0 0
      %3376 = vmatprep.subr.bf16.mxu0 0
      %3377 = vmatpush1.bf16.xpose.msra.mxu0 0
      %3378 = vmatprep.subr.bf16.mxu0 0
      %3379 = vmatpush1.bf16.xpose.msra.mxu0 0
      %3380 = vmatprep.subr.bf16.mxu0 0
      %3381 = vmatpush1.bf16.xpose.msra.mxu0 0
      %3382 = vmatprep.subr.bf16.mxu0 0
      %3383 = vmatpush1.bf16.xpose.msra.mxu0 0
      %3384 = vmatprep.subr.bf16.mxu0 0
      %3385 = vmatpush1.bf16.xpose.msra.mxu0 0
      %3386 = vmatprep.subr.bf16.mxu0 0
      %3387 = vmatpush1.bf16.xpose.msra.mxu0 0
      %3388 = vmatprep.subr.bf16.mxu0 0
      %3389 = vmatpush1.bf16.xpose.msra.mxu0 0
      %3390 = vmatprep.subr.bf16.mxu0 0
      %3391 = vmatpush1.bf16.xpose.msra.mxu0 0
      %3392 = vmatprep.subr.bf16.mxu0 0
      %3393 = vmatpush1.bf16.xpose.msra.mxu0 0
      %3394 = vmatprep.subr.bf16.mxu0 0
      %3395 = vmatpush1.bf16.xpose.msra.mxu0 0
      %3396 = vmatprep.mubr.bf16.mxu0 0
      %3397 = vmatmul.mubr.bf16.gmra.mrb[0].mxu0 %v3359
      %v3398 = vpop.f32.mrb[0].mxu0
      %v3399 = vadd.f32 %v3356, %v3398
      %v3400 = vpop.f32.mrb[0].mxu0
      %v3401 = vpop.f32.mrb[0].mxu0
      %v3402 = vpop.f32.mrb[0].mxu0
      %3403 = vdwg.mxu0
      %v3404 = vmul.f32 %v3399, 0.35355338
      %v3405 = vsel %vm196, %v3404, -inf
      %3406 = vmax.xlane.f32.xlu0 %v3405
      %v3407 = vpop.xlane.xlu0 %3406
      %v3408 = vsub.f32 %v3404, %v3407
      %v3409 = vmul.f32 %v3408, 1.442695
      %v3410 = vpow.pop %v3409
      %v3411 = vsel %vm196, %v3410, 0.0
      %3412 = vadd.xlane.f32.xlu0 %v3411
      %v3413 = vpop.xlane.xlu0 %3412
      %v3414 = vrcp.pop %v3413
      %v3415 = vmul.f32 %v3410, %v3414
      %v3416 = vpack.c.bf16 %v3415, %v3415
      %3417 = vrot.lane.b32.xlu0 %v188, 8
      %v3418 = vpop.permute.xlu0 %3417
      %v3420 = vsel %vm196, %v3416, 0
      %v3423 = vsel %vm991, %v3418, 0
      %3425 = vmatprep.subr.bf16.mxu0 0
      %3426 = vmatpush1.bf16.msra.mxu0 %v3423
      %3427 = vmatprep.subr.bf16.mxu0 0
      %3428 = vmatpush1.bf16.msra.mxu0 0
      %3429 = vmatprep.subr.bf16.mxu0 0
      %3430 = vmatpush1.bf16.msra.mxu0 0
      %3431 = vmatprep.subr.bf16.mxu0 0
      %3432 = vmatpush1.bf16.msra.mxu0 0
      %3433 = vmatprep.subr.bf16.mxu0 0
      %3434 = vmatpush1.bf16.msra.mxu0 0
      %3435 = vmatprep.subr.bf16.mxu0 0
      %3436 = vmatpush1.bf16.msra.mxu0 0
      %3437 = vmatprep.subr.bf16.mxu0 0
      %3438 = vmatpush1.bf16.msra.mxu0 0
      %3439 = vmatprep.subr.bf16.mxu0 0
      %3440 = vmatpush1.bf16.msra.mxu0 0
      %3441 = vmatprep.subr.bf16.mxu0 0
      %3442 = vmatpush1.bf16.msra.mxu0 0
      %3443 = vmatprep.subr.bf16.mxu0 0
      %3444 = vmatpush1.bf16.msra.mxu0 0
      %3445 = vmatprep.subr.bf16.mxu0 0
      %3446 = vmatpush1.bf16.msra.mxu0 0
      %3447 = vmatprep.subr.bf16.mxu0 0
      %3448 = vmatpush1.bf16.msra.mxu0 0
      %3449 = vmatprep.subr.bf16.mxu0 0
      %3450 = vmatpush1.bf16.msra.mxu0 0
      %3451 = vmatprep.subr.bf16.mxu0 0
      %3452 = vmatpush1.bf16.msra.mxu0 0
      %3453 = vmatprep.subr.bf16.mxu0 0
      %3454 = vmatpush1.bf16.msra.mxu0 0
      %3455 = vmatprep.subr.bf16.mxu0 0
      %3456 = vmatpush1.bf16.msra.mxu0 0
      %3457 = vmatprep.mubr.bf16.mxu0 0
      %3458 = vmatmul.mubr.bf16.gmra.mrb[0].mxu0 %v3420
      %v3459 = vpop.f32.mrb[0].mxu0
      %v3460 = vadd.f32 0.0, %v3459
      %v3461 = vpop.f32.mrb[0].mxu0
      %v3462 = vpop.f32.mrb[0].mxu0
      %v3463 = vpop.f32.mrb[0].mxu0
      %3464 = vdwg.mxu0
      %3466 = vrot.lane.b32.xlu0 %v1840, 8
      %v3467 = vpop.permute.xlu0 %3466
      %3470 = vrot.lane.b32.xlu0 %v2650, 16
      %v3471 = vpop.permute.xlu0 %3470
      %3474 = vrot.lane.b32.xlu0 %v3460, 24
      %v3475 = vpop.permute.xlu0 %3474
      %v3477 = vsel %vm196, %v1030, %v3467
      %vm3478 = vcmask 130048
      %v3479 = vsel %vm3478, %v3477, %v3471
      %vm3480 = vcmask 195584
      %v3481 = vsel %vm3480, %v3479, %v3475
      %v3482 = vpack.c.bf16 %v3481, %v3481
      %vm3483 = vcmask 257024
      %3484 = vst.msk [vmem:[%s165] sm:$0xf] %vm3483, %v3482
      %p3485 = scmp.lt.s32.totalorder %s14, 1
      %s3486 = scalar_select %p3485, %s14, 1
      %s3487 = smul.addr %s3486, 4
      %s3488 = scalar_lea.vmem %s3, %s3487
      // Predicated region
      $region33: #{relative_moe_layer_forward.7} parent=31 // pred_check
        %p3489 = pneg %p100
      $region34: #{relative_moe_layer_forward.7} parent=31 // pred_check_branch
        %3491 = sbr.rel (%p3489) target = $region36
      $region35: #{relative_moe_layer_forward.7} parent=31 // pred_region
        _
      $region36: #{relative_moe_layer_forward.7} parent=31 // pred_fallthru
        _
    $region32: #{relative_moe_layer_forward.7} parent=5 // pred_fallthru
      _
    %p3492 = scmp.le.s32.totalorder 2, %s9
    // Predicated region
    $region37: #{relative_moe_layer_forward.7} parent=5 // pred_check
      %p3493 = pneg %p3492
    $region38: #{relative_moe_layer_forward.7} parent=5 // pred_check_branch
      %3495 = sbr.rel (%p3493) target = $region40
    $region39: #{relative_moe_layer_forward.7} parent=5 // pred_region
      %s3496 = ssub.s32 %s9, 2
      // Predicated region
      $region41: #{relative_moe_layer_forward.7} parent=39 // pred_check
        %p3497 = pneg %p106
      $region42: #{relative_moe_layer_forward.7} parent=39 // pred_check_branch
        %3499 = sbr.rel (%p3497) target = $region44
      $region43: #{relative_moe_layer_forward.7} parent=39 // pred_region
        %p3500 = scmp.lt.s32.totalorder %s15, 1
        %s3501 = scalar_select %p3500, %s15, 1
        %s3502 = smul.addr %s3501, 4
        %s3503 = scalar_lea.vmem %s3, %s3502
      $region44: #{relative_moe_layer_forward.7} parent=39 // pred_fallthru
        _
    $region40: #{relative_moe_layer_forward.7} parent=5 // pred_fallthru
      _
  $region6: #{relative_moe_layer_forward.7} parent=0 // loop_footer
    %s13 = sadd.s32 1, %s9
  $region7: #{relative_moe_layer_forward.7} parent=0 // loop_footer_branch
    %8 = sbr.rel target = $region3
  $region8: #{relative_moe_layer_forward.7} parent=0 // loop_exit
    _

</llo_original>
